<compile_context>
chip_gen: v6e
topology: v6e:2x2x1
jax: 0.10.0
libtpu: 0.0.40
codegen_flags: <defaults>
</compile_context>

<pallas_src>
import functools

import jax
import jax.numpy as jnp
from jax.experimental import pallas as pl
from jax.experimental.pallas import tpu as pltpu


def _round_up(x, m):
    return (x + m - 1) // m * m


def _fe_kernel(xT_ref, w1_ref, g1_ref, b1_ref, w2_ref, g2_ref, b2_ref, o_ref,
               h1_ref, hpad_ref, acc2_ref, *, K, B, L1, L2, pad2, n1, n2, eps):
    """Whole forward for the (small) batch in one kernel invocation, NCL layout throughout."""
    H = h1_ref.shape[1]
    O = acc2_ref.shape[1]
    inv_n1 = 1.0 / n1
    inv_n2 = 1.0 / n2

    # ---- conv block 1: K accumulated MXU dots per batch on shifted input windows ----
    for b in range(B):
        xb = xT_ref[b]                                            # (C_pad, Lp1)
        acc = jnp.zeros((H, L1), jnp.float32)
        for k in range(K):
            acc = acc + jnp.dot(w1_ref[k], xb[:, k:k + L1],
                                preferred_element_type=jnp.float32)
        h1_ref[b] = acc                                           # raw conv1 output (f32)

    # ---- BatchNorm1d #1 (train-mode biased batch stats; two-pass centered variance) ----
    h1 = h1_ref[...]                                              # (B, H, L1)
    s1 = jnp.sum(h1, axis=2, keepdims=True)                       # lane reduce -> (B, H, 1)
    mean1 = jnp.sum(s1, axis=0, keepdims=True) * inv_n1           # (1, H, 1)
    c1 = h1 - mean1
    sq1 = jnp.sum(c1 * c1, axis=2, keepdims=True)
    var1 = jnp.sum(sq1, axis=0, keepdims=True) * inv_n1
    scale1 = g1_ref[...] * jax.lax.rsqrt(var1 + eps)              # (H,1) bcasts with (1,H,1)
    shift1 = b1_ref[...] - mean1 * scale1
    hn = jnp.maximum(h1 * scale1 + shift1, 0.0)                   # ReLU; Dropout(p=0) == identity

    # ---- conv2 length padding via a tiny pre-zeroed VMEM scratch (pad2 lanes each side) ----
    zcol = jnp.zeros((B, H, pad2), hpad_ref.dtype)
    hpad_ref[:, :, :pad2] = zcol
    hpad_ref[:, :, pad2 + L1:] = zcol
    hpad_ref[:, :, pad2:pad2 + L1] = hn.astype(hpad_ref.dtype)    # single cast to matmul dtype

    # ---- conv block 2: K accumulated dots on shifted hpad windows (no X2 slab) ----
    for b in range(B):
        hb = hpad_ref[b]                                          # (H, Lp2)
        acc = jnp.zeros((O, L2), jnp.float32)
        for k in range(K):
            acc = acc + jnp.dot(w2_ref[k], hb[:, k:k + L2],
                                preferred_element_type=jnp.float32)
        acc2_ref[b] = acc

    # ---- BatchNorm1d #2 + ReLU, output written directly in NCL (B, O, L_out) ----
    o = acc2_ref[...]
    s2 = jnp.sum(o, axis=2, keepdims=True)
    mean2 = jnp.sum(s2, axis=0, keepdims=True) * inv_n2
    c2 = o - mean2
    sq2 = jnp.sum(c2 * c2, axis=2, keepdims=True)
    var2 = jnp.sum(sq2, axis=0, keepdims=True) * inv_n2
    scale2 = g2_ref[...] * jax.lax.rsqrt(var2 + eps)
    shift2 = b2_ref[...] - mean2 * scale2
    o_ref[...] = jnp.maximum(o * scale2 + shift2, 0.0).astype(o_ref.dtype)


def feature_extractor_1dcnn_rul(x_in, params, *, kernel_size=8, stride=1, eps=1e-5,
                                use_bf16_matmul=True):
    """x_in: (B, L, C_in) -- the same tensor PyTorch's forward receives.
    Returns (B, out_dim, L_out), matching the PyTorch module's NCL output layout."""
    assert stride == 1, "only the module's default stride=1 is implemented"
    w1, g1, b1, w2, g2, b2 = params            # torch layouts: w1 (H, C_in, K), w2 (O, H, K)
    B, L, C_in = x_in.shape
    K = kernel_size
    pad1, pad2 = K // 2, 1
    H, O = w1.shape[0], w2.shape[0]
    Lp1 = L + 2 * pad1
    L1 = Lp1 - K + 1
    Lp2 = L1 + 2 * pad2
    L2 = Lp2 - K + 1
    assert L1 >= 1 and L2 >= 1
    C_pad = _round_up(max(C_in, 1), 16)        # tile-aligned conv1 contraction (zeros are inert)

    f32 = jnp.float32
    mm_dtype = jnp.bfloat16 if use_bf16_matmul else f32

    # --- glue: NCL input (mirrors the module's own leading transpose); zero-pad C and L ---
    xT = jnp.transpose(x_in, (0, 2, 1)).astype(mm_dtype)                     # (B, C_in, L)
    xT = jnp.pad(xT, ((0, 0), (0, C_pad - C_in), (pad1, pad1)))              # (B, C_pad, Lp1)

    # --- glue: per-tap weight matrices w1[k]:(H,C_pad), w2[k]:(O,H); BN affine as (C,1) ---
    w1_k = jnp.pad(jnp.transpose(w1, (2, 0, 1)),
                   ((0, 0), (0, 0), (0, C_pad - C_in))).astype(mm_dtype)     # (K, H, C_pad)
    w2_k = jnp.transpose(w2, (2, 0, 1)).astype(mm_dtype)                     # (K, O, H)
    g1r, b1r = g1.reshape(H, 1).astype(f32), b1.reshape(H, 1).astype(f32)
    g2r, b2r = g2.reshape(O, 1).astype(f32), b2.reshape(O, 1).astype(f32)

    kernel = functools.partial(_fe_kernel, K=K, B=B, L1=L1, L2=L2, pad2=pad2,
                               n1=float(B * L1), n2=float(B * L2), eps=float(eps))

    mm_isz = jnp.dtype(mm_dtype).itemsize
    out_bytes = B * O * L2 * jnp.dtype(x_in.dtype).itemsize
    in_bytes = (xT.size + w1_k.size + w2_k.size) * mm_isz + (2 * H + 2 * O) * 4
    scratch_bytes = B * H * L1 * 4 + B * H * Lp2 * mm_isz + B * O * L2 * 4
    vmem_limit = int(min(max(4 * (in_bytes + out_bytes + scratch_bytes) + (1 << 20), 4 << 20),
                         64 << 20))
    cost = pl.CostEstimate(
        flops=2 * B * L1 * K * C_in * H + 2 * B * L2 * K * H * O,
        transcendentals=0,
        bytes_accessed=in_bytes + out_bytes,
    )

    out = pl.pallas_call(
        kernel,
        out_shape=jax.ShapeDtypeStruct((B, O, L2), x_in.dtype),
        in_specs=[pl.BlockSpec(memory_space=pltpu.MemorySpace.VMEM)] * 7,
        out_specs=pl.BlockSpec(memory_space=pltpu.MemorySpace.VMEM),
        scratch_shapes=[pltpu.VMEM((B, H, L1), f32),        # raw conv1 output (f32 accum + BN)
                        pltpu.VMEM((B, H, Lp2), mm_dtype),   # length-padded normalized activations
                        pltpu.VMEM((B, O, L2), f32)],        # raw conv2 output (f32 accum + BN)
        compiler_params=pltpu.CompilerParams(vmem_limit_bytes=vmem_limit),
        cost_estimate=cost,
    )(xT, w1_k, g1r, b1r, w2_k, g2r, b2r)
    return out                                              # (B, out_dim, L_out), NCL like PyTorch


if __name__ == "__main__":
    # small, forward-consistent shapes: batch=2, seq len=16, input_channels=4,
    # num_hidden=32, out_dim=32, kernel_size=8, stride=1, dropout=0
    B, L, C_in = 2, 16, 4
    H, O, K = 32, 32, 8

    key = jax.random.PRNGKey(0)
    kw1, kw2, kx = jax.random.split(key, 3)
    # deterministic synthetic parameters (PyTorch-default BN affine: gamma=1, beta=0)
    w1 = jax.random.normal(kw1, (H, C_in, K), jnp.float32) * 0.1   # Conv1d(C_in -> H), bias=False
    w2 = jax.random.normal(kw2, (O, H, K), jnp.float32) * 0.05     # Conv1d(H -> O),   bias=False
    g1, b1 = jnp.ones((H,), jnp.float32), jnp.zeros((H,), jnp.float32)
    g2, b2 = jnp.ones((O,), jnp.float32), jnp.zeros((O,), jnp.float32)

    x_in = jax.random.normal(kx, (B, L, C_in), jnp.float32)

    y = feature_extractor_1dcnn_rul(x_in, (w1, g1, b1, w2, g2, b2),
                                    kernel_size=K, stride=1)
    jax.block_until_ready(y)

    L1 = (L + 2 * (K // 2) - K) + 1
    L2 = L1 + 2 * 1 - K + 1
    assert y.shape == (B, O, L2), y.shape          # (2, 32, 12)
    assert bool(jnp.all(jnp.isfinite(y)))
    print("KERNEL_OK")
</pallas_src>

<mosaic_0001>
module attributes {stable_mosaic.version = 11 : i64} {
  func.func @_fe_kernel(%arg0: memref<2x16x24xbf16, #tpu.memory_space<vmem>>, %arg1: memref<8x32x16xbf16, #tpu.memory_space<vmem>>, %arg2: memref<32x1xf32, #tpu.memory_space<vmem>>, %arg3: memref<32x1xf32, #tpu.memory_space<vmem>>, %arg4: memref<8x32x32xbf16, #tpu.memory_space<vmem>>, %arg5: memref<32x1xf32, #tpu.memory_space<vmem>>, %arg6: memref<32x1xf32, #tpu.memory_space<vmem>>, %arg7: memref<2x32x12xf32, #tpu.memory_space<vmem>>, %arg8: memref<2x32x17xf32, #tpu.memory_space<vmem>>, %arg9: memref<2x32x19xbf16, #tpu.memory_space<vmem>>, %arg10: memref<2x32x12xf32, #tpu.memory_space<vmem>>) attributes {dimension_semantics = [], scalar_prefetch = 0 : i64, scratch_operands = 3 : i64, tpu.core_type = #tpu.core_type<tc>} {
    %c0 = arith.constant 0 : index
    %c0_0 = arith.constant 0 : index
    %c0_1 = arith.constant 0 : index
    %0 = vector.load %arg0[%c0, %c0_0, %c0_1] : memref<2x16x24xbf16, #tpu.memory_space<vmem>>, vector<1x16x24xbf16>
    %1 = vector.shape_cast %0 : vector<1x16x24xbf16> to vector<16x24xbf16>
    %cst = arith.constant 0.000000e+00 : f32
    %2 = vector.broadcast %cst : f32 to vector<32x17xf32>
    %c0_2 = arith.constant 0 : index
    %c0_3 = arith.constant 0 : index
    %c0_4 = arith.constant 0 : index
    %3 = vector.load %arg1[%c0_2, %c0_3, %c0_4] : memref<8x32x16xbf16, #tpu.memory_space<vmem>>, vector<1x32x16xbf16>
    %4 = vector.shape_cast %3 : vector<1x32x16xbf16> to vector<32x16xbf16>
    %5 = vector.extract_strided_slice %1 {offsets = [0, 0], sizes = [16, 17], strides = [1, 1]} : vector<16x24xbf16> to vector<16x17xbf16>
    %cst_5 = arith.constant dense<0.000000e+00> : vector<32x17xf32>
    %6 = tpu.matmul %4, %5, %cst_5 {dimension_numbers = #tpu.dot_dimension_numbers<[1], [0], [0], [1], [0, 0, 1, 1], [], []>} : vector<32x16xbf16>, vector<16x17xbf16>, vector<32x17xf32> -> vector<32x17xf32>
    %7 = arith.addf %2, %6 : vector<32x17xf32>
    %c1 = arith.constant 1 : index
    %c0_6 = arith.constant 0 : index
    %c0_7 = arith.constant 0 : index
    %8 = vector.load %arg1[%c1, %c0_6, %c0_7] : memref<8x32x16xbf16, #tpu.memory_space<vmem>>, vector<1x32x16xbf16>
    %9 = vector.shape_cast %8 : vector<1x32x16xbf16> to vector<32x16xbf16>
    %10 = vector.extract_strided_slice %1 {offsets = [0, 1], sizes = [16, 17], strides = [1, 1]} : vector<16x24xbf16> to vector<16x17xbf16>
    %cst_8 = arith.constant dense<0.000000e+00> : vector<32x17xf32>
    %11 = tpu.matmul %9, %10, %cst_8 {dimension_numbers = #tpu.dot_dimension_numbers<[1], [0], [0], [1], [0, 0, 1, 1], [], []>} : vector<32x16xbf16>, vector<16x17xbf16>, vector<32x17xf32> -> vector<32x17xf32>
    %12 = arith.addf %7, %11 : vector<32x17xf32>
    %c2 = arith.constant 2 : index
    %c0_9 = arith.constant 0 : index
    %c0_10 = arith.constant 0 : index
    %13 = vector.load %arg1[%c2, %c0_9, %c0_10] : memref<8x32x16xbf16, #tpu.memory_space<vmem>>, vector<1x32x16xbf16>
    %14 = vector.shape_cast %13 : vector<1x32x16xbf16> to vector<32x16xbf16>
    %15 = vector.extract_strided_slice %1 {offsets = [0, 2], sizes = [16, 17], strides = [1, 1]} : vector<16x24xbf16> to vector<16x17xbf16>
    %cst_11 = arith.constant dense<0.000000e+00> : vector<32x17xf32>
    %16 = tpu.matmul %14, %15, %cst_11 {dimension_numbers = #tpu.dot_dimension_numbers<[1], [0], [0], [1], [0, 0, 1, 1], [], []>} : vector<32x16xbf16>, vector<16x17xbf16>, vector<32x17xf32> -> vector<32x17xf32>
    %17 = arith.addf %12, %16 : vector<32x17xf32>
    %c3 = arith.constant 3 : index
    %c0_12 = arith.constant 0 : index
    %c0_13 = arith.constant 0 : index
    %18 = vector.load %arg1[%c3, %c0_12, %c0_13] : memref<8x32x16xbf16, #tpu.memory_space<vmem>>, vector<1x32x16xbf16>
    %19 = vector.shape_cast %18 : vector<1x32x16xbf16> to vector<32x16xbf16>
    %20 = vector.extract_strided_slice %1 {offsets = [0, 3], sizes = [16, 17], strides = [1, 1]} : vector<16x24xbf16> to vector<16x17xbf16>
    %cst_14 = arith.constant dense<0.000000e+00> : vector<32x17xf32>
    %21 = tpu.matmul %19, %20, %cst_14 {dimension_numbers = #tpu.dot_dimension_numbers<[1], [0], [0], [1], [0, 0, 1, 1], [], []>} : vector<32x16xbf16>, vector<16x17xbf16>, vector<32x17xf32> -> vector<32x17xf32>
    %22 = arith.addf %17, %21 : vector<32x17xf32>
    %c4 = arith.constant 4 : index
    %c0_15 = arith.constant 0 : index
    %c0_16 = arith.constant 0 : index
    %23 = vector.load %arg1[%c4, %c0_15, %c0_16] : memref<8x32x16xbf16, #tpu.memory_space<vmem>>, vector<1x32x16xbf16>
    %24 = vector.shape_cast %23 : vector<1x32x16xbf16> to vector<32x16xbf16>
    %25 = vector.extract_strided_slice %1 {offsets = [0, 4], sizes = [16, 17], strides = [1, 1]} : vector<16x24xbf16> to vector<16x17xbf16>
    %cst_17 = arith.constant dense<0.000000e+00> : vector<32x17xf32>
    %26 = tpu.matmul %24, %25, %cst_17 {dimension_numbers = #tpu.dot_dimension_numbers<[1], [0], [0], [1], [0, 0, 1, 1], [], []>} : vector<32x16xbf16>, vector<16x17xbf16>, vector<32x17xf32> -> vector<32x17xf32>
    %27 = arith.addf %22, %26 : vector<32x17xf32>
    %c5 = arith.constant 5 : index
    %c0_18 = arith.constant 0 : index
    %c0_19 = arith.constant 0 : index
    %28 = vector.load %arg1[%c5, %c0_18, %c0_19] : memref<8x32x16xbf16, #tpu.memory_space<vmem>>, vector<1x32x16xbf16>
    %29 = vector.shape_cast %28 : vector<1x32x16xbf16> to vector<32x16xbf16>
    %30 = vector.extract_strided_slice %1 {offsets = [0, 5], sizes = [16, 17], strides = [1, 1]} : vector<16x24xbf16> to vector<16x17xbf16>
    %cst_20 = arith.constant dense<0.000000e+00> : vector<32x17xf32>
    %31 = tpu.matmul %29, %30, %cst_20 {dimension_numbers = #tpu.dot_dimension_numbers<[1], [0], [0], [1], [0, 0, 1, 1], [], []>} : vector<32x16xbf16>, vector<16x17xbf16>, vector<32x17xf32> -> vector<32x17xf32>
    %32 = arith.addf %27, %31 : vector<32x17xf32>
    %c6 = arith.constant 6 : index
    %c0_21 = arith.constant 0 : index
    %c0_22 = arith.constant 0 : index
    %33 = vector.load %arg1[%c6, %c0_21, %c0_22] : memref<8x32x16xbf16, #tpu.memory_space<vmem>>, vector<1x32x16xbf16>
    %34 = vector.shape_cast %33 : vector<1x32x16xbf16> to vector<32x16xbf16>
    %35 = vector.extract_strided_slice %1 {offsets = [0, 6], sizes = [16, 17], strides = [1, 1]} : vector<16x24xbf16> to vector<16x17xbf16>
    %cst_23 = arith.constant dense<0.000000e+00> : vector<32x17xf32>
    %36 = tpu.matmul %34, %35, %cst_23 {dimension_numbers = #tpu.dot_dimension_numbers<[1], [0], [0], [1], [0, 0, 1, 1], [], []>} : vector<32x16xbf16>, vector<16x17xbf16>, vector<32x17xf32> -> vector<32x17xf32>
    %37 = arith.addf %32, %36 : vector<32x17xf32>
    %c7 = arith.constant 7 : index
    %c0_24 = arith.constant 0 : index
    %c0_25 = arith.constant 0 : index
    %38 = vector.load %arg1[%c7, %c0_24, %c0_25] : memref<8x32x16xbf16, #tpu.memory_space<vmem>>, vector<1x32x16xbf16>
    %39 = vector.shape_cast %38 : vector<1x32x16xbf16> to vector<32x16xbf16>
    %40 = vector.extract_strided_slice %1 {offsets = [0, 7], sizes = [16, 17], strides = [1, 1]} : vector<16x24xbf16> to vector<16x17xbf16>
    %cst_26 = arith.constant dense<0.000000e+00> : vector<32x17xf32>
    %41 = tpu.matmul %39, %40, %cst_26 {dimension_numbers = #tpu.dot_dimension_numbers<[1], [0], [0], [1], [0, 0, 1, 1], [], []>} : vector<32x16xbf16>, vector<16x17xbf16>, vector<32x17xf32> -> vector<32x17xf32>
    %42 = arith.addf %37, %41 : vector<32x17xf32>
    %c0_27 = arith.constant 0 : index
    %c0_28 = arith.constant 0 : index
    %c0_29 = arith.constant 0 : index
    %43 = vector.load %arg8[%c0_27, %c0_28, %c0_29] : memref<2x32x17xf32, #tpu.memory_space<vmem>>, vector<1x32x17xf32>
    %44 = vector.shape_cast %43 : vector<1x32x17xf32> to vector<32x17xf32>
    %45 = vector.shape_cast %42 : vector<32x17xf32> to vector<1x32x17xf32>
    tpu.vector_store %arg8[%c0_27, %c0_28, %c0_29], %45 {strides = array<i32>} : memref<2x32x17xf32, #tpu.memory_space<vmem>>, vector<1x32x17xf32>,
    %c1_30 = arith.constant 1 : index
    %c0_31 = arith.constant 0 : index
    %c0_32 = arith.constant 0 : index
    %46 = vector.load %arg0[%c1_30, %c0_31, %c0_32] : memref<2x16x24xbf16, #tpu.memory_space<vmem>>, vector<1x16x24xbf16>
    %47 = vector.shape_cast %46 : vector<1x16x24xbf16> to vector<16x24xbf16>
    %cst_33 = arith.constant 0.000000e+00 : f32
    %48 = vector.broadcast %cst_33 : f32 to vector<32x17xf32>
    %c0_34 = arith.constant 0 : index
    %c0_35 = arith.constant 0 : index
    %c0_36 = arith.constant 0 : index
    %49 = vector.load %arg1[%c0_34, %c0_35, %c0_36] : memref<8x32x16xbf16, #tpu.memory_space<vmem>>, vector<1x32x16xbf16>
    %50 = vector.shape_cast %49 : vector<1x32x16xbf16> to vector<32x16xbf16>
    %51 = vector.extract_strided_slice %47 {offsets = [0, 0], sizes = [16, 17], strides = [1, 1]} : vector<16x24xbf16> to vector<16x17xbf16>
    %cst_37 = arith.constant dense<0.000000e+00> : vector<32x17xf32>
    %52 = tpu.matmul %50, %51, %cst_37 {dimension_numbers = #tpu.dot_dimension_numbers<[1], [0], [0], [1], [0, 0, 1, 1], [], []>} : vector<32x16xbf16>, vector<16x17xbf16>, vector<32x17xf32> -> vector<32x17xf32>
    %53 = arith.addf %48, %52 : vector<32x17xf32>
    %c1_38 = arith.constant 1 : index
    %c0_39 = arith.constant 0 : index
    %c0_40 = arith.constant 0 : index
    %54 = vector.load %arg1[%c1_38, %c0_39, %c0_40] : memref<8x32x16xbf16, #tpu.memory_space<vmem>>, vector<1x32x16xbf16>
    %55 = vector.shape_cast %54 : vector<1x32x16xbf16> to vector<32x16xbf16>
    %56 = vector.extract_strided_slice %47 {offsets = [0, 1], sizes = [16, 17], strides = [1, 1]} : vector<16x24xbf16> to vector<16x17xbf16>
    %cst_41 = arith.constant dense<0.000000e+00> : vector<32x17xf32>
    %57 = tpu.matmul %55, %56, %cst_41 {dimension_numbers = #tpu.dot_dimension_numbers<[1], [0], [0], [1], [0, 0, 1, 1], [], []>} : vector<32x16xbf16>, vector<16x17xbf16>, vector<32x17xf32> -> vector<32x17xf32>
    %58 = arith.addf %53, %57 : vector<32x17xf32>
    %c2_42 = arith.constant 2 : index
    %c0_43 = arith.constant 0 : index
    %c0_44 = arith.constant 0 : index
    %59 = vector.load %arg1[%c2_42, %c0_43, %c0_44] : memref<8x32x16xbf16, #tpu.memory_space<vmem>>, vector<1x32x16xbf16>
    %60 = vector.shape_cast %59 : vector<1x32x16xbf16> to vector<32x16xbf16>
    %61 = vector.extract_strided_slice %47 {offsets = [0, 2], sizes = [16, 17], strides = [1, 1]} : vector<16x24xbf16> to vector<16x17xbf16>
    %cst_45 = arith.constant dense<0.000000e+00> : vector<32x17xf32>
    %62 = tpu.matmul %60, %61, %cst_45 {dimension_numbers = #tpu.dot_dimension_numbers<[1], [0], [0], [1], [0, 0, 1, 1], [], []>} : vector<32x16xbf16>, vector<16x17xbf16>, vector<32x17xf32> -> vector<32x17xf32>
    %63 = arith.addf %58, %62 : vector<32x17xf32>
    %c3_46 = arith.constant 3 : index
    %c0_47 = arith.constant 0 : index
    %c0_48 = arith.constant 0 : index
    %64 = vector.load %arg1[%c3_46, %c0_47, %c0_48] : memref<8x32x16xbf16, #tpu.memory_space<vmem>>, vector<1x32x16xbf16>
    %65 = vector.shape_cast %64 : vector<1x32x16xbf16> to vector<32x16xbf16>
    %66 = vector.extract_strided_slice %47 {offsets = [0, 3], sizes = [16, 17], strides = [1, 1]} : vector<16x24xbf16> to vector<16x17xbf16>
    %cst_49 = arith.constant dense<0.000000e+00> : vector<32x17xf32>
    %67 = tpu.matmul %65, %66, %cst_49 {dimension_numbers = #tpu.dot_dimension_numbers<[1], [0], [0], [1], [0, 0, 1, 1], [], []>} : vector<32x16xbf16>, vector<16x17xbf16>, vector<32x17xf32> -> vector<32x17xf32>
    %68 = arith.addf %63, %67 : vector<32x17xf32>
    %c4_50 = arith.constant 4 : index
    %c0_51 = arith.constant 0 : index
    %c0_52 = arith.constant 0 : index
    %69 = vector.load %arg1[%c4_50, %c0_51, %c0_52] : memref<8x32x16xbf16, #tpu.memory_space<vmem>>, vector<1x32x16xbf16>
    %70 = vector.shape_cast %69 : vector<1x32x16xbf16> to vector<32x16xbf16>
    %71 = vector.extract_strided_slice %47 {offsets = [0, 4], sizes = [16, 17], strides = [1, 1]} : vector<16x24xbf16> to vector<16x17xbf16>
    %cst_53 = arith.constant dense<0.000000e+00> : vector<32x17xf32>
    %72 = tpu.matmul %70, %71, %cst_53 {dimension_numbers = #tpu.dot_dimension_numbers<[1], [0], [0], [1], [0, 0, 1, 1], [], []>} : vector<32x16xbf16>, vector<16x17xbf16>, vector<32x17xf32> -> vector<32x17xf32>
    %73 = arith.addf %68, %72 : vector<32x17xf32>
    %c5_54 = arith.constant 5 : index
    %c0_55 = arith.constant 0 : index
    %c0_56 = arith.constant 0 : index
    %74 = vector.load %arg1[%c5_54, %c0_55, %c0_56] : memref<8x32x16xbf16, #tpu.memory_space<vmem>>, vector<1x32x16xbf16>
    %75 = vector.shape_cast %74 : vector<1x32x16xbf16> to vector<32x16xbf16>
    %76 = vector.extract_strided_slice %47 {offsets = [0, 5], sizes = [16, 17], strides = [1, 1]} : vector<16x24xbf16> to vector<16x17xbf16>
    %cst_57 = arith.constant dense<0.000000e+00> : vector<32x17xf32>
    %77 = tpu.matmul %75, %76, %cst_57 {dimension_numbers = #tpu.dot_dimension_numbers<[1], [0], [0], [1], [0, 0, 1, 1], [], []>} : vector<32x16xbf16>, vector<16x17xbf16>, vector<32x17xf32> -> vector<32x17xf32>
    %78 = arith.addf %73, %77 : vector<32x17xf32>
    %c6_58 = arith.constant 6 : index
    %c0_59 = arith.constant 0 : index
    %c0_60 = arith.constant 0 : index
    %79 = vector.load %arg1[%c6_58, %c0_59, %c0_60] : memref<8x32x16xbf16, #tpu.memory_space<vmem>>, vector<1x32x16xbf16>
    %80 = vector.shape_cast %79 : vector<1x32x16xbf16> to vector<32x16xbf16>
    %81 = vector.extract_strided_slice %47 {offsets = [0, 6], sizes = [16, 17], strides = [1, 1]} : vector<16x24xbf16> to vector<16x17xbf16>
    %cst_61 = arith.constant dense<0.000000e+00> : vector<32x17xf32>
    %82 = tpu.matmul %80, %81, %cst_61 {dimension_numbers = #tpu.dot_dimension_numbers<[1], [0], [0], [1], [0, 0, 1, 1], [], []>} : vector<32x16xbf16>, vector<16x17xbf16>, vector<32x17xf32> -> vector<32x17xf32>
    %83 = arith.addf %78, %82 : vector<32x17xf32>
    %c7_62 = arith.constant 7 : index
    %c0_63 = arith.constant 0 : index
    %c0_64 = arith.constant 0 : index
    %84 = vector.load %arg1[%c7_62, %c0_63, %c0_64] : memref<8x32x16xbf16, #tpu.memory_space<vmem>>, vector<1x32x16xbf16>
    %85 = vector.shape_cast %84 : vector<1x32x16xbf16> to vector<32x16xbf16>
    %86 = vector.extract_strided_slice %47 {offsets = [0, 7], sizes = [16, 17], strides = [1, 1]} : vector<16x24xbf16> to vector<16x17xbf16>
    %cst_65 = arith.constant dense<0.000000e+00> : vector<32x17xf32>
    %87 = tpu.matmul %85, %86, %cst_65 {dimension_numbers = #tpu.dot_dimension_numbers<[1], [0], [0], [1], [0, 0, 1, 1], [], []>} : vector<32x16xbf16>, vector<16x17xbf16>, vector<32x17xf32> -> vector<32x17xf32>
    %88 = arith.addf %83, %87 : vector<32x17xf32>
    %c1_66 = arith.constant 1 : index
    %c0_67 = arith.constant 0 : index
    %c0_68 = arith.constant 0 : index
    %89 = vector.load %arg8[%c1_66, %c0_67, %c0_68] : memref<2x32x17xf32, #tpu.memory_space<vmem>>, vector<1x32x17xf32>
    %90 = vector.shape_cast %89 : vector<1x32x17xf32> to vector<32x17xf32>
    %91 = vector.shape_cast %88 : vector<32x17xf32> to vector<1x32x17xf32>
    tpu.vector_store %arg8[%c1_66, %c0_67, %c0_68], %91 {strides = array<i32>} : memref<2x32x17xf32, #tpu.memory_space<vmem>>, vector<1x32x17xf32>,
    %c0_69 = arith.constant 0 : index
    %c0_70 = arith.constant 0 : index
    %c0_71 = arith.constant 0 : index
    %92 = vector.load %arg8[%c0_69, %c0_70, %c0_71] : memref<2x32x17xf32, #tpu.memory_space<vmem>>, vector<2x32x17xf32>
    %cst_72 = arith.constant dense<0.000000e+00> : vector<2x32xf32>
    %93 = vector.multi_reduction <add>, %92, %cst_72 [2] : vector<2x32x17xf32> to vector<2x32xf32>
    %94 = vector.shape_cast %93 : vector<2x32xf32> to vector<2x32x1xf32>
    %cst_73 = arith.constant dense<0.000000e+00> : vector<32x1xf32>
    %95 = vector.multi_reduction <add>, %94, %cst_73 [0] : vector<2x32x1xf32> to vector<32x1xf32>
    %96 = vector.shape_cast %95 : vector<32x1xf32> to vector<1x32x1xf32>
    %cst_74 = arith.constant 0.0294117648 : f32
    %97 = vector.broadcast %cst_74 : f32 to vector<1x32x1xf32>
    %98 = arith.mulf %96, %97 : vector<1x32x1xf32>
    %99 = vector.broadcast %98 : vector<1x32x1xf32> to vector<2x32x17xf32>
    %100 = arith.subf %92, %99 : vector<2x32x17xf32>
    %101 = arith.mulf %100, %100 : vector<2x32x17xf32>
    %cst_75 = arith.constant dense<0.000000e+00> : vector<2x32xf32>
    %102 = vector.multi_reduction <add>, %101, %cst_75 [2] : vector<2x32x17xf32> to vector<2x32xf32>
    %103 = vector.shape_cast %102 : vector<2x32xf32> to vector<2x32x1xf32>
    %cst_76 = arith.constant dense<0.000000e+00> : vector<32x1xf32>
    %104 = vector.multi_reduction <add>, %103, %cst_76 [0] : vector<2x32x1xf32> to vector<32x1xf32>
    %105 = vector.shape_cast %104 : vector<32x1xf32> to vector<1x32x1xf32>
    %cst_77 = arith.constant 0.0294117648 : f32
    %106 = vector.broadcast %cst_77 : f32 to vector<1x32x1xf32>
    %107 = arith.mulf %105, %106 : vector<1x32x1xf32>
    %c0_78 = arith.constant 0 : index
    %c0_79 = arith.constant 0 : index
    %108 = vector.load %arg2[%c0_78, %c0_79] : memref<32x1xf32, #tpu.memory_space<vmem>>, vector<32x1xf32>
    %cst_80 = arith.constant 9.99999974E-6 : f32
    %109 = vector.broadcast %cst_80 : f32 to vector<1x32x1xf32>
    %110 = arith.addf %107, %109 : vector<1x32x1xf32>
    %111 = math.rsqrt %110 : vector<1x32x1xf32>
    %112 = vector.shape_cast %108 : vector<32x1xf32> to vector<1x32x1xf32>
    %113 = arith.mulf %112, %111 : vector<1x32x1xf32>
    %c0_81 = arith.constant 0 : index
    %c0_82 = arith.constant 0 : index
    %114 = vector.load %arg3[%c0_81, %c0_82] : memref<32x1xf32, #tpu.memory_space<vmem>>, vector<32x1xf32>
    %115 = arith.mulf %98, %113 : vector<1x32x1xf32>
    %116 = vector.shape_cast %114 : vector<32x1xf32> to vector<1x32x1xf32>
    %117 = arith.subf %116, %115 : vector<1x32x1xf32>
    %118 = vector.broadcast %113 : vector<1x32x1xf32> to vector<2x32x17xf32>
    %119 = arith.mulf %92, %118 : vector<2x32x17xf32>
    %120 = vector.broadcast %117 : vector<1x32x1xf32> to vector<2x32x17xf32>
    %121 = arith.addf %119, %120 : vector<2x32x17xf32>
    %cst_83 = arith.constant 0.000000e+00 : f32
    %122 = vector.broadcast %cst_83 : f32 to vector<2x32x17xf32>
    %123 = arith.maximumf %121, %122 : vector<2x32x17xf32>
    %cst_84 = arith.constant 0.000000e+00 : bf16
    %124 = vector.broadcast %cst_84 : bf16 to vector<2x32x1xbf16>
    %c0_85 = arith.constant 0 : index
    %c0_86 = arith.constant 0 : index
    %c0_87 = arith.constant 0 : index
    %125 = vector.load %arg9[%c0_85, %c0_86, %c0_87] : memref<2x32x19xbf16, #tpu.memory_space<vmem>>, vector<2x32x1xbf16>
    tpu.vector_store %arg9[%c0_85, %c0_86, %c0_87], %124 {strides = array<i32>} : memref<2x32x19xbf16, #tpu.memory_space<vmem>>, vector<2x32x1xbf16>,
    %c0_88 = arith.constant 0 : index
    %c0_89 = arith.constant 0 : index
    %c18 = arith.constant 18 : index
    %126 = vector.load %arg9[%c0_88, %c0_89, %c18] : memref<2x32x19xbf16, #tpu.memory_space<vmem>>, vector<2x32x1xbf16>
    tpu.vector_store %arg9[%c0_88, %c0_89, %c18], %124 {strides = array<i32>} : memref<2x32x19xbf16, #tpu.memory_space<vmem>>, vector<2x32x1xbf16>,
    %127 = arith.truncf %123 : vector<2x32x17xf32> to vector<2x32x17xbf16>
    %c0_90 = arith.constant 0 : index
    %c0_91 = arith.constant 0 : index
    %c1_92 = arith.constant 1 : index
    %128 = vector.load %arg9[%c0_90, %c0_91, %c1_92] : memref<2x32x19xbf16, #tpu.memory_space<vmem>>, vector<2x32x17xbf16>
    tpu.vector_store %arg9[%c0_90, %c0_91, %c1_92], %127 {strides = array<i32>} : memref<2x32x19xbf16, #tpu.memory_space<vmem>>, vector<2x32x17xbf16>,
    %c0_93 = arith.constant 0 : index
    %c0_94 = arith.constant 0 : index
    %c0_95 = arith.constant 0 : index
    %129 = vector.load %arg9[%c0_93, %c0_94, %c0_95] : memref<2x32x19xbf16, #tpu.memory_space<vmem>>, vector<1x32x19xbf16>
    %130 = vector.shape_cast %129 : vector<1x32x19xbf16> to vector<32x19xbf16>
    %cst_96 = arith.constant 0.000000e+00 : f32
    %131 = vector.broadcast %cst_96 : f32 to vector<32x12xf32>
    %c0_97 = arith.constant 0 : index
    %c0_98 = arith.constant 0 : index
    %c0_99 = arith.constant 0 : index
    %132 = vector.load %arg4[%c0_97, %c0_98, %c0_99] : memref<8x32x32xbf16, #tpu.memory_space<vmem>>, vector<1x32x32xbf16>
    %133 = vector.shape_cast %132 : vector<1x32x32xbf16> to vector<32x32xbf16>
    %134 = vector.extract_strided_slice %130 {offsets = [0, 0], sizes = [32, 12], strides = [1, 1]} : vector<32x19xbf16> to vector<32x12xbf16>
    %cst_100 = arith.constant dense<0.000000e+00> : vector<32x12xf32>
    %135 = tpu.matmul %133, %134, %cst_100 {dimension_numbers = #tpu.dot_dimension_numbers<[1], [0], [0], [1], [0, 0, 1, 1], [], []>} : vector<32x32xbf16>, vector<32x12xbf16>, vector<32x12xf32> -> vector<32x12xf32>
    %136 = arith.addf %131, %135 : vector<32x12xf32>
    %c1_101 = arith.constant 1 : index
    %c0_102 = arith.constant 0 : index
    %c0_103 = arith.constant 0 : index
    %137 = vector.load %arg4[%c1_101, %c0_102, %c0_103] : memref<8x32x32xbf16, #tpu.memory_space<vmem>>, vector<1x32x32xbf16>
    %138 = vector.shape_cast %137 : vector<1x32x32xbf16> to vector<32x32xbf16>
    %139 = vector.extract_strided_slice %130 {offsets = [0, 1], sizes = [32, 12], strides = [1, 1]} : vector<32x19xbf16> to vector<32x12xbf16>
    %cst_104 = arith.constant dense<0.000000e+00> : vector<32x12xf32>
    %140 = tpu.matmul %138, %139, %cst_104 {dimension_numbers = #tpu.dot_dimension_numbers<[1], [0], [0], [1], [0, 0, 1, 1], [], []>} : vector<32x32xbf16>, vector<32x12xbf16>, vector<32x12xf32> -> vector<32x12xf32>
    %141 = arith.addf %136, %140 : vector<32x12xf32>
    %c2_105 = arith.constant 2 : index
    %c0_106 = arith.constant 0 : index
    %c0_107 = arith.constant 0 : index
    %142 = vector.load %arg4[%c2_105, %c0_106, %c0_107] : memref<8x32x32xbf16, #tpu.memory_space<vmem>>, vector<1x32x32xbf16>
    %143 = vector.shape_cast %142 : vector<1x32x32xbf16> to vector<32x32xbf16>
    %144 = vector.extract_strided_slice %130 {offsets = [0, 2], sizes = [32, 12], strides = [1, 1]} : vector<32x19xbf16> to vector<32x12xbf16>
    %cst_108 = arith.constant dense<0.000000e+00> : vector<32x12xf32>
    %145 = tpu.matmul %143, %144, %cst_108 {dimension_numbers = #tpu.dot_dimension_numbers<[1], [0], [0], [1], [0, 0, 1, 1], [], []>} : vector<32x32xbf16>, vector<32x12xbf16>, vector<32x12xf32> -> vector<32x12xf32>
    %146 = arith.addf %141, %145 : vector<32x12xf32>
    %c3_109 = arith.constant 3 : index
    %c0_110 = arith.constant 0 : index
    %c0_111 = arith.constant 0 : index
    %147 = vector.load %arg4[%c3_109, %c0_110, %c0_111] : memref<8x32x32xbf16, #tpu.memory_space<vmem>>, vector<1x32x32xbf16>
    %148 = vector.shape_cast %147 : vector<1x32x32xbf16> to vector<32x32xbf16>
    %149 = vector.extract_strided_slice %130 {offsets = [0, 3], sizes = [32, 12], strides = [1, 1]} : vector<32x19xbf16> to vector<32x12xbf16>
    %cst_112 = arith.constant dense<0.000000e+00> : vector<32x12xf32>
    %150 = tpu.matmul %148, %149, %cst_112 {dimension_numbers = #tpu.dot_dimension_numbers<[1], [0], [0], [1], [0, 0, 1, 1], [], []>} : vector<32x32xbf16>, vector<32x12xbf16>, vector<32x12xf32> -> vector<32x12xf32>
    %151 = arith.addf %146, %150 : vector<32x12xf32>
    %c4_113 = arith.constant 4 : index
    %c0_114 = arith.constant 0 : index
    %c0_115 = arith.constant 0 : index
    %152 = vector.load %arg4[%c4_113, %c0_114, %c0_115] : memref<8x32x32xbf16, #tpu.memory_space<vmem>>, vector<1x32x32xbf16>
    %153 = vector.shape_cast %152 : vector<1x32x32xbf16> to vector<32x32xbf16>
    %154 = vector.extract_strided_slice %130 {offsets = [0, 4], sizes = [32, 12], strides = [1, 1]} : vector<32x19xbf16> to vector<32x12xbf16>
    %cst_116 = arith.constant dense<0.000000e+00> : vector<32x12xf32>
    %155 = tpu.matmul %153, %154, %cst_116 {dimension_numbers = #tpu.dot_dimension_numbers<[1], [0], [0], [1], [0, 0, 1, 1], [], []>} : vector<32x32xbf16>, vector<32x12xbf16>, vector<32x12xf32> -> vector<32x12xf32>
    %156 = arith.addf %151, %155 : vector<32x12xf32>
    %c5_117 = arith.constant 5 : index
    %c0_118 = arith.constant 0 : index
    %c0_119 = arith.constant 0 : index
    %157 = vector.load %arg4[%c5_117, %c0_118, %c0_119] : memref<8x32x32xbf16, #tpu.memory_space<vmem>>, vector<1x32x32xbf16>
    %158 = vector.shape_cast %157 : vector<1x32x32xbf16> to vector<32x32xbf16>
    %159 = vector.extract_strided_slice %130 {offsets = [0, 5], sizes = [32, 12], strides = [1, 1]} : vector<32x19xbf16> to vector<32x12xbf16>
    %cst_120 = arith.constant dense<0.000000e+00> : vector<32x12xf32>
    %160 = tpu.matmul %158, %159, %cst_120 {dimension_numbers = #tpu.dot_dimension_numbers<[1], [0], [0], [1], [0, 0, 1, 1], [], []>} : vector<32x32xbf16>, vector<32x12xbf16>, vector<32x12xf32> -> vector<32x12xf32>
    %161 = arith.addf %156, %160 : vector<32x12xf32>
    %c6_121 = arith.constant 6 : index
    %c0_122 = arith.constant 0 : index
    %c0_123 = arith.constant 0 : index
    %162 = vector.load %arg4[%c6_121, %c0_122, %c0_123] : memref<8x32x32xbf16, #tpu.memory_space<vmem>>, vector<1x32x32xbf16>
    %163 = vector.shape_cast %162 : vector<1x32x32xbf16> to vector<32x32xbf16>
    %164 = vector.extract_strided_slice %130 {offsets = [0, 6], sizes = [32, 12], strides = [1, 1]} : vector<32x19xbf16> to vector<32x12xbf16>
    %cst_124 = arith.constant dense<0.000000e+00> : vector<32x12xf32>
    %165 = tpu.matmul %163, %164, %cst_124 {dimension_numbers = #tpu.dot_dimension_numbers<[1], [0], [0], [1], [0, 0, 1, 1], [], []>} : vector<32x32xbf16>, vector<32x12xbf16>, vector<32x12xf32> -> vector<32x12xf32>
    %166 = arith.addf %161, %165 : vector<32x12xf32>
    %c7_125 = arith.constant 7 : index
    %c0_126 = arith.constant 0 : index
    %c0_127 = arith.constant 0 : index
    %167 = vector.load %arg4[%c7_125, %c0_126, %c0_127] : memref<8x32x32xbf16, #tpu.memory_space<vmem>>, vector<1x32x32xbf16>
    %168 = vector.shape_cast %167 : vector<1x32x32xbf16> to vector<32x32xbf16>
    %169 = vector.extract_strided_slice %130 {offsets = [0, 7], sizes = [32, 12], strides = [1, 1]} : vector<32x19xbf16> to vector<32x12xbf16>
    %cst_128 = arith.constant dense<0.000000e+00> : vector<32x12xf32>
    %170 = tpu.matmul %168, %169, %cst_128 {dimension_numbers = #tpu.dot_dimension_numbers<[1], [0], [0], [1], [0, 0, 1, 1], [], []>} : vector<32x32xbf16>, vector<32x12xbf16>, vector<32x12xf32> -> vector<32x12xf32>
    %171 = arith.addf %166, %170 : vector<32x12xf32>
    %c0_129 = arith.constant 0 : index
    %c0_130 = arith.constant 0 : index
    %c0_131 = arith.constant 0 : index
    %172 = vector.load %arg10[%c0_129, %c0_130, %c0_131] : memref<2x32x12xf32, #tpu.memory_space<vmem>>, vector<1x32x12xf32>
    %173 = vector.shape_cast %172 : vector<1x32x12xf32> to vector<32x12xf32>
    %174 = vector.shape_cast %171 : vector<32x12xf32> to vector<1x32x12xf32>
    tpu.vector_store %arg10[%c0_129, %c0_130, %c0_131], %174 {strides = array<i32>} : memref<2x32x12xf32, #tpu.memory_space<vmem>>, vector<1x32x12xf32>,
    %c1_132 = arith.constant 1 : index
    %c0_133 = arith.constant 0 : index
    %c0_134 = arith.constant 0 : index
    %175 = vector.load %arg9[%c1_132, %c0_133, %c0_134] : memref<2x32x19xbf16, #tpu.memory_space<vmem>>, vector<1x32x19xbf16>
    %176 = vector.shape_cast %175 : vector<1x32x19xbf16> to vector<32x19xbf16>
    %cst_135 = arith.constant 0.000000e+00 : f32
    %177 = vector.broadcast %cst_135 : f32 to vector<32x12xf32>
    %c0_136 = arith.constant 0 : index
    %c0_137 = arith.constant 0 : index
    %c0_138 = arith.constant 0 : index
    %178 = vector.load %arg4[%c0_136, %c0_137, %c0_138] : memref<8x32x32xbf16, #tpu.memory_space<vmem>>, vector<1x32x32xbf16>
    %179 = vector.shape_cast %178 : vector<1x32x32xbf16> to vector<32x32xbf16>
    %180 = vector.extract_strided_slice %176 {offsets = [0, 0], sizes = [32, 12], strides = [1, 1]} : vector<32x19xbf16> to vector<32x12xbf16>
    %cst_139 = arith.constant dense<0.000000e+00> : vector<32x12xf32>
    %181 = tpu.matmul %179, %180, %cst_139 {dimension_numbers = #tpu.dot_dimension_numbers<[1], [0], [0], [1], [0, 0, 1, 1], [], []>} : vector<32x32xbf16>, vector<32x12xbf16>, vector<32x12xf32> -> vector<32x12xf32>
    %182 = arith.addf %177, %181 : vector<32x12xf32>
    %c1_140 = arith.constant 1 : index
    %c0_141 = arith.constant 0 : index
    %c0_142 = arith.constant 0 : index
    %183 = vector.load %arg4[%c1_140, %c0_141, %c0_142] : memref<8x32x32xbf16, #tpu.memory_space<vmem>>, vector<1x32x32xbf16>
    %184 = vector.shape_cast %183 : vector<1x32x32xbf16> to vector<32x32xbf16>
    %185 = vector.extract_strided_slice %176 {offsets = [0, 1], sizes = [32, 12], strides = [1, 1]} : vector<32x19xbf16> to vector<32x12xbf16>
    %cst_143 = arith.constant dense<0.000000e+00> : vector<32x12xf32>
    %186 = tpu.matmul %184, %185, %cst_143 {dimension_numbers = #tpu.dot_dimension_numbers<[1], [0], [0], [1], [0, 0, 1, 1], [], []>} : vector<32x32xbf16>, vector<32x12xbf16>, vector<32x12xf32> -> vector<32x12xf32>
    %187 = arith.addf %182, %186 : vector<32x12xf32>
    %c2_144 = arith.constant 2 : index
    %c0_145 = arith.constant 0 : index
    %c0_146 = arith.constant 0 : index
    %188 = vector.load %arg4[%c2_144, %c0_145, %c0_146] : memref<8x32x32xbf16, #tpu.memory_space<vmem>>, vector<1x32x32xbf16>
    %189 = vector.shape_cast %188 : vector<1x32x32xbf16> to vector<32x32xbf16>
    %190 = vector.extract_strided_slice %176 {offsets = [0, 2], sizes = [32, 12], strides = [1, 1]} : vector<32x19xbf16> to vector<32x12xbf16>
    %cst_147 = arith.constant dense<0.000000e+00> : vector<32x12xf32>
    %191 = tpu.matmul %189, %190, %cst_147 {dimension_numbers = #tpu.dot_dimension_numbers<[1], [0], [0], [1], [0, 0, 1, 1], [], []>} : vector<32x32xbf16>, vector<32x12xbf16>, vector<32x12xf32> -> vector<32x12xf32>
    %192 = arith.addf %187, %191 : vector<32x12xf32>
    %c3_148 = arith.constant 3 : index
    %c0_149 = arith.constant 0 : index
    %c0_150 = arith.constant 0 : index
    %193 = vector.load %arg4[%c3_148, %c0_149, %c0_150] : memref<8x32x32xbf16, #tpu.memory_space<vmem>>, vector<1x32x32xbf16>
    %194 = vector.shape_cast %193 : vector<1x32x32xbf16> to vector<32x32xbf16>
    %195 = vector.extract_strided_slice %176 {offsets = [0, 3], sizes = [32, 12], strides = [1, 1]} : vector<32x19xbf16> to vector<32x12xbf16>
    %cst_151 = arith.constant dense<0.000000e+00> : vector<32x12xf32>
    %196 = tpu.matmul %194, %195, %cst_151 {dimension_numbers = #tpu.dot_dimension_numbers<[1], [0], [0], [1], [0, 0, 1, 1], [], []>} : vector<32x32xbf16>, vector<32x12xbf16>, vector<32x12xf32> -> vector<32x12xf32>
    %197 = arith.addf %192, %196 : vector<32x12xf32>
    %c4_152 = arith.constant 4 : index
    %c0_153 = arith.constant 0 : index
    %c0_154 = arith.constant 0 : index
    %198 = vector.load %arg4[%c4_152, %c0_153, %c0_154] : memref<8x32x32xbf16, #tpu.memory_space<vmem>>, vector<1x32x32xbf16>
    %199 = vector.shape_cast %198 : vector<1x32x32xbf16> to vector<32x32xbf16>
    %200 = vector.extract_strided_slice %176 {offsets = [0, 4], sizes = [32, 12], strides = [1, 1]} : vector<32x19xbf16> to vector<32x12xbf16>
    %cst_155 = arith.constant dense<0.000000e+00> : vector<32x12xf32>
    %201 = tpu.matmul %199, %200, %cst_155 {dimension_numbers = #tpu.dot_dimension_numbers<[1], [0], [0], [1], [0, 0, 1, 1], [], []>} : vector<32x32xbf16>, vector<32x12xbf16>, vector<32x12xf32> -> vector<32x12xf32>
    %202 = arith.addf %197, %201 : vector<32x12xf32>
    %c5_156 = arith.constant 5 : index
    %c0_157 = arith.constant 0 : index
    %c0_158 = arith.constant 0 : index
    %203 = vector.load %arg4[%c5_156, %c0_157, %c0_158] : memref<8x32x32xbf16, #tpu.memory_space<vmem>>, vector<1x32x32xbf16>
    %204 = vector.shape_cast %203 : vector<1x32x32xbf16> to vector<32x32xbf16>
    %205 = vector.extract_strided_slice %176 {offsets = [0, 5], sizes = [32, 12], strides = [1, 1]} : vector<32x19xbf16> to vector<32x12xbf16>
    %cst_159 = arith.constant dense<0.000000e+00> : vector<32x12xf32>
    %206 = tpu.matmul %204, %205, %cst_159 {dimension_numbers = #tpu.dot_dimension_numbers<[1], [0], [0], [1], [0, 0, 1, 1], [], []>} : vector<32x32xbf16>, vector<32x12xbf16>, vector<32x12xf32> -> vector<32x12xf32>
    %207 = arith.addf %202, %206 : vector<32x12xf32>
    %c6_160 = arith.constant 6 : index
    %c0_161 = arith.constant 0 : index
    %c0_162 = arith.constant 0 : index
    %208 = vector.load %arg4[%c6_160, %c0_161, %c0_162] : memref<8x32x32xbf16, #tpu.memory_space<vmem>>, vector<1x32x32xbf16>
    %209 = vector.shape_cast %208 : vector<1x32x32xbf16> to vector<32x32xbf16>
    %210 = vector.extract_strided_slice %176 {offsets = [0, 6], sizes = [32, 12], strides = [1, 1]} : vector<32x19xbf16> to vector<32x12xbf16>
    %cst_163 = arith.constant dense<0.000000e+00> : vector<32x12xf32>
    %211 = tpu.matmul %209, %210, %cst_163 {dimension_numbers = #tpu.dot_dimension_numbers<[1], [0], [0], [1], [0, 0, 1, 1], [], []>} : vector<32x32xbf16>, vector<32x12xbf16>, vector<32x12xf32> -> vector<32x12xf32>
    %212 = arith.addf %207, %211 : vector<32x12xf32>
    %c7_164 = arith.constant 7 : index
    %c0_165 = arith.constant 0 : index
    %c0_166 = arith.constant 0 : index
    %213 = vector.load %arg4[%c7_164, %c0_165, %c0_166] : memref<8x32x32xbf16, #tpu.memory_space<vmem>>, vector<1x32x32xbf16>
    %214 = vector.shape_cast %213 : vector<1x32x32xbf16> to vector<32x32xbf16>
    %215 = vector.extract_strided_slice %176 {offsets = [0, 7], sizes = [32, 12], strides = [1, 1]} : vector<32x19xbf16> to vector<32x12xbf16>
    %cst_167 = arith.constant dense<0.000000e+00> : vector<32x12xf32>
    %216 = tpu.matmul %214, %215, %cst_167 {dimension_numbers = #tpu.dot_dimension_numbers<[1], [0], [0], [1], [0, 0, 1, 1], [], []>} : vector<32x32xbf16>, vector<32x12xbf16>, vector<32x12xf32> -> vector<32x12xf32>
    %217 = arith.addf %212, %216 : vector<32x12xf32>
    %c1_168 = arith.constant 1 : index
    %c0_169 = arith.constant 0 : index
    %c0_170 = arith.constant 0 : index
    %218 = vector.load %arg10[%c1_168, %c0_169, %c0_170] : memref<2x32x12xf32, #tpu.memory_space<vmem>>, vector<1x32x12xf32>
    %219 = vector.shape_cast %218 : vector<1x32x12xf32> to vector<32x12xf32>
    %220 = vector.shape_cast %217 : vector<32x12xf32> to vector<1x32x12xf32>
    tpu.vector_store %arg10[%c1_168, %c0_169, %c0_170], %220 {strides = array<i32>} : memref<2x32x12xf32, #tpu.memory_space<vmem>>, vector<1x32x12xf32>,
    %c0_171 = arith.constant 0 : index
    %c0_172 = arith.constant 0 : index
    %c0_173 = arith.constant 0 : index
    %221 = vector.load %arg10[%c0_171, %c0_172, %c0_173] : memref<2x32x12xf32, #tpu.memory_space<vmem>>, vector<2x32x12xf32>
    %cst_174 = arith.constant dense<0.000000e+00> : vector<2x32xf32>
    %222 = vector.multi_reduction <add>, %221, %cst_174 [2] : vector<2x32x12xf32> to vector<2x32xf32>
    %223 = vector.shape_cast %222 : vector<2x32xf32> to vector<2x32x1xf32>
    %cst_175 = arith.constant dense<0.000000e+00> : vector<32x1xf32>
    %224 = vector.multi_reduction <add>, %223, %cst_175 [0] : vector<2x32x1xf32> to vector<32x1xf32>
    %225 = vector.shape_cast %224 : vector<32x1xf32> to vector<1x32x1xf32>
    %cst_176 = arith.constant 0.0416666679 : f32
    %226 = vector.broadcast %cst_176 : f32 to vector<1x32x1xf32>
    %227 = arith.mulf %225, %226 : vector<1x32x1xf32>
    %228 = vector.broadcast %227 : vector<1x32x1xf32> to vector<2x32x12xf32>
    %229 = arith.subf %221, %228 : vector<2x32x12xf32>
    %230 = arith.mulf %229, %229 : vector<2x32x12xf32>
    %cst_177 = arith.constant dense<0.000000e+00> : vector<2x32xf32>
    %231 = vector.multi_reduction <add>, %230, %cst_177 [2] : vector<2x32x12xf32> to vector<2x32xf32>
    %232 = vector.shape_cast %231 : vector<2x32xf32> to vector<2x32x1xf32>
    %cst_178 = arith.constant dense<0.000000e+00> : vector<32x1xf32>
    %233 = vector.multi_reduction <add>, %232, %cst_178 [0] : vector<2x32x1xf32> to vector<32x1xf32>
    %234 = vector.shape_cast %233 : vector<32x1xf32> to vector<1x32x1xf32>
    %cst_179 = arith.constant 0.0416666679 : f32
    %235 = vector.broadcast %cst_179 : f32 to vector<1x32x1xf32>
    %236 = arith.mulf %234, %235 : vector<1x32x1xf32>
    %c0_180 = arith.constant 0 : index
    %c0_181 = arith.constant 0 : index
    %237 = vector.load %arg5[%c0_180, %c0_181] : memref<32x1xf32, #tpu.memory_space<vmem>>, vector<32x1xf32>
    %cst_182 = arith.constant 9.99999974E-6 : f32
    %238 = vector.broadcast %cst_182 : f32 to vector<1x32x1xf32>
    %239 = arith.addf %236, %238 : vector<1x32x1xf32>
    %240 = math.rsqrt %239 : vector<1x32x1xf32>
    %241 = vector.shape_cast %237 : vector<32x1xf32> to vector<1x32x1xf32>
    %242 = arith.mulf %241, %240 : vector<1x32x1xf32>
    %c0_183 = arith.constant 0 : index
    %c0_184 = arith.constant 0 : index
    %243 = vector.load %arg6[%c0_183, %c0_184] : memref<32x1xf32, #tpu.memory_space<vmem>>, vector<32x1xf32>
    %244 = arith.mulf %227, %242 : vector<1x32x1xf32>
    %245 = vector.shape_cast %243 : vector<32x1xf32> to vector<1x32x1xf32>
    %246 = arith.subf %245, %244 : vector<1x32x1xf32>
    %247 = vector.broadcast %242 : vector<1x32x1xf32> to vector<2x32x12xf32>
    %248 = arith.mulf %221, %247 : vector<2x32x12xf32>
    %249 = vector.broadcast %246 : vector<1x32x1xf32> to vector<2x32x12xf32>
    %250 = arith.addf %248, %249 : vector<2x32x12xf32>
    %cst_185 = arith.constant 0.000000e+00 : f32
    %251 = vector.broadcast %cst_185 : f32 to vector<2x32x12xf32>
    %252 = arith.maximumf %250, %251 : vector<2x32x12xf32>
    %c0_186 = arith.constant 0 : index
    %c0_187 = arith.constant 0 : index
    %c0_188 = arith.constant 0 : index
    %253 = vector.load %arg7[%c0_186, %c0_187, %c0_188] : memref<2x32x12xf32, #tpu.memory_space<vmem>>, vector<2x32x12xf32>
    tpu.vector_store %arg7[%c0_186, %c0_187, %c0_188], %252 {strides = array<i32>} : memref<2x32x12xf32, #tpu.memory_space<vmem>>, vector<2x32x12xf32>,
    return
  }
}

</mosaic_0001>

<llo_original>
// kernel: tpu_custom_call.1
$region0: #{tpu_custom_call.1}
  #allocation0 [shape = 'u32[]', space=smem, size = 0x4, offset = 0x4, fixed_abs, tag = 'smem constant byte address 0x4 - core index']
  #allocation1 [shape = 'u32[144,128]{1,0:T(1,128)}', space=vmem, size = 0x12000, scoped, tag = 'internal scratch']
  #allocation2 [shape = 'f32[2,32,17]{2,1,0:T(8,128)}', space=vmem, size = 0x8000, scoped, tag = 'scratch operand']
  #allocation3 [shape = 'bf16[2,32,19]{2,1,0:T(8,128)(2,1)}', space=vmem, size = 0x4000, scoped, tag = 'scratch operand']
  #allocation4 [shape = 'f32[2,32,12]{2,1,0:T(8,128)}', space=vmem, size = 0x8000, scoped, tag = 'scratch operand']
  %s0 = inlined_call_operand.vmem [shape: bf16[2,16,24], index: 0, kind: input, shape index: {}]
  %s1 = inlined_call_operand.vmem [shape: bf16[8,32,16], index: 1, kind: input, shape index: {}]
  %s2 = inlined_call_operand.vmem [shape: f32[32,1], index: 2, kind: input, shape index: {}]
  %s3 = inlined_call_operand.vmem [shape: f32[32,1], index: 3, kind: input, shape index: {}]
  %s4 = inlined_call_operand.vmem [shape: bf16[8,32,32], index: 4, kind: input, shape index: {}]
  %s5 = inlined_call_operand.vmem [shape: f32[32,1], index: 5, kind: input, shape index: {}]
  %s6 = inlined_call_operand.vmem [shape: f32[32,1], index: 6, kind: input, shape index: {}]
  %s7 = inlined_call_operand.vmem [shape: f32[2,32,12], index: 7, kind: output, shape index: {}]
  %s8 = sld [smem:[#allocation0]]
  $region38: #{tpu_custom_call.1} parent=0
    _
  %s10 = ssub.s32 1, %s8
  %s11 = scalar_select 0, %s10, %s8
  // Predicated region
  $region2: #{tpu_custom_call.1} parent=0 // pred_check
    _
  $region3: #{tpu_custom_call.1} parent=0 // pred_check_branch
    %13 = sbr.rel (0) target = $region5
  $region4: #{tpu_custom_call.1} parent=0 // pred_region
    _
  $region5: #{tpu_custom_call.1} parent=0 // pred_fallthru
    _
  // Predicated region
  $region6: #{tpu_custom_call.1} parent=0 // pred_check
    _
  $region7: #{tpu_custom_call.1} parent=0 // pred_check_branch
    %15 = sbr.rel (0) target = $region9
  $region8: #{tpu_custom_call.1} parent=0 // pred_region
    _
  $region9: #{tpu_custom_call.1} parent=0 // pred_fallthru
    _
  // Predicated region
  $region10: #{tpu_custom_call.1} parent=0 // pred_check
    _
  $region11: #{tpu_custom_call.1} parent=0 // pred_check_branch
    %17 = sbr.rel (0) target = $region13
  $region12: #{tpu_custom_call.1} parent=0 // pred_region
    _
  $region13: #{tpu_custom_call.1} parent=0 // pred_fallthru
    _
  // Predicated region
  $region14: #{tpu_custom_call.1} parent=0 // pred_check
    _
  $region15: #{tpu_custom_call.1} parent=0 // pred_check_branch
    %19 = sbr.rel (0) target = $region17
  $region16: #{tpu_custom_call.1} parent=0 // pred_region
    _
  $region17: #{tpu_custom_call.1} parent=0 // pred_fallthru
    _
  // Predicated region
  $region18: #{tpu_custom_call.1} parent=0 // pred_check
    _
  $region19: #{tpu_custom_call.1} parent=0 // pred_check_branch
    %21 = sbr.rel (0) target = $region21
  $region20: #{tpu_custom_call.1} parent=0 // pred_region
    _
  $region21: #{tpu_custom_call.1} parent=0 // pred_fallthru
    _
  // Predicated region
  $region22: #{tpu_custom_call.1} parent=0 // pred_check
    _
  $region23: #{tpu_custom_call.1} parent=0 // pred_check_branch
    %23 = sbr.rel (0) target = $region25
  $region24: #{tpu_custom_call.1} parent=0 // pred_region
    _
  $region25: #{tpu_custom_call.1} parent=0 // pred_fallthru
    _
  // Predicated region
  $region26: #{tpu_custom_call.1} parent=0 // pred_check
    _
  $region27: #{tpu_custom_call.1} parent=0 // pred_check_branch
    %25 = sbr.rel (0) target = $region29
  $region28: #{tpu_custom_call.1} parent=0 // pred_region
    _
  $region29: #{tpu_custom_call.1} parent=0 // pred_fallthru
    _
  %v27 = vld [vmem:[%s0] sm:$0xf]
  %v28 = vld [vmem:[%s0 + $0x4] sm:$0xf]
  %v29 = vld [vmem:[%s1] sm:$0xf]
  %v30 = vld [vmem:[%s1 + $0x4] sm:$0xf]
  %v31 = vld [vmem:[%s1 + $0x8] sm:$0xf]
  %v32 = vld [vmem:[%s1 + $0xc] sm:$0xf]
  %s33 = scalar_lea.vmem %s1, 16
  %v34 = vld [vmem:[%s33] sm:$0xf]
  %v35 = vld [vmem:[%s33 + $0x4] sm:$0xf]
  %v36 = vld [vmem:[%s33 + $0x8] sm:$0xf]
  %v37 = vld [vmem:[%s33 + $0xc] sm:$0xf]
  %v42 = vunpack.c.l.b16 %v34
  %v43 = vunpack.c.l.b16 %v35
  %v44 = vunpack.c.l.b16 %v36
  %v45 = vunpack.c.l.b16 %v37
  %v46 = vpack.c.b16 %v43, %v42
  %v47 = vpack.c.b16 %v45, %v44
  %v50 = vunpack.c.l.b16 %v27
  %v51 = vunpack.c.l.b16 %v28
  %v52 = vpack.c.b16 %v51, %v50
  %53 = vrot.lane.b32.xlu0 %v52, 127
  %v54 = vpop.permute.xlu0 %53
  %vm56 = vcmask 130048
  %v58 = vsel %vm56, %v46, 0
  %v61 = vsel %vm56, %v47, 0
  %63 = vmatprep.subr.bf16.mxu0 0
  %64 = vmatpush1.bf16.msra.mxu0 0
  %65 = vmatprep.subr.bf16.mxu0 0
  %66 = vmatpush1.bf16.msra.mxu0 0
  %67 = vmatprep.subr.bf16.mxu0 0
  %68 = vmatpush1.bf16.msra.mxu0 0
  %69 = vmatprep.subr.bf16.mxu0 0
  %70 = vmatpush1.bf16.msra.mxu0 0
  %71 = vmatprep.subr.bf16.mxu0 0
  %72 = vmatpush1.bf16.msra.mxu0 0
  %73 = vmatprep.subr.bf16.mxu0 0
  %74 = vmatpush1.bf16.msra.mxu0 0
  %75 = vmatprep.subr.bf16.mxu0 0
  %76 = vmatpush1.bf16.msra.mxu0 0
  %77 = vmatprep.subr.bf16.mxu0 0
  %78 = vmatpush1.bf16.msra.mxu0 %v54
  %79 = vmatprep.subr.bf16.mxu0 0
  %80 = vmatpush2.bf16.msra.mxu0 0
  %81 = vmatprep.subr.bf16.mxu0 0
  %82 = vmatpush2.bf16.msra.mxu0 0
  %83 = vmatprep.subr.bf16.mxu0 0
  %84 = vmatpush2.bf16.msra.mxu0 0
  %85 = vmatprep.subr.bf16.mxu0 0
  %86 = vmatpush2.bf16.msra.mxu0 0
  %87 = vmatprep.subr.bf16.mxu0 0
  %88 = vmatpush2.bf16.msra.mxu0 0
  %89 = vmatprep.subr.bf16.mxu0 0
  %90 = vmatpush2.bf16.msra.mxu0 0
  %91 = vmatprep.subr.bf16.mxu0 0
  %92 = vmatpush2.bf16.msra.mxu0 0
  %93 = vmatprep.subr.bf16.mxu0 0
  %94 = vmatpush2.bf16.msra.mxu0 0
  %95 = vmatprep.mubr.bf16.mxu0 0
  %96 = vmatmul.mubr.bf16.gmra.mxu0 %v58
  %v97 = vpop.f32.mrf.mxu0
  %v98 = vadd.f32 0.0, %v97
  %v99 = vpop.f32.mrf.mxu0
  %v100 = vpop.f32.mrf.mxu0
  %v101 = vadd.f32 0.0, %v100
  %v102 = vpop.f32.mrf.mxu0
  %103 = vmatprep.mubr.bf16.mxu0 0
  %104 = vmatmul.mubr.bf16.gmra.mxu0 %v61
  %v105 = vpop.f32.mrf.mxu0
  %v106 = vadd.f32 0.0, %v105
  %v107 = vpop.f32.mrf.mxu0
  %v108 = vpop.f32.mrf.mxu0
  %v109 = vadd.f32 0.0, %v108
  %v110 = vpop.f32.mrf.mxu0
  %111 = vdwg.mxu0
  %v116 = vunpack.c.l.b16 %v29
  %v117 = vunpack.c.l.b16 %v30
  %v118 = vunpack.c.l.b16 %v31
  %v119 = vunpack.c.l.b16 %v32
  %v120 = vpack.c.b16 %v117, %v116
  %v121 = vpack.c.b16 %v119, %v118
  %v124 = vsel %vm56, %v120, 0
  %v127 = vsel %vm56, %v121, 0
  %129 = vmatprep.subr.bf16.mxu0 0
  %130 = vmatpush1.bf16.msra.mxu0 0
  %131 = vmatprep.subr.bf16.mxu0 0
  %132 = vmatpush1.bf16.msra.mxu0 0
  %133 = vmatprep.subr.bf16.mxu0 0
  %134 = vmatpush1.bf16.msra.mxu0 0
  %135 = vmatprep.subr.bf16.mxu0 0
  %136 = vmatpush1.bf16.msra.mxu0 0
  %137 = vmatprep.subr.bf16.mxu0 0
  %138 = vmatpush1.bf16.msra.mxu0 0
  %139 = vmatprep.subr.bf16.mxu0 0
  %140 = vmatpush1.bf16.msra.mxu0 0
  %141 = vmatprep.subr.bf16.mxu0 0
  %142 = vmatpush1.bf16.msra.mxu0 0
  %143 = vmatprep.subr.bf16.mxu0 0
  %144 = vmatpush1.bf16.msra.mxu0 %v52
  %145 = vmatprep.subr.bf16.mxu0 0
  %146 = vmatpush2.bf16.msra.mxu0 0
  %147 = vmatprep.subr.bf16.mxu0 0
  %148 = vmatpush2.bf16.msra.mxu0 0
  %149 = vmatprep.subr.bf16.mxu0 0
  %150 = vmatpush2.bf16.msra.mxu0 0
  %151 = vmatprep.subr.bf16.mxu0 0
  %152 = vmatpush2.bf16.msra.mxu0 0
  %153 = vmatprep.subr.bf16.mxu0 0
  %154 = vmatpush2.bf16.msra.mxu0 0
  %155 = vmatprep.subr.bf16.mxu0 0
  %156 = vmatpush2.bf16.msra.mxu0 0
  %157 = vmatprep.subr.bf16.mxu0 0
  %158 = vmatpush2.bf16.msra.mxu0 0
  %159 = vmatprep.subr.bf16.mxu0 0
  %160 = vmatpush2.bf16.msra.mxu0 0
  %161 = vmatprep.mubr.bf16.mxu0 0
  %162 = vmatmul.mubr.bf16.gmra.mxu0 %v124
  %v163 = vpop.f32.mrf.mxu0
  %v164 = vadd.f32 %v98, %v163
  %v165 = vpop.f32.mrf.mxu0
  %v166 = vpop.f32.mrf.mxu0
  %v167 = vadd.f32 %v101, %v166
  %v168 = vpop.f32.mrf.mxu0
  %169 = vmatprep.mubr.bf16.mxu0 0
  %170 = vmatmul.mubr.bf16.gmra.mxu0 %v127
  %v171 = vpop.f32.mrf.mxu0
  %v172 = vadd.f32 %v106, %v171
  %v173 = vpop.f32.mrf.mxu0
  %v174 = vpop.f32.mrf.mxu0
  %v175 = vadd.f32 %v109, %v174
  %v176 = vpop.f32.mrf.mxu0
  %177 = vdwg.mxu0
  %s178 = scalar_lea.vmem %s1, 32
  %v179 = vld [vmem:[%s178] sm:$0xf]
  %v180 = vld [vmem:[%s178 + $0x4] sm:$0xf]
  %v181 = vld [vmem:[%s178 + $0x8] sm:$0xf]
  %v182 = vld [vmem:[%s178 + $0xc] sm:$0xf]
  %v187 = vunpack.c.l.b16 %v179
  %v188 = vunpack.c.l.b16 %v180
  %v189 = vunpack.c.l.b16 %v181
  %v190 = vunpack.c.l.b16 %v182
  %v191 = vpack.c.b16 %v188, %v187
  %v192 = vpack.c.b16 %v190, %v189
  %193 = vrot.lane.b32.xlu0 %v52, 126
  %v194 = vpop.permute.xlu0 %193
  %v197 = vsel %vm56, %v191, 0
  %v200 = vsel %vm56, %v192, 0
  %202 = vmatprep.subr.bf16.mxu0 0
  %203 = vmatpush1.bf16.msra.mxu0 0
  %204 = vmatprep.subr.bf16.mxu0 0
  %205 = vmatpush1.bf16.msra.mxu0 0
  %206 = vmatprep.subr.bf16.mxu0 0
  %207 = vmatpush1.bf16.msra.mxu0 0
  %208 = vmatprep.subr.bf16.mxu0 0
  %209 = vmatpush1.bf16.msra.mxu0 0
  %210 = vmatprep.subr.bf16.mxu0 0
  %211 = vmatpush1.bf16.msra.mxu0 0
  %212 = vmatprep.subr.bf16.mxu0 0
  %213 = vmatpush1.bf16.msra.mxu0 0
  %214 = vmatprep.subr.bf16.mxu0 0
  %215 = vmatpush1.bf16.msra.mxu0 0
  %216 = vmatprep.subr.bf16.mxu0 0
  %217 = vmatpush1.bf16.msra.mxu0 %v194
  %218 = vmatprep.subr.bf16.mxu0 0
  %219 = vmatpush2.bf16.msra.mxu0 0
  %220 = vmatprep.subr.bf16.mxu0 0
  %221 = vmatpush2.bf16.msra.mxu0 0
  %222 = vmatprep.subr.bf16.mxu0 0
  %223 = vmatpush2.bf16.msra.mxu0 0
  %224 = vmatprep.subr.bf16.mxu0 0
  %225 = vmatpush2.bf16.msra.mxu0 0
  %226 = vmatprep.subr.bf16.mxu0 0
  %227 = vmatpush2.bf16.msra.mxu0 0
  %228 = vmatprep.subr.bf16.mxu0 0
  %229 = vmatpush2.bf16.msra.mxu0 0
  %230 = vmatprep.subr.bf16.mxu0 0
  %231 = vmatpush2.bf16.msra.mxu0 0
  %232 = vmatprep.subr.bf16.mxu0 0
  %233 = vmatpush2.bf16.msra.mxu0 0
  %234 = vmatprep.mubr.bf16.mxu0 0
  %235 = vmatmul.mubr.bf16.gmra.mxu0 %v197
  %v236 = vpop.f32.mrf.mxu0
  %v237 = vadd.f32 0.0, %v236
  %v238 = vpop.f32.mrf.mxu0
  %v239 = vpop.f32.mrf.mxu0
  %v240 = vadd.f32 0.0, %v239
  %v241 = vpop.f32.mrf.mxu0
  %242 = vmatprep.mubr.bf16.mxu0 0
  %243 = vmatmul.mubr.bf16.gmra.mxu0 %v200
  %v244 = vpop.f32.mrf.mxu0
  %v245 = vadd.f32 0.0, %v244
  %v246 = vpop.f32.mrf.mxu0
  %v247 = vpop.f32.mrf.mxu0
  %v248 = vadd.f32 0.0, %v247
  %v249 = vpop.f32.mrf.mxu0
  %250 = vdwg.mxu0
  %v251 = vadd.f32 %v164, %v237
  %v252 = vadd.f32 %v167, %v240
  %v253 = vadd.f32 %v172, %v245
  %v254 = vadd.f32 %v175, %v248
  %s255 = scalar_lea.vmem %s1, 48
  %v256 = vld [vmem:[%s255] sm:$0xf]
  %v257 = vld [vmem:[%s255 + $0x4] sm:$0xf]
  %v258 = vld [vmem:[%s255 + $0x8] sm:$0xf]
  %v259 = vld [vmem:[%s255 + $0xc] sm:$0xf]
  %v264 = vunpack.c.l.b16 %v256
  %v265 = vunpack.c.l.b16 %v257
  %v266 = vunpack.c.l.b16 %v258
  %v267 = vunpack.c.l.b16 %v259
  %v268 = vpack.c.b16 %v265, %v264
  %v269 = vpack.c.b16 %v267, %v266
  %270 = vrot.lane.b32.xlu0 %v52, 125
  %v271 = vpop.permute.xlu0 %270
  %v274 = vsel %vm56, %v268, 0
  %v277 = vsel %vm56, %v269, 0
  %279 = vmatprep.subr.bf16.mxu0 0
  %280 = vmatpush1.bf16.msra.mxu0 0
  %281 = vmatprep.subr.bf16.mxu0 0
  %282 = vmatpush1.bf16.msra.mxu0 0
  %283 = vmatprep.subr.bf16.mxu0 0
  %284 = vmatpush1.bf16.msra.mxu0 0
  %285 = vmatprep.subr.bf16.mxu0 0
  %286 = vmatpush1.bf16.msra.mxu0 0
  %287 = vmatprep.subr.bf16.mxu0 0
  %288 = vmatpush1.bf16.msra.mxu0 0
  %289 = vmatprep.subr.bf16.mxu0 0
  %290 = vmatpush1.bf16.msra.mxu0 0
  %291 = vmatprep.subr.bf16.mxu0 0
  %292 = vmatpush1.bf16.msra.mxu0 0
  %293 = vmatprep.subr.bf16.mxu0 0
  %294 = vmatpush1.bf16.msra.mxu0 %v271
  %295 = vmatprep.subr.bf16.mxu0 0
  %296 = vmatpush2.bf16.msra.mxu0 0
  %297 = vmatprep.subr.bf16.mxu0 0
  %298 = vmatpush2.bf16.msra.mxu0 0
  %299 = vmatprep.subr.bf16.mxu0 0
  %300 = vmatpush2.bf16.msra.mxu0 0
  %301 = vmatprep.subr.bf16.mxu0 0
  %302 = vmatpush2.bf16.msra.mxu0 0
  %303 = vmatprep.subr.bf16.mxu0 0
  %304 = vmatpush2.bf16.msra.mxu0 0
  %305 = vmatprep.subr.bf16.mxu0 0
  %306 = vmatpush2.bf16.msra.mxu0 0
  %307 = vmatprep.subr.bf16.mxu0 0
  %308 = vmatpush2.bf16.msra.mxu0 0
  %309 = vmatprep.subr.bf16.mxu0 0
  %310 = vmatpush2.bf16.msra.mxu0 0
  %311 = vmatprep.mubr.bf16.mxu0 0
  %312 = vmatmul.mubr.bf16.gmra.mxu0 %v274
  %v313 = vpop.f32.mrf.mxu0
  %v314 = vadd.f32 0.0, %v313
  %v315 = vpop.f32.mrf.mxu0
  %v316 = vpop.f32.mrf.mxu0
  %v317 = vadd.f32 0.0, %v316
  %v318 = vpop.f32.mrf.mxu0
  %319 = vmatprep.mubr.bf16.mxu0 0
  %320 = vmatmul.mubr.bf16.gmra.mxu0 %v277
  %v321 = vpop.f32.mrf.mxu0
  %v322 = vadd.f32 0.0, %v321
  %v323 = vpop.f32.mrf.mxu0
  %v324 = vpop.f32.mrf.mxu0
  %v325 = vadd.f32 0.0, %v324
  %v326 = vpop.f32.mrf.mxu0
  %327 = vdwg.mxu0
  %v328 = vadd.f32 %v251, %v314
  %v329 = vadd.f32 %v252, %v317
  %v330 = vadd.f32 %v253, %v322
  %v331 = vadd.f32 %v254, %v325
  %s332 = scalar_lea.vmem %s1, 64
  %v333 = vld [vmem:[%s332] sm:$0xf]
  %v334 = vld [vmem:[%s332 + $0x4] sm:$0xf]
  %v335 = vld [vmem:[%s332 + $0x8] sm:$0xf]
  %v336 = vld [vmem:[%s332 + $0xc] sm:$0xf]
  %v341 = vunpack.c.l.b16 %v333
  %v342 = vunpack.c.l.b16 %v334
  %v343 = vunpack.c.l.b16 %v335
  %v344 = vunpack.c.l.b16 %v336
  %v345 = vpack.c.b16 %v342, %v341
  %v346 = vpack.c.b16 %v344, %v343
  %347 = vrot.lane.b32.xlu0 %v52, 124
  %v348 = vpop.permute.xlu0 %347
  %v351 = vsel %vm56, %v345, 0
  %v354 = vsel %vm56, %v346, 0
  %356 = vmatprep.subr.bf16.mxu0 0
  %357 = vmatpush1.bf16.msra.mxu0 0
  %358 = vmatprep.subr.bf16.mxu0 0
  %359 = vmatpush1.bf16.msra.mxu0 0
  %360 = vmatprep.subr.bf16.mxu0 0
  %361 = vmatpush1.bf16.msra.mxu0 0
  %362 = vmatprep.subr.bf16.mxu0 0
  %363 = vmatpush1.bf16.msra.mxu0 0
  %364 = vmatprep.subr.bf16.mxu0 0
  %365 = vmatpush1.bf16.msra.mxu0 0
  %366 = vmatprep.subr.bf16.mxu0 0
  %367 = vmatpush1.bf16.msra.mxu0 0
  %368 = vmatprep.subr.bf16.mxu0 0
  %369 = vmatpush1.bf16.msra.mxu0 0
  %370 = vmatprep.subr.bf16.mxu0 0
  %371 = vmatpush1.bf16.msra.mxu0 %v348
  %372 = vmatprep.subr.bf16.mxu0 0
  %373 = vmatpush2.bf16.msra.mxu0 0
  %374 = vmatprep.subr.bf16.mxu0 0
  %375 = vmatpush2.bf16.msra.mxu0 0
  %376 = vmatprep.subr.bf16.mxu0 0
  %377 = vmatpush2.bf16.msra.mxu0 0
  %378 = vmatprep.subr.bf16.mxu0 0
  %379 = vmatpush2.bf16.msra.mxu0 0
  %380 = vmatprep.subr.bf16.mxu0 0
  %381 = vmatpush2.bf16.msra.mxu0 0
  %382 = vmatprep.subr.bf16.mxu0 0
  %383 = vmatpush2.bf16.msra.mxu0 0
  %384 = vmatprep.subr.bf16.mxu0 0
  %385 = vmatpush2.bf16.msra.mxu0 0
  %386 = vmatprep.subr.bf16.mxu0 0
  %387 = vmatpush2.bf16.msra.mxu0 0
  %388 = vmatprep.mubr.bf16.mxu0 0
  %389 = vmatmul.mubr.bf16.gmra.mxu0 %v351
  %v390 = vpop.f32.mrf.mxu0
  %v391 = vadd.f32 0.0, %v390
  %v392 = vpop.f32.mrf.mxu0
  %v393 = vpop.f32.mrf.mxu0
  %v394 = vadd.f32 0.0, %v393
  %v395 = vpop.f32.mrf.mxu0
  %396 = vmatprep.mubr.bf16.mxu0 0
  %397 = vmatmul.mubr.bf16.gmra.mxu0 %v354
  %v398 = vpop.f32.mrf.mxu0
  %v399 = vadd.f32 0.0, %v398
  %v400 = vpop.f32.mrf.mxu0
  %v401 = vpop.f32.mrf.mxu0
  %v402 = vadd.f32 0.0, %v401
  %v403 = vpop.f32.mrf.mxu0
  %404 = vdwg.mxu0
  %v405 = vadd.f32 %v328, %v391
  %v406 = vadd.f32 %v329, %v394
  %v407 = vadd.f32 %v330, %v399
  %v408 = vadd.f32 %v331, %v402
  %s409 = scalar_lea.vmem %s1, 80
  %v410 = vld [vmem:[%s409] sm:$0xf]
  %v411 = vld [vmem:[%s409 + $0x4] sm:$0xf]
  %v412 = vld [vmem:[%s409 + $0x8] sm:$0xf]
  %v413 = vld [vmem:[%s409 + $0xc] sm:$0xf]
  %v418 = vunpack.c.l.b16 %v410
  %v419 = vunpack.c.l.b16 %v411
  %v420 = vunpack.c.l.b16 %v412
  %v421 = vunpack.c.l.b16 %v413
  %v422 = vpack.c.b16 %v419, %v418
  %v423 = vpack.c.b16 %v421, %v420
  %424 = vrot.lane.b32.xlu0 %v52, 123
  %v425 = vpop.permute.xlu0 %424
  %v428 = vsel %vm56, %v422, 0
  %v431 = vsel %vm56, %v423, 0
  %433 = vmatprep.subr.bf16.mxu0 0
  %434 = vmatpush1.bf16.msra.mxu0 0
  %435 = vmatprep.subr.bf16.mxu0 0
  %436 = vmatpush1.bf16.msra.mxu0 0
  %437 = vmatprep.subr.bf16.mxu0 0
  %438 = vmatpush1.bf16.msra.mxu0 0
  %439 = vmatprep.subr.bf16.mxu0 0
  %440 = vmatpush1.bf16.msra.mxu0 0
  %441 = vmatprep.subr.bf16.mxu0 0
  %442 = vmatpush1.bf16.msra.mxu0 0
  %443 = vmatprep.subr.bf16.mxu0 0
  %444 = vmatpush1.bf16.msra.mxu0 0
  %445 = vmatprep.subr.bf16.mxu0 0
  %446 = vmatpush1.bf16.msra.mxu0 0
  %447 = vmatprep.subr.bf16.mxu0 0
  %448 = vmatpush1.bf16.msra.mxu0 %v425
  %449 = vmatprep.subr.bf16.mxu0 0
  %450 = vmatpush2.bf16.msra.mxu0 0
  %451 = vmatprep.subr.bf16.mxu0 0
  %452 = vmatpush2.bf16.msra.mxu0 0
  %453 = vmatprep.subr.bf16.mxu0 0
  %454 = vmatpush2.bf16.msra.mxu0 0
  %455 = vmatprep.subr.bf16.mxu0 0
  %456 = vmatpush2.bf16.msra.mxu0 0
  %457 = vmatprep.subr.bf16.mxu0 0
  %458 = vmatpush2.bf16.msra.mxu0 0
  %459 = vmatprep.subr.bf16.mxu0 0
  %460 = vmatpush2.bf16.msra.mxu0 0
  %461 = vmatprep.subr.bf16.mxu0 0
  %462 = vmatpush2.bf16.msra.mxu0 0
  %463 = vmatprep.subr.bf16.mxu0 0
  %464 = vmatpush2.bf16.msra.mxu0 0
  %465 = vmatprep.mubr.bf16.mxu0 0
  %466 = vmatmul.mubr.bf16.gmra.mxu0 %v428
  %v467 = vpop.f32.mrf.mxu0
  %v468 = vadd.f32 0.0, %v467
  %v469 = vpop.f32.mrf.mxu0
  %v470 = vpop.f32.mrf.mxu0
  %v471 = vadd.f32 0.0, %v470
  %v472 = vpop.f32.mrf.mxu0
  %473 = vmatprep.mubr.bf16.mxu0 0
  %474 = vmatmul.mubr.bf16.gmra.mxu0 %v431
  %v475 = vpop.f32.mrf.mxu0
  %v476 = vadd.f32 0.0, %v475
  %v477 = vpop.f32.mrf.mxu0
  %v478 = vpop.f32.mrf.mxu0
  %v479 = vadd.f32 0.0, %v478
  %v480 = vpop.f32.mrf.mxu0
  %481 = vdwg.mxu0
  %v482 = vadd.f32 %v405, %v468
  %v483 = vadd.f32 %v406, %v471
  %v484 = vadd.f32 %v407, %v476
  %v485 = vadd.f32 %v408, %v479
  %s486 = scalar_lea.vmem %s1, 96
  %v487 = vld [vmem:[%s486] sm:$0xf]
  %v488 = vld [vmem:[%s486 + $0x4] sm:$0xf]
  %v489 = vld [vmem:[%s486 + $0x8] sm:$0xf]
  %v490 = vld [vmem:[%s486 + $0xc] sm:$0xf]
  %v495 = vunpack.c.l.b16 %v487
  %v496 = vunpack.c.l.b16 %v488
  %v497 = vunpack.c.l.b16 %v489
  %v498 = vunpack.c.l.b16 %v490
  %v499 = vpack.c.b16 %v496, %v495
  %v500 = vpack.c.b16 %v498, %v497
  %501 = vrot.lane.b32.xlu0 %v52, 122
  %v502 = vpop.permute.xlu0 %501
  %v505 = vsel %vm56, %v499, 0
  %v508 = vsel %vm56, %v500, 0
  %510 = vmatprep.subr.bf16.mxu0 0
  %511 = vmatpush1.bf16.msra.mxu0 0
  %512 = vmatprep.subr.bf16.mxu0 0
  %513 = vmatpush1.bf16.msra.mxu0 0
  %514 = vmatprep.subr.bf16.mxu0 0
  %515 = vmatpush1.bf16.msra.mxu0 0
  %516 = vmatprep.subr.bf16.mxu0 0
  %517 = vmatpush1.bf16.msra.mxu0 0
  %518 = vmatprep.subr.bf16.mxu0 0
  %519 = vmatpush1.bf16.msra.mxu0 0
  %520 = vmatprep.subr.bf16.mxu0 0
  %521 = vmatpush1.bf16.msra.mxu0 0
  %522 = vmatprep.subr.bf16.mxu0 0
  %523 = vmatpush1.bf16.msra.mxu0 0
  %524 = vmatprep.subr.bf16.mxu0 0
  %525 = vmatpush1.bf16.msra.mxu0 %v502
  %526 = vmatprep.subr.bf16.mxu0 0
  %527 = vmatpush2.bf16.msra.mxu0 0
  %528 = vmatprep.subr.bf16.mxu0 0
  %529 = vmatpush2.bf16.msra.mxu0 0
  %530 = vmatprep.subr.bf16.mxu0 0
  %531 = vmatpush2.bf16.msra.mxu0 0
  %532 = vmatprep.subr.bf16.mxu0 0
  %533 = vmatpush2.bf16.msra.mxu0 0
  %534 = vmatprep.subr.bf16.mxu0 0
  %535 = vmatpush2.bf16.msra.mxu0 0
  %536 = vmatprep.subr.bf16.mxu0 0
  %537 = vmatpush2.bf16.msra.mxu0 0
  %538 = vmatprep.subr.bf16.mxu0 0
  %539 = vmatpush2.bf16.msra.mxu0 0
  %540 = vmatprep.subr.bf16.mxu0 0
  %541 = vmatpush2.bf16.msra.mxu0 0
  %542 = vmatprep.mubr.bf16.mxu0 0
  %543 = vmatmul.mubr.bf16.gmra.mxu0 %v505
  %v544 = vpop.f32.mrf.mxu0
  %v545 = vadd.f32 0.0, %v544
  %v546 = vpop.f32.mrf.mxu0
  %v547 = vpop.f32.mrf.mxu0
  %v548 = vadd.f32 0.0, %v547
  %v549 = vpop.f32.mrf.mxu0
  %550 = vmatprep.mubr.bf16.mxu0 0
  %551 = vmatmul.mubr.bf16.gmra.mxu0 %v508
  %v552 = vpop.f32.mrf.mxu0
  %v553 = vadd.f32 0.0, %v552
  %v554 = vpop.f32.mrf.mxu0
  %v555 = vpop.f32.mrf.mxu0
  %v556 = vadd.f32 0.0, %v555
  %v557 = vpop.f32.mrf.mxu0
  %558 = vdwg.mxu0
  %v559 = vadd.f32 %v482, %v545
  %v560 = vadd.f32 %v483, %v548
  %v561 = vadd.f32 %v484, %v553
  %v562 = vadd.f32 %v485, %v556
  %s563 = scalar_lea.vmem %s1, 112
  %v564 = vld [vmem:[%s563] sm:$0xf]
  %v565 = vld [vmem:[%s563 + $0x4] sm:$0xf]
  %v566 = vld [vmem:[%s563 + $0x8] sm:$0xf]
  %v567 = vld [vmem:[%s563 + $0xc] sm:$0xf]
  %v572 = vunpack.c.l.b16 %v564
  %v573 = vunpack.c.l.b16 %v565
  %v574 = vunpack.c.l.b16 %v566
  %v575 = vunpack.c.l.b16 %v567
  %v576 = vpack.c.b16 %v573, %v572
  %v577 = vpack.c.b16 %v575, %v574
  %578 = vrot.lane.b32.xlu0 %v52, 121
  %v579 = vpop.permute.xlu0 %578
  %v582 = vsel %vm56, %v576, 0
  %v585 = vsel %vm56, %v577, 0
  %587 = vmatprep.subr.bf16.mxu0 0
  %588 = vmatpush1.bf16.msra.mxu0 0
  %589 = vmatprep.subr.bf16.mxu0 0
  %590 = vmatpush1.bf16.msra.mxu0 0
  %591 = vmatprep.subr.bf16.mxu0 0
  %592 = vmatpush1.bf16.msra.mxu0 0
  %593 = vmatprep.subr.bf16.mxu0 0
  %594 = vmatpush1.bf16.msra.mxu0 0
  %595 = vmatprep.subr.bf16.mxu0 0
  %596 = vmatpush1.bf16.msra.mxu0 0
  %597 = vmatprep.subr.bf16.mxu0 0
  %598 = vmatpush1.bf16.msra.mxu0 0
  %599 = vmatprep.subr.bf16.mxu0 0
  %600 = vmatpush1.bf16.msra.mxu0 0
  %601 = vmatprep.subr.bf16.mxu0 0
  %602 = vmatpush1.bf16.msra.mxu0 %v579
  %603 = vmatprep.subr.bf16.mxu0 0
  %604 = vmatpush2.bf16.msra.mxu0 0
  %605 = vmatprep.subr.bf16.mxu0 0
  %606 = vmatpush2.bf16.msra.mxu0 0
  %607 = vmatprep.subr.bf16.mxu0 0
  %608 = vmatpush2.bf16.msra.mxu0 0
  %609 = vmatprep.subr.bf16.mxu0 0
  %610 = vmatpush2.bf16.msra.mxu0 0
  %611 = vmatprep.subr.bf16.mxu0 0
  %612 = vmatpush2.bf16.msra.mxu0 0
  %613 = vmatprep.subr.bf16.mxu0 0
  %614 = vmatpush2.bf16.msra.mxu0 0
  %615 = vmatprep.subr.bf16.mxu0 0
  %616 = vmatpush2.bf16.msra.mxu0 0
  %617 = vmatprep.subr.bf16.mxu0 0
  %618 = vmatpush2.bf16.msra.mxu0 0
  %619 = vmatprep.mubr.bf16.mxu0 0
  %620 = vmatmul.mubr.bf16.gmra.mxu0 %v582
  %v621 = vpop.f32.mrf.mxu0
  %v622 = vadd.f32 0.0, %v621
  %v623 = vpop.f32.mrf.mxu0
  %v624 = vpop.f32.mrf.mxu0
  %v625 = vadd.f32 0.0, %v624
  %v626 = vpop.f32.mrf.mxu0
  %627 = vmatprep.mubr.bf16.mxu0 0
  %628 = vmatmul.mubr.bf16.gmra.mxu0 %v585
  %v629 = vpop.f32.mrf.mxu0
  %v630 = vadd.f32 0.0, %v629
  %v631 = vpop.f32.mrf.mxu0
  %v632 = vpop.f32.mrf.mxu0
  %v633 = vadd.f32 0.0, %v632
  %v634 = vpop.f32.mrf.mxu0
  %635 = vdwg.mxu0
  %v636 = vadd.f32 %v559, %v622
  %v637 = vadd.f32 %v560, %v625
  %v638 = vadd.f32 %v561, %v630
  %v639 = vadd.f32 %v562, %v633
  %vm640 = vcmask 138240
  %641 = vst.msk [vmem:[#allocation2] sm:$0xff] %vm640, %v636
  %642 = vst.msk [vmem:[#allocation2 + $0x8] sm:$0xff] %vm640, %v637
  %643 = vst.msk [vmem:[#allocation2 + $0x10] sm:$0xff] %vm640, %v638
  %644 = vst.msk [vmem:[#allocation2 + $0x18] sm:$0xff] %vm640, %v639
  %s645 = scalar_lea.vmem %s0, 8
  %v646 = vld [vmem:[%s645] sm:$0xf]
  %v647 = vld [vmem:[%s645 + $0x4] sm:$0xf]
  %v648 = vld [vmem:[%s1] sm:$0xf]
  %v649 = vld [vmem:[%s1 + $0x4] sm:$0xf]
  %v650 = vld [vmem:[%s1 + $0x8] sm:$0xf]
  %v651 = vld [vmem:[%s1 + $0xc] sm:$0xf]
  %v652 = vld [vmem:[%s33] sm:$0xf]
  %v653 = vld [vmem:[%s33 + $0x4] sm:$0xf]
  %v654 = vld [vmem:[%s33 + $0x8] sm:$0xf]
  %v655 = vld [vmem:[%s33 + $0xc] sm:$0xf]
  %v660 = vunpack.c.l.b16 %v652
  %v661 = vunpack.c.l.b16 %v653
  %v662 = vunpack.c.l.b16 %v654
  %v663 = vunpack.c.l.b16 %v655
  %v664 = vpack.c.b16 %v661, %v660
  %v665 = vpack.c.b16 %v663, %v662
  %v668 = vunpack.c.l.b16 %v646
  %v669 = vunpack.c.l.b16 %v647
  %v670 = vpack.c.b16 %v669, %v668
  %671 = vrot.lane.b32.xlu0 %v670, 127
  %v672 = vpop.permute.xlu0 %671
  %v675 = vsel %vm56, %v664, 0
  %v678 = vsel %vm56, %v665, 0
  %680 = vmatprep.subr.bf16.mxu0 0
  %681 = vmatpush1.bf16.msra.mxu0 0
  %682 = vmatprep.subr.bf16.mxu0 0
  %683 = vmatpush1.bf16.msra.mxu0 0
  %684 = vmatprep.subr.bf16.mxu0 0
  %685 = vmatpush1.bf16.msra.mxu0 0
  %686 = vmatprep.subr.bf16.mxu0 0
  %687 = vmatpush1.bf16.msra.mxu0 0
  %688 = vmatprep.subr.bf16.mxu0 0
  %689 = vmatpush1.bf16.msra.mxu0 0
  %690 = vmatprep.subr.bf16.mxu0 0
  %691 = vmatpush1.bf16.msra.mxu0 0
  %692 = vmatprep.subr.bf16.mxu0 0
  %693 = vmatpush1.bf16.msra.mxu0 0
  %694 = vmatprep.subr.bf16.mxu0 0
  %695 = vmatpush1.bf16.msra.mxu0 %v672
  %696 = vmatprep.subr.bf16.mxu0 0
  %697 = vmatpush2.bf16.msra.mxu0 0
  %698 = vmatprep.subr.bf16.mxu0 0
  %699 = vmatpush2.bf16.msra.mxu0 0
  %700 = vmatprep.subr.bf16.mxu0 0
  %701 = vmatpush2.bf16.msra.mxu0 0
  %702 = vmatprep.subr.bf16.mxu0 0
  %703 = vmatpush2.bf16.msra.mxu0 0
  %704 = vmatprep.subr.bf16.mxu0 0
  %705 = vmatpush2.bf16.msra.mxu0 0
  %706 = vmatprep.subr.bf16.mxu0 0
  %707 = vmatpush2.bf16.msra.mxu0 0
  %708 = vmatprep.subr.bf16.mxu0 0
  %709 = vmatpush2.bf16.msra.mxu0 0
  %710 = vmatprep.subr.bf16.mxu0 0
  %711 = vmatpush2.bf16.msra.mxu0 0
  %712 = vmatprep.mubr.bf16.mxu0 0
  %713 = vmatmul.mubr.bf16.gmra.mxu0 %v675
  %v714 = vpop.f32.mrf.mxu0
  %v715 = vadd.f32 0.0, %v714
  %v716 = vpop.f32.mrf.mxu0
  %v717 = vpop.f32.mrf.mxu0
  %v718 = vadd.f32 0.0, %v717
  %v719 = vpop.f32.mrf.mxu0
  %720 = vmatprep.mubr.bf16.mxu0 0
  %721 = vmatmul.mubr.bf16.gmra.mxu0 %v678
  %v722 = vpop.f32.mrf.mxu0
  %v723 = vadd.f32 0.0, %v722
  %v724 = vpop.f32.mrf.mxu0
  %v725 = vpop.f32.mrf.mxu0
  %v726 = vadd.f32 0.0, %v725
  %v727 = vpop.f32.mrf.mxu0
  %728 = vdwg.mxu0
  %v733 = vunpack.c.l.b16 %v648
  %v734 = vunpack.c.l.b16 %v649
  %v735 = vunpack.c.l.b16 %v650
  %v736 = vunpack.c.l.b16 %v651
  %v737 = vpack.c.b16 %v734, %v733
  %v738 = vpack.c.b16 %v736, %v735
  %v741 = vsel %vm56, %v737, 0
  %v744 = vsel %vm56, %v738, 0
  %746 = vmatprep.subr.bf16.mxu0 0
  %747 = vmatpush1.bf16.msra.mxu0 0
  %748 = vmatprep.subr.bf16.mxu0 0
  %749 = vmatpush1.bf16.msra.mxu0 0
  %750 = vmatprep.subr.bf16.mxu0 0
  %751 = vmatpush1.bf16.msra.mxu0 0
  %752 = vmatprep.subr.bf16.mxu0 0
  %753 = vmatpush1.bf16.msra.mxu0 0
  %754 = vmatprep.subr.bf16.mxu0 0
  %755 = vmatpush1.bf16.msra.mxu0 0
  %756 = vmatprep.subr.bf16.mxu0 0
  %757 = vmatpush1.bf16.msra.mxu0 0
  %758 = vmatprep.subr.bf16.mxu0 0
  %759 = vmatpush1.bf16.msra.mxu0 0
  %760 = vmatprep.subr.bf16.mxu0 0
  %761 = vmatpush1.bf16.msra.mxu0 %v670
  %762 = vmatprep.subr.bf16.mxu0 0
  %763 = vmatpush2.bf16.msra.mxu0 0
  %764 = vmatprep.subr.bf16.mxu0 0
  %765 = vmatpush2.bf16.msra.mxu0 0
  %766 = vmatprep.subr.bf16.mxu0 0
  %767 = vmatpush2.bf16.msra.mxu0 0
  %768 = vmatprep.subr.bf16.mxu0 0
  %769 = vmatpush2.bf16.msra.mxu0 0
  %770 = vmatprep.subr.bf16.mxu0 0
  %771 = vmatpush2.bf16.msra.mxu0 0
  %772 = vmatprep.subr.bf16.mxu0 0
  %773 = vmatpush2.bf16.msra.mxu0 0
  %774 = vmatprep.subr.bf16.mxu0 0
  %775 = vmatpush2.bf16.msra.mxu0 0
  %776 = vmatprep.subr.bf16.mxu0 0
  %777 = vmatpush2.bf16.msra.mxu0 0
  %778 = vmatprep.mubr.bf16.mxu0 0
  %779 = vmatmul.mubr.bf16.gmra.mxu0 %v741
  %v780 = vpop.f32.mrf.mxu0
  %v781 = vadd.f32 %v715, %v780
  %v782 = vpop.f32.mrf.mxu0
  %v783 = vpop.f32.mrf.mxu0
  %v784 = vadd.f32 %v718, %v783
  %v785 = vpop.f32.mrf.mxu0
  %786 = vmatprep.mubr.bf16.mxu0 0
  %787 = vmatmul.mubr.bf16.gmra.mxu0 %v744
  %v788 = vpop.f32.mrf.mxu0
  %v789 = vadd.f32 %v723, %v788
  %v790 = vpop.f32.mrf.mxu0
  %v791 = vpop.f32.mrf.mxu0
  %v792 = vadd.f32 %v726, %v791
  %v793 = vpop.f32.mrf.mxu0
  %794 = vdwg.mxu0
  %v795 = vld [vmem:[%s178] sm:$0xf]
  %v796 = vld [vmem:[%s178 + $0x4] sm:$0xf]
  %v797 = vld [vmem:[%s178 + $0x8] sm:$0xf]
  %v798 = vld [vmem:[%s178 + $0xc] sm:$0xf]
  %v803 = vunpack.c.l.b16 %v795
  %v804 = vunpack.c.l.b16 %v796
  %v805 = vunpack.c.l.b16 %v797
  %v806 = vunpack.c.l.b16 %v798
  %v807 = vpack.c.b16 %v804, %v803
  %v808 = vpack.c.b16 %v806, %v805
  %809 = vrot.lane.b32.xlu0 %v670, 126
  %v810 = vpop.permute.xlu0 %809
  %v813 = vsel %vm56, %v807, 0
  %v816 = vsel %vm56, %v808, 0
  %818 = vmatprep.subr.bf16.mxu0 0
  %819 = vmatpush1.bf16.msra.mxu0 0
  %820 = vmatprep.subr.bf16.mxu0 0
  %821 = vmatpush1.bf16.msra.mxu0 0
  %822 = vmatprep.subr.bf16.mxu0 0
  %823 = vmatpush1.bf16.msra.mxu0 0
  %824 = vmatprep.subr.bf16.mxu0 0
  %825 = vmatpush1.bf16.msra.mxu0 0
  %826 = vmatprep.subr.bf16.mxu0 0
  %827 = vmatpush1.bf16.msra.mxu0 0
  %828 = vmatprep.subr.bf16.mxu0 0
  %829 = vmatpush1.bf16.msra.mxu0 0
  %830 = vmatprep.subr.bf16.mxu0 0
  %831 = vmatpush1.bf16.msra.mxu0 0
  %832 = vmatprep.subr.bf16.mxu0 0
  %833 = vmatpush1.bf16.msra.mxu0 %v810
  %834 = vmatprep.subr.bf16.mxu0 0
  %835 = vmatpush2.bf16.msra.mxu0 0
  %836 = vmatprep.subr.bf16.mxu0 0
  %837 = vmatpush2.bf16.msra.mxu0 0
  %838 = vmatprep.subr.bf16.mxu0 0
  %839 = vmatpush2.bf16.msra.mxu0 0
  %840 = vmatprep.subr.bf16.mxu0 0
  %841 = vmatpush2.bf16.msra.mxu0 0
  %842 = vmatprep.subr.bf16.mxu0 0
  %843 = vmatpush2.bf16.msra.mxu0 0
  %844 = vmatprep.subr.bf16.mxu0 0
  %845 = vmatpush2.bf16.msra.mxu0 0
  %846 = vmatprep.subr.bf16.mxu0 0
  %847 = vmatpush2.bf16.msra.mxu0 0
  %848 = vmatprep.subr.bf16.mxu0 0
  %849 = vmatpush2.bf16.msra.mxu0 0
  %850 = vmatprep.mubr.bf16.mxu0 0
  %851 = vmatmul.mubr.bf16.gmra.mxu0 %v813
  %v852 = vpop.f32.mrf.mxu0
  %v853 = vadd.f32 0.0, %v852
  %v854 = vpop.f32.mrf.mxu0
  %v855 = vpop.f32.mrf.mxu0
  %v856 = vadd.f32 0.0, %v855
  %v857 = vpop.f32.mrf.mxu0
  %858 = vmatprep.mubr.bf16.mxu0 0
  %859 = vmatmul.mubr.bf16.gmra.mxu0 %v816
  %v860 = vpop.f32.mrf.mxu0
  %v861 = vadd.f32 0.0, %v860
  %v862 = vpop.f32.mrf.mxu0
  %v863 = vpop.f32.mrf.mxu0
  %v864 = vadd.f32 0.0, %v863
  %v865 = vpop.f32.mrf.mxu0
  %866 = vdwg.mxu0
  %v867 = vadd.f32 %v781, %v853
  %v868 = vadd.f32 %v784, %v856
  %v869 = vadd.f32 %v789, %v861
  %v870 = vadd.f32 %v792, %v864
  %v871 = vld [vmem:[%s255] sm:$0xf]
  %v872 = vld [vmem:[%s255 + $0x4] sm:$0xf]
  %v873 = vld [vmem:[%s255 + $0x8] sm:$0xf]
  %v874 = vld [vmem:[%s255 + $0xc] sm:$0xf]
  %v879 = vunpack.c.l.b16 %v871
  %v880 = vunpack.c.l.b16 %v872
  %v881 = vunpack.c.l.b16 %v873
  %v882 = vunpack.c.l.b16 %v874
  %v883 = vpack.c.b16 %v880, %v879
  %v884 = vpack.c.b16 %v882, %v881
  %885 = vrot.lane.b32.xlu0 %v670, 125
  %v886 = vpop.permute.xlu0 %885
  %v889 = vsel %vm56, %v883, 0
  %v892 = vsel %vm56, %v884, 0
  %894 = vmatprep.subr.bf16.mxu0 0
  %895 = vmatpush1.bf16.msra.mxu0 0
  %896 = vmatprep.subr.bf16.mxu0 0
  %897 = vmatpush1.bf16.msra.mxu0 0
  %898 = vmatprep.subr.bf16.mxu0 0
  %899 = vmatpush1.bf16.msra.mxu0 0
  %900 = vmatprep.subr.bf16.mxu0 0
  %901 = vmatpush1.bf16.msra.mxu0 0
  %902 = vmatprep.subr.bf16.mxu0 0
  %903 = vmatpush1.bf16.msra.mxu0 0
  %904 = vmatprep.subr.bf16.mxu0 0
  %905 = vmatpush1.bf16.msra.mxu0 0
  %906 = vmatprep.subr.bf16.mxu0 0
  %907 = vmatpush1.bf16.msra.mxu0 0
  %908 = vmatprep.subr.bf16.mxu0 0
  %909 = vmatpush1.bf16.msra.mxu0 %v886
  %910 = vmatprep.subr.bf16.mxu0 0
  %911 = vmatpush2.bf16.msra.mxu0 0
  %912 = vmatprep.subr.bf16.mxu0 0
  %913 = vmatpush2.bf16.msra.mxu0 0
  %914 = vmatprep.subr.bf16.mxu0 0
  %915 = vmatpush2.bf16.msra.mxu0 0
  %916 = vmatprep.subr.bf16.mxu0 0
  %917 = vmatpush2.bf16.msra.mxu0 0
  %918 = vmatprep.subr.bf16.mxu0 0
  %919 = vmatpush2.bf16.msra.mxu0 0
  %920 = vmatprep.subr.bf16.mxu0 0
  %921 = vmatpush2.bf16.msra.mxu0 0
  %922 = vmatprep.subr.bf16.mxu0 0
  %923 = vmatpush2.bf16.msra.mxu0 0
  %924 = vmatprep.subr.bf16.mxu0 0
  %925 = vmatpush2.bf16.msra.mxu0 0
  %926 = vmatprep.mubr.bf16.mxu0 0
  %927 = vmatmul.mubr.bf16.gmra.mxu0 %v889
  %v928 = vpop.f32.mrf.mxu0
  %v929 = vadd.f32 0.0, %v928
  %v930 = vpop.f32.mrf.mxu0
  %v931 = vpop.f32.mrf.mxu0
  %v932 = vadd.f32 0.0, %v931
  %v933 = vpop.f32.mrf.mxu0
  %934 = vmatprep.mubr.bf16.mxu0 0
  %935 = vmatmul.mubr.bf16.gmra.mxu0 %v892
  %v936 = vpop.f32.mrf.mxu0
  %v937 = vadd.f32 0.0, %v936
  %v938 = vpop.f32.mrf.mxu0
  %v939 = vpop.f32.mrf.mxu0
  %v940 = vadd.f32 0.0, %v939
  %v941 = vpop.f32.mrf.mxu0
  %942 = vdwg.mxu0
  %v943 = vadd.f32 %v867, %v929
  %v944 = vadd.f32 %v868, %v932
  %v945 = vadd.f32 %v869, %v937
  %v946 = vadd.f32 %v870, %v940
  %v947 = vld [vmem:[%s332] sm:$0xf]
  %v948 = vld [vmem:[%s332 + $0x4] sm:$0xf]
  %v949 = vld [vmem:[%s332 + $0x8] sm:$0xf]
  %v950 = vld [vmem:[%s332 + $0xc] sm:$0xf]
  %v955 = vunpack.c.l.b16 %v947
  %v956 = vunpack.c.l.b16 %v948
  %v957 = vunpack.c.l.b16 %v949
  %v958 = vunpack.c.l.b16 %v950
  %v959 = vpack.c.b16 %v956, %v955
  %v960 = vpack.c.b16 %v958, %v957
  %961 = vrot.lane.b32.xlu0 %v670, 124
  %v962 = vpop.permute.xlu0 %961
  %v965 = vsel %vm56, %v959, 0
  %v968 = vsel %vm56, %v960, 0
  %970 = vmatprep.subr.bf16.mxu0 0
  %971 = vmatpush1.bf16.msra.mxu0 0
  %972 = vmatprep.subr.bf16.mxu0 0
  %973 = vmatpush1.bf16.msra.mxu0 0
  %974 = vmatprep.subr.bf16.mxu0 0
  %975 = vmatpush1.bf16.msra.mxu0 0
  %976 = vmatprep.subr.bf16.mxu0 0
  %977 = vmatpush1.bf16.msra.mxu0 0
  %978 = vmatprep.subr.bf16.mxu0 0
  %979 = vmatpush1.bf16.msra.mxu0 0
  %980 = vmatprep.subr.bf16.mxu0 0
  %981 = vmatpush1.bf16.msra.mxu0 0
  %982 = vmatprep.subr.bf16.mxu0 0
  %983 = vmatpush1.bf16.msra.mxu0 0
  %984 = vmatprep.subr.bf16.mxu0 0
  %985 = vmatpush1.bf16.msra.mxu0 %v962
  %986 = vmatprep.subr.bf16.mxu0 0
  %987 = vmatpush2.bf16.msra.mxu0 0
  %988 = vmatprep.subr.bf16.mxu0 0
  %989 = vmatpush2.bf16.msra.mxu0 0
  %990 = vmatprep.subr.bf16.mxu0 0
  %991 = vmatpush2.bf16.msra.mxu0 0
  %992 = vmatprep.subr.bf16.mxu0 0
  %993 = vmatpush2.bf16.msra.mxu0 0
  %994 = vmatprep.subr.bf16.mxu0 0
  %995 = vmatpush2.bf16.msra.mxu0 0
  %996 = vmatprep.subr.bf16.mxu0 0
  %997 = vmatpush2.bf16.msra.mxu0 0
  %998 = vmatprep.subr.bf16.mxu0 0
  %999 = vmatpush2.bf16.msra.mxu0 0
  %1000 = vmatprep.subr.bf16.mxu0 0
  %1001 = vmatpush2.bf16.msra.mxu0 0
  %1002 = vmatprep.mubr.bf16.mxu0 0
  %1003 = vmatmul.mubr.bf16.gmra.mxu0 %v965
  %v1004 = vpop.f32.mrf.mxu0
  %v1005 = vadd.f32 0.0, %v1004
  %v1006 = vpop.f32.mrf.mxu0
  %v1007 = vpop.f32.mrf.mxu0
  %v1008 = vadd.f32 0.0, %v1007
  %v1009 = vpop.f32.mrf.mxu0
  %1010 = vmatprep.mubr.bf16.mxu0 0
  %1011 = vmatmul.mubr.bf16.gmra.mxu0 %v968
  %v1012 = vpop.f32.mrf.mxu0
  %v1013 = vadd.f32 0.0, %v1012
  %v1014 = vpop.f32.mrf.mxu0
  %v1015 = vpop.f32.mrf.mxu0
  %v1016 = vadd.f32 0.0, %v1015
  %v1017 = vpop.f32.mrf.mxu0
  %1018 = vdwg.mxu0
  %v1019 = vadd.f32 %v943, %v1005
  %v1020 = vadd.f32 %v944, %v1008
  %v1021 = vadd.f32 %v945, %v1013
  %v1022 = vadd.f32 %v946, %v1016
  %v1023 = vld [vmem:[%s409] sm:$0xf]
  %v1024 = vld [vmem:[%s409 + $0x4] sm:$0xf]
  %v1025 = vld [vmem:[%s409 + $0x8] sm:$0xf]
  %v1026 = vld [vmem:[%s409 + $0xc] sm:$0xf]
  %v1031 = vunpack.c.l.b16 %v1023
  %v1032 = vunpack.c.l.b16 %v1024
  %v1033 = vunpack.c.l.b16 %v1025
  %v1034 = vunpack.c.l.b16 %v1026
  %v1035 = vpack.c.b16 %v1032, %v1031
  %v1036 = vpack.c.b16 %v1034, %v1033
  %1037 = vrot.lane.b32.xlu0 %v670, 123
  %v1038 = vpop.permute.xlu0 %1037
  %v1041 = vsel %vm56, %v1035, 0
  %v1044 = vsel %vm56, %v1036, 0
  %1046 = vmatprep.subr.bf16.mxu0 0
  %1047 = vmatpush1.bf16.msra.mxu0 0
  %1048 = vmatprep.subr.bf16.mxu0 0
  %1049 = vmatpush1.bf16.msra.mxu0 0
  %1050 = vmatprep.subr.bf16.mxu0 0
  %1051 = vmatpush1.bf16.msra.mxu0 0
  %1052 = vmatprep.subr.bf16.mxu0 0
  %1053 = vmatpush1.bf16.msra.mxu0 0
  %1054 = vmatprep.subr.bf16.mxu0 0
  %1055 = vmatpush1.bf16.msra.mxu0 0
  %1056 = vmatprep.subr.bf16.mxu0 0
  %1057 = vmatpush1.bf16.msra.mxu0 0
  %1058 = vmatprep.subr.bf16.mxu0 0
  %1059 = vmatpush1.bf16.msra.mxu0 0
  %1060 = vmatprep.subr.bf16.mxu0 0
  %1061 = vmatpush1.bf16.msra.mxu0 %v1038
  %1062 = vmatprep.subr.bf16.mxu0 0
  %1063 = vmatpush2.bf16.msra.mxu0 0
  %1064 = vmatprep.subr.bf16.mxu0 0
  %1065 = vmatpush2.bf16.msra.mxu0 0
  %1066 = vmatprep.subr.bf16.mxu0 0
  %1067 = vmatpush2.bf16.msra.mxu0 0
  %1068 = vmatprep.subr.bf16.mxu0 0
  %1069 = vmatpush2.bf16.msra.mxu0 0
  %1070 = vmatprep.subr.bf16.mxu0 0
  %1071 = vmatpush2.bf16.msra.mxu0 0
  %1072 = vmatprep.subr.bf16.mxu0 0
  %1073 = vmatpush2.bf16.msra.mxu0 0
  %1074 = vmatprep.subr.bf16.mxu0 0
  %1075 = vmatpush2.bf16.msra.mxu0 0
  %1076 = vmatprep.subr.bf16.mxu0 0
  %1077 = vmatpush2.bf16.msra.mxu0 0
  %1078 = vmatprep.mubr.bf16.mxu0 0
  %1079 = vmatmul.mubr.bf16.gmra.mxu0 %v1041
  %v1080 = vpop.f32.mrf.mxu0
  %v1081 = vadd.f32 0.0, %v1080
  %v1082 = vpop.f32.mrf.mxu0
  %v1083 = vpop.f32.mrf.mxu0
  %v1084 = vadd.f32 0.0, %v1083
  %v1085 = vpop.f32.mrf.mxu0
  %1086 = vmatprep.mubr.bf16.mxu0 0
  %1087 = vmatmul.mubr.bf16.gmra.mxu0 %v1044
  %v1088 = vpop.f32.mrf.mxu0
  %v1089 = vadd.f32 0.0, %v1088
  %v1090 = vpop.f32.mrf.mxu0
  %v1091 = vpop.f32.mrf.mxu0
  %v1092 = vadd.f32 0.0, %v1091
  %v1093 = vpop.f32.mrf.mxu0
  %1094 = vdwg.mxu0
  %v1095 = vadd.f32 %v1019, %v1081
  %v1096 = vadd.f32 %v1020, %v1084
  %v1097 = vadd.f32 %v1021, %v1089
  %v1098 = vadd.f32 %v1022, %v1092
  %v1099 = vld [vmem:[%s486] sm:$0xf]
  %v1100 = vld [vmem:[%s486 + $0x4] sm:$0xf]
  %v1101 = vld [vmem:[%s486 + $0x8] sm:$0xf]
  %v1102 = vld [vmem:[%s486 + $0xc] sm:$0xf]
  %v1107 = vunpack.c.l.b16 %v1099
  %v1108 = vunpack.c.l.b16 %v1100
  %v1109 = vunpack.c.l.b16 %v1101
  %v1110 = vunpack.c.l.b16 %v1102
  %v1111 = vpack.c.b16 %v1108, %v1107
  %v1112 = vpack.c.b16 %v1110, %v1109
  %1113 = vrot.lane.b32.xlu0 %v670, 122
  %v1114 = vpop.permute.xlu0 %1113
  %v1117 = vsel %vm56, %v1111, 0
  %v1120 = vsel %vm56, %v1112, 0
  %1122 = vmatprep.subr.bf16.mxu0 0
  %1123 = vmatpush1.bf16.msra.mxu0 0
  %1124 = vmatprep.subr.bf16.mxu0 0
  %1125 = vmatpush1.bf16.msra.mxu0 0
  %1126 = vmatprep.subr.bf16.mxu0 0
  %1127 = vmatpush1.bf16.msra.mxu0 0
  %1128 = vmatprep.subr.bf16.mxu0 0
  %1129 = vmatpush1.bf16.msra.mxu0 0
  %1130 = vmatprep.subr.bf16.mxu0 0
  %1131 = vmatpush1.bf16.msra.mxu0 0
  %1132 = vmatprep.subr.bf16.mxu0 0
  %1133 = vmatpush1.bf16.msra.mxu0 0
  %1134 = vmatprep.subr.bf16.mxu0 0
  %1135 = vmatpush1.bf16.msra.mxu0 0
  %1136 = vmatprep.subr.bf16.mxu0 0
  %1137 = vmatpush1.bf16.msra.mxu0 %v1114
  %1138 = vmatprep.subr.bf16.mxu0 0
  %1139 = vmatpush2.bf16.msra.mxu0 0
  %1140 = vmatprep.subr.bf16.mxu0 0
  %1141 = vmatpush2.bf16.msra.mxu0 0
  %1142 = vmatprep.subr.bf16.mxu0 0
  %1143 = vmatpush2.bf16.msra.mxu0 0
  %1144 = vmatprep.subr.bf16.mxu0 0
  %1145 = vmatpush2.bf16.msra.mxu0 0
  %1146 = vmatprep.subr.bf16.mxu0 0
  %1147 = vmatpush2.bf16.msra.mxu0 0
  %1148 = vmatprep.subr.bf16.mxu0 0
  %1149 = vmatpush2.bf16.msra.mxu0 0
  %1150 = vmatprep.subr.bf16.mxu0 0
  %1151 = vmatpush2.bf16.msra.mxu0 0
  %1152 = vmatprep.subr.bf16.mxu0 0
  %1153 = vmatpush2.bf16.msra.mxu0 0
  %1154 = vmatprep.mubr.bf16.mxu0 0
  %1155 = vmatmul.mubr.bf16.gmra.mxu0 %v1117
  %v1156 = vpop.f32.mrf.mxu0
  %v1157 = vadd.f32 0.0, %v1156
  %v1158 = vpop.f32.mrf.mxu0
  %v1159 = vpop.f32.mrf.mxu0
  %v1160 = vadd.f32 0.0, %v1159
  %v1161 = vpop.f32.mrf.mxu0
  %1162 = vmatprep.mubr.bf16.mxu0 0
  %1163 = vmatmul.mubr.bf16.gmra.mxu0 %v1120
  %v1164 = vpop.f32.mrf.mxu0
  %v1165 = vadd.f32 0.0, %v1164
  %v1166 = vpop.f32.mrf.mxu0
  %v1167 = vpop.f32.mrf.mxu0
  %v1168 = vadd.f32 0.0, %v1167
  %v1169 = vpop.f32.mrf.mxu0
  %1170 = vdwg.mxu0
  %v1171 = vadd.f32 %v1095, %v1157
  %v1172 = vadd.f32 %v1096, %v1160
  %v1173 = vadd.f32 %v1097, %v1165
  %v1174 = vadd.f32 %v1098, %v1168
  %v1175 = vld [vmem:[%s563] sm:$0xf]
  %v1176 = vld [vmem:[%s563 + $0x4] sm:$0xf]
  %v1177 = vld [vmem:[%s563 + $0x8] sm:$0xf]
  %v1178 = vld [vmem:[%s563 + $0xc] sm:$0xf]
  %v1183 = vunpack.c.l.b16 %v1175
  %v1184 = vunpack.c.l.b16 %v1176
  %v1185 = vunpack.c.l.b16 %v1177
  %v1186 = vunpack.c.l.b16 %v1178
  %v1187 = vpack.c.b16 %v1184, %v1183
  %v1188 = vpack.c.b16 %v1186, %v1185
  %1189 = vrot.lane.b32.xlu0 %v670, 121
  %v1190 = vpop.permute.xlu0 %1189
  %v1193 = vsel %vm56, %v1187, 0
  %v1196 = vsel %vm56, %v1188, 0
  %1198 = vmatprep.subr.bf16.mxu0 0
  %1199 = vmatpush1.bf16.msra.mxu0 0
  %1200 = vmatprep.subr.bf16.mxu0 0
  %1201 = vmatpush1.bf16.msra.mxu0 0
  %1202 = vmatprep.subr.bf16.mxu0 0
  %1203 = vmatpush1.bf16.msra.mxu0 0
  %1204 = vmatprep.subr.bf16.mxu0 0
  %1205 = vmatpush1.bf16.msra.mxu0 0
  %1206 = vmatprep.subr.bf16.mxu0 0
  %1207 = vmatpush1.bf16.msra.mxu0 0
  %1208 = vmatprep.subr.bf16.mxu0 0
  %1209 = vmatpush1.bf16.msra.mxu0 0
  %1210 = vmatprep.subr.bf16.mxu0 0
  %1211 = vmatpush1.bf16.msra.mxu0 0
  %1212 = vmatprep.subr.bf16.mxu0 0
  %1213 = vmatpush1.bf16.msra.mxu0 %v1190
  %1214 = vmatprep.subr.bf16.mxu0 0
  %1215 = vmatpush2.bf16.msra.mxu0 0
  %1216 = vmatprep.subr.bf16.mxu0 0
  %1217 = vmatpush2.bf16.msra.mxu0 0
  %1218 = vmatprep.subr.bf16.mxu0 0
  %1219 = vmatpush2.bf16.msra.mxu0 0
  %1220 = vmatprep.subr.bf16.mxu0 0
  %1221 = vmatpush2.bf16.msra.mxu0 0
  %1222 = vmatprep.subr.bf16.mxu0 0
  %1223 = vmatpush2.bf16.msra.mxu0 0
  %1224 = vmatprep.subr.bf16.mxu0 0
  %1225 = vmatpush2.bf16.msra.mxu0 0
  %1226 = vmatprep.subr.bf16.mxu0 0
  %1227 = vmatpush2.bf16.msra.mxu0 0
  %1228 = vmatprep.subr.bf16.mxu0 0
  %1229 = vmatpush2.bf16.msra.mxu0 0
  %1230 = vmatprep.mubr.bf16.mxu0 0
  %1231 = vmatmul.mubr.bf16.gmra.mxu0 %v1193
  %v1232 = vpop.f32.mrf.mxu0
  %v1233 = vadd.f32 0.0, %v1232
  %v1234 = vpop.f32.mrf.mxu0
  %v1235 = vpop.f32.mrf.mxu0
  %v1236 = vadd.f32 0.0, %v1235
  %v1237 = vpop.f32.mrf.mxu0
  %1238 = vmatprep.mubr.bf16.mxu0 0
  %1239 = vmatmul.mubr.bf16.gmra.mxu0 %v1196
  %v1240 = vpop.f32.mrf.mxu0
  %v1241 = vadd.f32 0.0, %v1240
  %v1242 = vpop.f32.mrf.mxu0
  %v1243 = vpop.f32.mrf.mxu0
  %v1244 = vadd.f32 0.0, %v1243
  %v1245 = vpop.f32.mrf.mxu0
  %1246 = vdwg.mxu0
  %v1247 = vadd.f32 %v1171, %v1233
  %v1248 = vadd.f32 %v1172, %v1236
  %v1249 = vadd.f32 %v1173, %v1241
  %v1250 = vadd.f32 %v1174, %v1244
  %s1251 = scalar_lea.vmem [#allocation2], 32
  %1252 = vst.msk [vmem:[%s1251] sm:$0xff] %vm640, %v1247
  %1253 = vst.msk [vmem:[%s1251 + $0x8] sm:$0xff] %vm640, %v1248
  %1254 = vst.msk [vmem:[%s1251 + $0x10] sm:$0xff] %vm640, %v1249
  %1255 = vst.msk [vmem:[%s1251 + $0x18] sm:$0xff] %vm640, %v1250
  %v1256 = vld [vmem:[#allocation2] sm:$0xff]
  %v1257 = vld [vmem:[#allocation2 + $0x8] sm:$0xff]
  %v1258 = vld [vmem:[#allocation2 + $0x10] sm:$0xff]
  %v1259 = vld [vmem:[#allocation2 + $0x18] sm:$0xff]
  %v1260 = vld [vmem:[#allocation2 + $0x20] sm:$0xff]
  %v1261 = vld [vmem:[#allocation2 + $0x28] sm:$0xff]
  %v1262 = vld [vmem:[#allocation2 + $0x30] sm:$0xff]
  %v1263 = vld [vmem:[#allocation2 + $0x38] sm:$0xff]
  %v1264 = vsel %vm640, %v1256, 0.0
  %1265 = vadd.xlane.f32.xlu0 %v1264
  %v1266 = vpop.xlane.xlu0 %1265
  %v1267 = vsel %vm640, %v1257, 0.0
  %1268 = vadd.xlane.f32.xlu0 %v1267
  %v1269 = vpop.xlane.xlu0 %1268
  %v1270 = vsel %vm640, %v1258, 0.0
  %1271 = vadd.xlane.f32.xlu0 %v1270
  %v1272 = vpop.xlane.xlu0 %1271
  %v1273 = vsel %vm640, %v1259, 0.0
  %1274 = vadd.xlane.f32.xlu0 %v1273
  %v1275 = vpop.xlane.xlu0 %1274
  %v1276 = vsel %vm640, %v1260, 0.0
  %1277 = vadd.xlane.f32.xlu0 %v1276
  %v1278 = vpop.xlane.xlu0 %1277
  %v1279 = vsel %vm640, %v1261, 0.0
  %1280 = vadd.xlane.f32.xlu0 %v1279
  %v1281 = vpop.xlane.xlu0 %1280
  %v1282 = vsel %vm640, %v1262, 0.0
  %1283 = vadd.xlane.f32.xlu0 %v1282
  %v1284 = vpop.xlane.xlu0 %1283
  %v1285 = vsel %vm640, %v1263, 0.0
  %1286 = vadd.xlane.f32.xlu0 %v1285
  %v1287 = vpop.xlane.xlu0 %1286
  %v1288 = vadd.f32 %v1266, %v1278
  %v1289 = vadd.f32 %v1269, %v1281
  %v1290 = vadd.f32 %v1272, %v1284
  %v1291 = vadd.f32 %v1275, %v1287
  %v1292 = vmul.f32 %v1288, 0.029411765
  %v1293 = vmul.f32 %v1289, 0.029411765
  %v1294 = vmul.f32 %v1290, 0.029411765
  %v1295 = vmul.f32 %v1291, 0.029411765
  %v1296 = vsub.f32 %v1256, %v1292
  %v1297 = vsub.f32 %v1257, %v1293
  %v1298 = vsub.f32 %v1258, %v1294
  %v1299 = vsub.f32 %v1259, %v1295
  %v1300 = vsub.f32 %v1260, %v1292
  %v1301 = vsub.f32 %v1261, %v1293
  %v1302 = vsub.f32 %v1262, %v1294
  %v1303 = vsub.f32 %v1263, %v1295
  %v1304 = vmul.f32 %v1296, %v1296
  %v1305 = vmul.f32 %v1297, %v1297
  %v1306 = vmul.f32 %v1298, %v1298
  %v1307 = vmul.f32 %v1299, %v1299
  %v1308 = vmul.f32 %v1300, %v1300
  %v1309 = vmul.f32 %v1301, %v1301
  %v1310 = vmul.f32 %v1302, %v1302
  %v1311 = vmul.f32 %v1303, %v1303
  %v1312 = vsel %vm640, %v1304, 0.0
  %1313 = vadd.xlane.f32.xlu0 %v1312
  %v1314 = vpop.xlane.xlu0 %1313
  %v1315 = vsel %vm640, %v1305, 0.0
  %1316 = vadd.xlane.f32.xlu0 %v1315
  %v1317 = vpop.xlane.xlu0 %1316
  %v1318 = vsel %vm640, %v1306, 0.0
  %1319 = vadd.xlane.f32.xlu0 %v1318
  %v1320 = vpop.xlane.xlu0 %1319
  %v1321 = vsel %vm640, %v1307, 0.0
  %1322 = vadd.xlane.f32.xlu0 %v1321
  %v1323 = vpop.xlane.xlu0 %1322
  %v1324 = vsel %vm640, %v1308, 0.0
  %1325 = vadd.xlane.f32.xlu0 %v1324
  %v1326 = vpop.xlane.xlu0 %1325
  %v1327 = vsel %vm640, %v1309, 0.0
  %1328 = vadd.xlane.f32.xlu0 %v1327
  %v1329 = vpop.xlane.xlu0 %1328
  %v1330 = vsel %vm640, %v1310, 0.0
  %1331 = vadd.xlane.f32.xlu0 %v1330
  %v1332 = vpop.xlane.xlu0 %1331
  %v1333 = vsel %vm640, %v1311, 0.0
  %1334 = vadd.xlane.f32.xlu0 %v1333
  %v1335 = vpop.xlane.xlu0 %1334
  %v1336 = vadd.f32 %v1314, %v1326
  %v1337 = vadd.f32 %v1317, %v1329
  %v1338 = vadd.f32 %v1320, %v1332
  %v1339 = vadd.f32 %v1323, %v1335
  %v1340 = vmul.f32 %v1336, 0.029411765
  %v1341 = vmul.f32 %v1337, 0.029411765
  %v1342 = vmul.f32 %v1338, 0.029411765
  %v1343 = vmul.f32 %v1339, 0.029411765
  %v1344 = vld [vmem:[%s2] sm:$0xff]
  %v1345 = vld [vmem:[%s2 + $0x8] sm:$0xff]
  %v1346 = vld [vmem:[%s2 + $0x10] sm:$0xff]
  %v1347 = vld [vmem:[%s2 + $0x18] sm:$0xff]
  %v1348 = vadd.f32 %v1340, 1e-05
  %v1349 = vadd.f32 %v1341, 1e-05
  %v1350 = vadd.f32 %v1342, 1e-05
  %v1351 = vadd.f32 %v1343, 1e-05
  %v1352 = vrsqrt.pop %v1348
  %v1353 = vrsqrt.pop %v1349
  %v1354 = vrsqrt.pop %v1350
  %v1355 = vrsqrt.pop %v1351
  %v1356 = vmul.f32 %v1344, %v1352
  %v1357 = vmul.f32 %v1345, %v1353
  %v1358 = vmul.f32 %v1346, %v1354
  %v1359 = vmul.f32 %v1347, %v1355
  %v1360 = vld [vmem:[%s3] sm:$0xff]
  %v1361 = vld [vmem:[%s3 + $0x8] sm:$0xff]
  %v1362 = vld [vmem:[%s3 + $0x10] sm:$0xff]
  %v1363 = vld [vmem:[%s3 + $0x18] sm:$0xff]
  %v1364 = vmul.f32 %v1292, %v1356
  %v1365 = vmul.f32 %v1293, %v1357
  %v1366 = vmul.f32 %v1294, %v1358
  %v1367 = vmul.f32 %v1295, %v1359
  %v1368 = vsub.f32 %v1360, %v1364
  %v1369 = vsub.f32 %v1361, %v1365
  %v1370 = vsub.f32 %v1362, %v1366
  %v1371 = vsub.f32 %v1363, %v1367
  %1373 = vset.pattern.permute.xlu0 0
  %1374 = vperm.xlu0 %1373, %v1356
  %v1375 = vpop.permute.xlu0 %1374
  %1378 = vset.pattern.permute.xlu0 0
  %1379 = vperm.xlu0 %1378, %v1357
  %v1380 = vpop.permute.xlu0 %1379
  %1383 = vset.pattern.permute.xlu0 0
  %1384 = vperm.xlu0 %1383, %v1358
  %v1385 = vpop.permute.xlu0 %1384
  %1388 = vset.pattern.permute.xlu0 0
  %1389 = vperm.xlu0 %1388, %v1359
  %v1390 = vpop.permute.xlu0 %1389
  %v1392 = vmul.f32 %v1256, %v1375
  %v1393 = vmul.f32 %v1257, %v1380
  %v1394 = vmul.f32 %v1258, %v1385
  %v1395 = vmul.f32 %v1259, %v1390
  %v1396 = vmul.f32 %v1260, %v1375
  %v1397 = vmul.f32 %v1261, %v1380
  %v1398 = vmul.f32 %v1262, %v1385
  %v1399 = vmul.f32 %v1263, %v1390
  %1401 = vset.pattern.permute.xlu0 0
  %1402 = vperm.xlu0 %1401, %v1368
  %v1403 = vpop.permute.xlu0 %1402
  %1406 = vset.pattern.permute.xlu0 0
  %1407 = vperm.xlu0 %1406, %v1369
  %v1408 = vpop.permute.xlu0 %1407
  %1411 = vset.pattern.permute.xlu0 0
  %1412 = vperm.xlu0 %1411, %v1370
  %v1413 = vpop.permute.xlu0 %1412
  %1416 = vset.pattern.permute.xlu0 0
  %1417 = vperm.xlu0 %1416, %v1371
  %v1418 = vpop.permute.xlu0 %1417
  %v1420 = vadd.f32 %v1392, %v1403
  %v1421 = vadd.f32 %v1393, %v1408
  %v1422 = vadd.f32 %v1394, %v1413
  %v1423 = vadd.f32 %v1395, %v1418
  %v1424 = vadd.f32 %v1396, %v1403
  %v1425 = vadd.f32 %v1397, %v1408
  %v1426 = vadd.f32 %v1398, %v1413
  %v1427 = vadd.f32 %v1399, %v1418
  %v1428 = vmax.f32 %v1420, 0.0
  %v1429 = vmax.f32 %v1421, 0.0
  %v1430 = vmax.f32 %v1422, 0.0
  %v1431 = vmax.f32 %v1423, 0.0
  %v1432 = vmax.f32 %v1424, 0.0
  %v1433 = vmax.f32 %v1425, 0.0
  %v1434 = vmax.f32 %v1426, 0.0
  %v1435 = vmax.f32 %v1427, 0.0
  %vm1436 = vcmask 3072
  %1437 = vst.msk [vmem:[#allocation3] sm:$0xf] %vm1436, 0
  %1438 = vst.msk [vmem:[#allocation3 + $0x4] sm:$0xf] %vm1436, 0
  %1439 = vst.msk [vmem:[#allocation3 + $0x8] sm:$0xf] %vm1436, 0
  %1440 = vst.msk [vmem:[#allocation3 + $0xc] sm:$0xf] %vm1436, 0
  %1441 = vst.msk [vmem:[#allocation3 + $0x10] sm:$0xf] %vm1436, 0
  %1442 = vst.msk [vmem:[#allocation3 + $0x14] sm:$0xf] %vm1436, 0
  %1443 = vst.msk [vmem:[#allocation3 + $0x18] sm:$0xf] %vm1436, 0
  %1444 = vst.msk [vmem:[#allocation3 + $0x1c] sm:$0xf] %vm1436, 0
  %vm1445 = vcmask 150672
  %1446 = vst.msk [vmem:[#allocation3] sm:$0xf] %vm1445, 0
  %1447 = vst.msk [vmem:[#allocation3 + $0x4] sm:$0xf] %vm1445, 0
  %1448 = vst.msk [vmem:[#allocation3 + $0x8] sm:$0xf] %vm1445, 0
  %1449 = vst.msk [vmem:[#allocation3 + $0xc] sm:$0xf] %vm1445, 0
  %1450 = vst.msk [vmem:[#allocation3 + $0x10] sm:$0xf] %vm1445, 0
  %1451 = vst.msk [vmem:[#allocation3 + $0x14] sm:$0xf] %vm1445, 0
  %1452 = vst.msk [vmem:[#allocation3 + $0x18] sm:$0xf] %vm1445, 0
  %1453 = vst.msk [vmem:[#allocation3 + $0x1c] sm:$0xf] %vm1445, 0
  %v1454 = vpack.c.bf16 %v1429, %v1428
  %v1455 = vpack.c.bf16 %v1431, %v1430
  %v1456 = vpack.c.bf16 %v1433, %v1432
  %v1457 = vpack.c.bf16 %v1435, %v1434
  %v1462 = vunpack.c.l.b16 %v1454
  %v1463 = vunpack.c.h.b16 %v1454
  %v1464 = vunpack.c.l.b16 %v1455
  %v1465 = vunpack.c.h.b16 %v1455
  %v1466 = vunpack.c.l.b16 %v1456
  %v1467 = vunpack.c.h.b16 %v1456
  %v1468 = vunpack.c.l.b16 %v1457
  %v1469 = vunpack.c.h.b16 %v1457
  %v1470 = vpack.c.b16 %v1462, %v1462
  %v1471 = vpack.c.b16 %v1463, %v1463
  %v1472 = vpack.c.b16 %v1464, %v1464
  %v1473 = vpack.c.b16 %v1465, %v1465
  %v1474 = vpack.c.b16 %v1466, %v1466
  %v1475 = vpack.c.b16 %v1467, %v1467
  %v1476 = vpack.c.b16 %v1468, %v1468
  %v1477 = vpack.c.b16 %v1469, %v1469
  %1478 = vrot.lane.b32.xlu0 %v1470, 1
  %v1479 = vpop.permute.xlu0 %1478
  %1480 = vrot.lane.b32.xlu0 %v1471, 1
  %v1481 = vpop.permute.xlu0 %1480
  %1482 = vrot.lane.b32.xlu0 %v1472, 1
  %v1483 = vpop.permute.xlu0 %1482
  %1484 = vrot.lane.b32.xlu0 %v1473, 1
  %v1485 = vpop.permute.xlu0 %1484
  %1486 = vrot.lane.b32.xlu0 %v1474, 1
  %v1487 = vpop.permute.xlu0 %1486
  %1488 = vrot.lane.b32.xlu0 %v1475, 1
  %v1489 = vpop.permute.xlu0 %1488
  %1490 = vrot.lane.b32.xlu0 %v1476, 1
  %v1491 = vpop.permute.xlu0 %1490
  %1492 = vrot.lane.b32.xlu0 %v1477, 1
  %v1493 = vpop.permute.xlu0 %1492
  %vm1502 = vcmask 142344
  %1503 = vst.msk [vmem:[#allocation3] sm:$0xf] %vm1502, %v1479
  %1504 = vst.msk [vmem:[#allocation3 + $0x4] sm:$0xf] %vm1502, %v1481
  %1505 = vst.msk [vmem:[#allocation3 + $0x8] sm:$0xf] %vm1502, %v1483
  %1506 = vst.msk [vmem:[#allocation3 + $0xc] sm:$0xf] %vm1502, %v1485
  %1507 = vst.msk [vmem:[#allocation3 + $0x10] sm:$0xf] %vm1502, %v1487
  %1508 = vst.msk [vmem:[#allocation3 + $0x14] sm:$0xf] %vm1502, %v1489
  %1509 = vst.msk [vmem:[#allocation3 + $0x18] sm:$0xf] %vm1502, %v1491
  %1510 = vst.msk [vmem:[#allocation3 + $0x1c] sm:$0xf] %vm1502, %v1493
  %v1511 = vld [vmem:[#allocation3] sm:$0xf]
  %v1512 = vld [vmem:[#allocation3 + $0x4] sm:$0xf]
  %v1513 = vld [vmem:[#allocation3 + $0x8] sm:$0xf]
  %v1514 = vld [vmem:[#allocation3 + $0xc] sm:$0xf]
  %v1515 = vld [vmem:[%s4] sm:$0xf]
  %v1516 = vld [vmem:[%s4 + $0x4] sm:$0xf]
  %v1517 = vld [vmem:[%s4 + $0x8] sm:$0xf]
  %v1518 = vld [vmem:[%s4 + $0xc] sm:$0xf]
  %s1519 = scalar_lea.vmem %s4, 16
  %v1520 = vld [vmem:[%s1519] sm:$0xf]
  %v1521 = vld [vmem:[%s1519 + $0x4] sm:$0xf]
  %v1522 = vld [vmem:[%s1519 + $0x8] sm:$0xf]
  %v1523 = vld [vmem:[%s1519 + $0xc] sm:$0xf]
  %v1528 = vunpack.c.l.b16 %v1520
  %v1529 = vunpack.c.l.b16 %v1521
  %v1530 = vunpack.c.l.b16 %v1522
  %v1531 = vunpack.c.l.b16 %v1523
  %v1532 = vpack.c.b16 %v1529, %v1528
  %v1533 = vpack.c.b16 %v1531, %v1530
  %v1538 = vunpack.c.l.b16 %v1511
  %v1539 = vunpack.c.l.b16 %v1512
  %v1540 = vunpack.c.l.b16 %v1513
  %v1541 = vunpack.c.l.b16 %v1514
  %v1542 = vpack.c.b16 %v1539, %v1538
  %v1543 = vpack.c.b16 %v1541, %v1540
  %1544 = vrot.lane.b32.xlu0 %v1542, 127
  %v1545 = vpop.permute.xlu0 %1544
  %1546 = vrot.lane.b32.xlu0 %v1543, 127
  %v1547 = vpop.permute.xlu0 %1546
  %vm1550 = vcmask 261120
  %v1552 = vsel %vm1550, %v1532, 0
  %v1555 = vsel %vm1550, %v1533, 0
  %1557 = vmatprep.subr.bf16.mxu0 0
  %1558 = vmatpush1.bf16.msra.mxu0 0
  %1559 = vmatprep.subr.bf16.mxu0 0
  %1560 = vmatpush1.bf16.msra.mxu0 0
  %1561 = vmatprep.subr.bf16.mxu0 0
  %1562 = vmatpush1.bf16.msra.mxu0 0
  %1563 = vmatprep.subr.bf16.mxu0 0
  %1564 = vmatpush1.bf16.msra.mxu0 0
  %1565 = vmatprep.subr.bf16.mxu0 0
  %1566 = vmatpush1.bf16.msra.mxu0 0
  %1567 = vmatprep.subr.bf16.mxu0 0
  %1568 = vmatpush1.bf16.msra.mxu0 0
  %1569 = vmatprep.subr.bf16.mxu0 0
  %1570 = vmatpush1.bf16.msra.mxu0 %v1547
  %1571 = vmatprep.subr.bf16.mxu0 0
  %1572 = vmatpush1.bf16.msra.mxu0 %v1545
  %1573 = vmatprep.subr.bf16.mxu0 0
  %1574 = vmatpush2.bf16.msra.mxu0 0
  %1575 = vmatprep.subr.bf16.mxu0 0
  %1576 = vmatpush2.bf16.msra.mxu0 0
  %1577 = vmatprep.subr.bf16.mxu0 0
  %1578 = vmatpush2.bf16.msra.mxu0 0
  %1579 = vmatprep.subr.bf16.mxu0 0
  %1580 = vmatpush2.bf16.msra.mxu0 0
  %1581 = vmatprep.subr.bf16.mxu0 0
  %1582 = vmatpush2.bf16.msra.mxu0 0
  %1583 = vmatprep.subr.bf16.mxu0 0
  %1584 = vmatpush2.bf16.msra.mxu0 0
  %1585 = vmatprep.subr.bf16.mxu0 0
  %1586 = vmatpush2.bf16.msra.mxu0 0
  %1587 = vmatprep.subr.bf16.mxu0 0
  %1588 = vmatpush2.bf16.msra.mxu0 0
  %1589 = vmatprep.mubr.bf16.mxu0 0
  %1590 = vmatmul.mubr.bf16.gmra.mxu0 %v1552
  %v1591 = vpop.f32.mrf.mxu0
  %v1592 = vadd.f32 0.0, %v1591
  %v1593 = vpop.f32.mrf.mxu0
  %v1594 = vpop.f32.mrf.mxu0
  %v1595 = vadd.f32 0.0, %v1594
  %v1596 = vpop.f32.mrf.mxu0
  %1597 = vmatprep.mubr.bf16.mxu0 0
  %1598 = vmatmul.mubr.bf16.gmra.mxu0 %v1555
  %v1599 = vpop.f32.mrf.mxu0
  %v1600 = vadd.f32 0.0, %v1599
  %v1601 = vpop.f32.mrf.mxu0
  %v1602 = vpop.f32.mrf.mxu0
  %v1603 = vadd.f32 0.0, %v1602
  %v1604 = vpop.f32.mrf.mxu0
  %1605 = vdwg.mxu0
  %v1610 = vunpack.c.l.b16 %v1515
  %v1611 = vunpack.c.l.b16 %v1516
  %v1612 = vunpack.c.l.b16 %v1517
  %v1613 = vunpack.c.l.b16 %v1518
  %v1614 = vpack.c.b16 %v1611, %v1610
  %v1615 = vpack.c.b16 %v1613, %v1612
  %v1619 = vsel %vm1550, %v1614, 0
  %v1622 = vsel %vm1550, %v1615, 0
  %1624 = vmatprep.subr.bf16.mxu0 0
  %1625 = vmatpush1.bf16.msra.mxu0 0
  %1626 = vmatprep.subr.bf16.mxu0 0
  %1627 = vmatpush1.bf16.msra.mxu0 0
  %1628 = vmatprep.subr.bf16.mxu0 0
  %1629 = vmatpush1.bf16.msra.mxu0 0
  %1630 = vmatprep.subr.bf16.mxu0 0
  %1631 = vmatpush1.bf16.msra.mxu0 0
  %1632 = vmatprep.subr.bf16.mxu0 0
  %1633 = vmatpush1.bf16.msra.mxu0 0
  %1634 = vmatprep.subr.bf16.mxu0 0
  %1635 = vmatpush1.bf16.msra.mxu0 0
  %1636 = vmatprep.subr.bf16.mxu0 0
  %1637 = vmatpush1.bf16.msra.mxu0 %v1543
  %1638 = vmatprep.subr.bf16.mxu0 0
  %1639 = vmatpush1.bf16.msra.mxu0 %v1542
  %1640 = vmatprep.subr.bf16.mxu0 0
  %1641 = vmatpush2.bf16.msra.mxu0 0
  %1642 = vmatprep.subr.bf16.mxu0 0
  %1643 = vmatpush2.bf16.msra.mxu0 0
  %1644 = vmatprep.subr.bf16.mxu0 0
  %1645 = vmatpush2.bf16.msra.mxu0 0
  %1646 = vmatprep.subr.bf16.mxu0 0
  %1647 = vmatpush2.bf16.msra.mxu0 0
  %1648 = vmatprep.subr.bf16.mxu0 0
  %1649 = vmatpush2.bf16.msra.mxu0 0
  %1650 = vmatprep.subr.bf16.mxu0 0
  %1651 = vmatpush2.bf16.msra.mxu0 0
  %1652 = vmatprep.subr.bf16.mxu0 0
  %1653 = vmatpush2.bf16.msra.mxu0 0
  %1654 = vmatprep.subr.bf16.mxu0 0
  %1655 = vmatpush2.bf16.msra.mxu0 0
  %1656 = vmatprep.mubr.bf16.mxu0 0
  %1657 = vmatmul.mubr.bf16.gmra.mxu0 %v1619
  %v1658 = vpop.f32.mrf.mxu0
  %v1659 = vadd.f32 %v1592, %v1658
  %v1660 = vpop.f32.mrf.mxu0
  %v1661 = vpop.f32.mrf.mxu0
  %v1662 = vadd.f32 %v1595, %v1661
  %v1663 = vpop.f32.mrf.mxu0
  %1664 = vmatprep.mubr.bf16.mxu0 0
  %1665 = vmatmul.mubr.bf16.gmra.mxu0 %v1622
  %v1666 = vpop.f32.mrf.mxu0
  %v1667 = vadd.f32 %v1600, %v1666
  %v1668 = vpop.f32.mrf.mxu0
  %v1669 = vpop.f32.mrf.mxu0
  %v1670 = vadd.f32 %v1603, %v1669
  %v1671 = vpop.f32.mrf.mxu0
  %1672 = vdwg.mxu0
  %s1673 = scalar_lea.vmem %s4, 32
  %v1674 = vld [vmem:[%s1673] sm:$0xf]
  %v1675 = vld [vmem:[%s1673 + $0x4] sm:$0xf]
  %v1676 = vld [vmem:[%s1673 + $0x8] sm:$0xf]
  %v1677 = vld [vmem:[%s1673 + $0xc] sm:$0xf]
  %v1682 = vunpack.c.l.b16 %v1674
  %v1683 = vunpack.c.l.b16 %v1675
  %v1684 = vunpack.c.l.b16 %v1676
  %v1685 = vunpack.c.l.b16 %v1677
  %v1686 = vpack.c.b16 %v1683, %v1682
  %v1687 = vpack.c.b16 %v1685, %v1684
  %1688 = vrot.lane.b32.xlu0 %v1542, 126
  %v1689 = vpop.permute.xlu0 %1688
  %1690 = vrot.lane.b32.xlu0 %v1543, 126
  %v1691 = vpop.permute.xlu0 %1690
  %v1695 = vsel %vm1550, %v1686, 0
  %v1698 = vsel %vm1550, %v1687, 0
  %1700 = vmatprep.subr.bf16.mxu0 0
  %1701 = vmatpush1.bf16.msra.mxu0 0
  %1702 = vmatprep.subr.bf16.mxu0 0
  %1703 = vmatpush1.bf16.msra.mxu0 0
  %1704 = vmatprep.subr.bf16.mxu0 0
  %1705 = vmatpush1.bf16.msra.mxu0 0
  %1706 = vmatprep.subr.bf16.mxu0 0
  %1707 = vmatpush1.bf16.msra.mxu0 0
  %1708 = vmatprep.subr.bf16.mxu0 0
  %1709 = vmatpush1.bf16.msra.mxu0 0
  %1710 = vmatprep.subr.bf16.mxu0 0
  %1711 = vmatpush1.bf16.msra.mxu0 0
  %1712 = vmatprep.subr.bf16.mxu0 0
  %1713 = vmatpush1.bf16.msra.mxu0 %v1691
  %1714 = vmatprep.subr.bf16.mxu0 0
  %1715 = vmatpush1.bf16.msra.mxu0 %v1689
  %1716 = vmatprep.subr.bf16.mxu0 0
  %1717 = vmatpush2.bf16.msra.mxu0 0
  %1718 = vmatprep.subr.bf16.mxu0 0
  %1719 = vmatpush2.bf16.msra.mxu0 0
  %1720 = vmatprep.subr.bf16.mxu0 0
  %1721 = vmatpush2.bf16.msra.mxu0 0
  %1722 = vmatprep.subr.bf16.mxu0 0
  %1723 = vmatpush2.bf16.msra.mxu0 0
  %1724 = vmatprep.subr.bf16.mxu0 0
  %1725 = vmatpush2.bf16.msra.mxu0 0
  %1726 = vmatprep.subr.bf16.mxu0 0
  %1727 = vmatpush2.bf16.msra.mxu0 0
  %1728 = vmatprep.subr.bf16.mxu0 0
  %1729 = vmatpush2.bf16.msra.mxu0 0
  %1730 = vmatprep.subr.bf16.mxu0 0
  %1731 = vmatpush2.bf16.msra.mxu0 0
  %1732 = vmatprep.mubr.bf16.mxu0 0
  %1733 = vmatmul.mubr.bf16.gmra.mxu0 %v1695
  %v1734 = vpop.f32.mrf.mxu0
  %v1735 = vadd.f32 0.0, %v1734
  %v1736 = vpop.f32.mrf.mxu0
  %v1737 = vpop.f32.mrf.mxu0
  %v1738 = vadd.f32 0.0, %v1737
  %v1739 = vpop.f32.mrf.mxu0
  %1740 = vmatprep.mubr.bf16.mxu0 0
  %1741 = vmatmul.mubr.bf16.gmra.mxu0 %v1698
  %v1742 = vpop.f32.mrf.mxu0
  %v1743 = vadd.f32 0.0, %v1742
  %v1744 = vpop.f32.mrf.mxu0
  %v1745 = vpop.f32.mrf.mxu0
  %v1746 = vadd.f32 0.0, %v1745
  %v1747 = vpop.f32.mrf.mxu0
  %1748 = vdwg.mxu0
  %v1749 = vadd.f32 %v1659, %v1735
  %v1750 = vadd.f32 %v1662, %v1738
  %v1751 = vadd.f32 %v1667, %v1743
  %v1752 = vadd.f32 %v1670, %v1746
  %s1753 = scalar_lea.vmem %s4, 48
  %v1754 = vld [vmem:[%s1753] sm:$0xf]
  %v1755 = vld [vmem:[%s1753 + $0x4] sm:$0xf]
  %v1756 = vld [vmem:[%s1753 + $0x8] sm:$0xf]
  %v1757 = vld [vmem:[%s1753 + $0xc] sm:$0xf]
  %v1762 = vunpack.c.l.b16 %v1754
  %v1763 = vunpack.c.l.b16 %v1755
  %v1764 = vunpack.c.l.b16 %v1756
  %v1765 = vunpack.c.l.b16 %v1757
  %v1766 = vpack.c.b16 %v1763, %v1762
  %v1767 = vpack.c.b16 %v1765, %v1764
  %1768 = vrot.lane.b32.xlu0 %v1542, 125
  %v1769 = vpop.permute.xlu0 %1768
  %1770 = vrot.lane.b32.xlu0 %v1543, 125
  %v1771 = vpop.permute.xlu0 %1770
  %v1775 = vsel %vm1550, %v1766, 0
  %v1778 = vsel %vm1550, %v1767, 0
  %1780 = vmatprep.subr.bf16.mxu0 0
  %1781 = vmatpush1.bf16.msra.mxu0 0
  %1782 = vmatprep.subr.bf16.mxu0 0
  %1783 = vmatpush1.bf16.msra.mxu0 0
  %1784 = vmatprep.subr.bf16.mxu0 0
  %1785 = vmatpush1.bf16.msra.mxu0 0
  %1786 = vmatprep.subr.bf16.mxu0 0
  %1787 = vmatpush1.bf16.msra.mxu0 0
  %1788 = vmatprep.subr.bf16.mxu0 0
  %1789 = vmatpush1.bf16.msra.mxu0 0
  %1790 = vmatprep.subr.bf16.mxu0 0
  %1791 = vmatpush1.bf16.msra.mxu0 0
  %1792 = vmatprep.subr.bf16.mxu0 0
  %1793 = vmatpush1.bf16.msra.mxu0 %v1771
  %1794 = vmatprep.subr.bf16.mxu0 0
  %1795 = vmatpush1.bf16.msra.mxu0 %v1769
  %1796 = vmatprep.subr.bf16.mxu0 0
  %1797 = vmatpush2.bf16.msra.mxu0 0
  %1798 = vmatprep.subr.bf16.mxu0 0
  %1799 = vmatpush2.bf16.msra.mxu0 0
  %1800 = vmatprep.subr.bf16.mxu0 0
  %1801 = vmatpush2.bf16.msra.mxu0 0
  %1802 = vmatprep.subr.bf16.mxu0 0
  %1803 = vmatpush2.bf16.msra.mxu0 0
  %1804 = vmatprep.subr.bf16.mxu0 0
  %1805 = vmatpush2.bf16.msra.mxu0 0
  %1806 = vmatprep.subr.bf16.mxu0 0
  %1807 = vmatpush2.bf16.msra.mxu0 0
  %1808 = vmatprep.subr.bf16.mxu0 0
  %1809 = vmatpush2.bf16.msra.mxu0 0
  %1810 = vmatprep.subr.bf16.mxu0 0
  %1811 = vmatpush2.bf16.msra.mxu0 0
  %1812 = vmatprep.mubr.bf16.mxu0 0
  %1813 = vmatmul.mubr.bf16.gmra.mxu0 %v1775
  %v1814 = vpop.f32.mrf.mxu0
  %v1815 = vadd.f32 0.0, %v1814
  %v1816 = vpop.f32.mrf.mxu0
  %v1817 = vpop.f32.mrf.mxu0
  %v1818 = vadd.f32 0.0, %v1817
  %v1819 = vpop.f32.mrf.mxu0
  %1820 = vmatprep.mubr.bf16.mxu0 0
  %1821 = vmatmul.mubr.bf16.gmra.mxu0 %v1778
  %v1822 = vpop.f32.mrf.mxu0
  %v1823 = vadd.f32 0.0, %v1822
  %v1824 = vpop.f32.mrf.mxu0
  %v1825 = vpop.f32.mrf.mxu0
  %v1826 = vadd.f32 0.0, %v1825
  %v1827 = vpop.f32.mrf.mxu0
  %1828 = vdwg.mxu0
  %v1829 = vadd.f32 %v1749, %v1815
  %v1830 = vadd.f32 %v1750, %v1818
  %v1831 = vadd.f32 %v1751, %v1823
  %v1832 = vadd.f32 %v1752, %v1826
  %s1833 = scalar_lea.vmem %s4, 64
  %v1834 = vld [vmem:[%s1833] sm:$0xf]
  %v1835 = vld [vmem:[%s1833 + $0x4] sm:$0xf]
  %v1836 = vld [vmem:[%s1833 + $0x8] sm:$0xf]
  %v1837 = vld [vmem:[%s1833 + $0xc] sm:$0xf]
  %v1842 = vunpack.c.l.b16 %v1834
  %v1843 = vunpack.c.l.b16 %v1835
  %v1844 = vunpack.c.l.b16 %v1836
  %v1845 = vunpack.c.l.b16 %v1837
  %v1846 = vpack.c.b16 %v1843, %v1842
  %v1847 = vpack.c.b16 %v1845, %v1844
  %1848 = vrot.lane.b32.xlu0 %v1542, 124
  %v1849 = vpop.permute.xlu0 %1848
  %1850 = vrot.lane.b32.xlu0 %v1543, 124
  %v1851 = vpop.permute.xlu0 %1850
  %v1855 = vsel %vm1550, %v1846, 0
  %v1858 = vsel %vm1550, %v1847, 0
  %1860 = vmatprep.subr.bf16.mxu0 0
  %1861 = vmatpush1.bf16.msra.mxu0 0
  %1862 = vmatprep.subr.bf16.mxu0 0
  %1863 = vmatpush1.bf16.msra.mxu0 0
  %1864 = vmatprep.subr.bf16.mxu0 0
  %1865 = vmatpush1.bf16.msra.mxu0 0
  %1866 = vmatprep.subr.bf16.mxu0 0
  %1867 = vmatpush1.bf16.msra.mxu0 0
  %1868 = vmatprep.subr.bf16.mxu0 0
  %1869 = vmatpush1.bf16.msra.mxu0 0
  %1870 = vmatprep.subr.bf16.mxu0 0
  %1871 = vmatpush1.bf16.msra.mxu0 0
  %1872 = vmatprep.subr.bf16.mxu0 0
  %1873 = vmatpush1.bf16.msra.mxu0 %v1851
  %1874 = vmatprep.subr.bf16.mxu0 0
  %1875 = vmatpush1.bf16.msra.mxu0 %v1849
  %1876 = vmatprep.subr.bf16.mxu0 0
  %1877 = vmatpush2.bf16.msra.mxu0 0
  %1878 = vmatprep.subr.bf16.mxu0 0
  %1879 = vmatpush2.bf16.msra.mxu0 0
  %1880 = vmatprep.subr.bf16.mxu0 0
  %1881 = vmatpush2.bf16.msra.mxu0 0
  %1882 = vmatprep.subr.bf16.mxu0 0
  %1883 = vmatpush2.bf16.msra.mxu0 0
  %1884 = vmatprep.subr.bf16.mxu0 0
  %1885 = vmatpush2.bf16.msra.mxu0 0
  %1886 = vmatprep.subr.bf16.mxu0 0
  %1887 = vmatpush2.bf16.msra.mxu0 0
  %1888 = vmatprep.subr.bf16.mxu0 0
  %1889 = vmatpush2.bf16.msra.mxu0 0
  %1890 = vmatprep.subr.bf16.mxu0 0
  %1891 = vmatpush2.bf16.msra.mxu0 0
  %1892 = vmatprep.mubr.bf16.mxu0 0
  %1893 = vmatmul.mubr.bf16.gmra.mxu0 %v1855
  %v1894 = vpop.f32.mrf.mxu0
  %v1895 = vadd.f32 0.0, %v1894
  %v1896 = vpop.f32.mrf.mxu0
  %v1897 = vpop.f32.mrf.mxu0
  %v1898 = vadd.f32 0.0, %v1897
  %v1899 = vpop.f32.mrf.mxu0
  %1900 = vmatprep.mubr.bf16.mxu0 0
  %1901 = vmatmul.mubr.bf16.gmra.mxu0 %v1858
  %v1902 = vpop.f32.mrf.mxu0
  %v1903 = vadd.f32 0.0, %v1902
  %v1904 = vpop.f32.mrf.mxu0
  %v1905 = vpop.f32.mrf.mxu0
  %v1906 = vadd.f32 0.0, %v1905
  %v1907 = vpop.f32.mrf.mxu0
  %1908 = vdwg.mxu0
  %v1909 = vadd.f32 %v1829, %v1895
  %v1910 = vadd.f32 %v1830, %v1898
  %v1911 = vadd.f32 %v1831, %v1903
  %v1912 = vadd.f32 %v1832, %v1906
  %s1913 = scalar_lea.vmem %s4, 80
  %v1914 = vld [vmem:[%s1913] sm:$0xf]
  %v1915 = vld [vmem:[%s1913 + $0x4] sm:$0xf]
  %v1916 = vld [vmem:[%s1913 + $0x8] sm:$0xf]
  %v1917 = vld [vmem:[%s1913 + $0xc] sm:$0xf]
  %v1922 = vunpack.c.l.b16 %v1914
  %v1923 = vunpack.c.l.b16 %v1915
  %v1924 = vunpack.c.l.b16 %v1916
  %v1925 = vunpack.c.l.b16 %v1917
  %v1926 = vpack.c.b16 %v1923, %v1922
  %v1927 = vpack.c.b16 %v1925, %v1924
  %1928 = vrot.lane.b32.xlu0 %v1542, 123
  %v1929 = vpop.permute.xlu0 %1928
  %1930 = vrot.lane.b32.xlu0 %v1543, 123
  %v1931 = vpop.permute.xlu0 %1930
  %v1935 = vsel %vm1550, %v1926, 0
  %v1938 = vsel %vm1550, %v1927, 0
  %1940 = vmatprep.subr.bf16.mxu0 0
  %1941 = vmatpush1.bf16.msra.mxu0 0
  %1942 = vmatprep.subr.bf16.mxu0 0
  %1943 = vmatpush1.bf16.msra.mxu0 0
  %1944 = vmatprep.subr.bf16.mxu0 0
  %1945 = vmatpush1.bf16.msra.mxu0 0
  %1946 = vmatprep.subr.bf16.mxu0 0
  %1947 = vmatpush1.bf16.msra.mxu0 0
  %1948 = vmatprep.subr.bf16.mxu0 0
  %1949 = vmatpush1.bf16.msra.mxu0 0
  %1950 = vmatprep.subr.bf16.mxu0 0
  %1951 = vmatpush1.bf16.msra.mxu0 0
  %1952 = vmatprep.subr.bf16.mxu0 0
  %1953 = vmatpush1.bf16.msra.mxu0 %v1931
  %1954 = vmatprep.subr.bf16.mxu0 0
  %1955 = vmatpush1.bf16.msra.mxu0 %v1929
  %1956 = vmatprep.subr.bf16.mxu0 0
  %1957 = vmatpush2.bf16.msra.mxu0 0
  %1958 = vmatprep.subr.bf16.mxu0 0
  %1959 = vmatpush2.bf16.msra.mxu0 0
  %1960 = vmatprep.subr.bf16.mxu0 0
  %1961 = vmatpush2.bf16.msra.mxu0 0
  %1962 = vmatprep.subr.bf16.mxu0 0
  %1963 = vmatpush2.bf16.msra.mxu0 0
  %1964 = vmatprep.subr.bf16.mxu0 0
  %1965 = vmatpush2.bf16.msra.mxu0 0
  %1966 = vmatprep.subr.bf16.mxu0 0
  %1967 = vmatpush2.bf16.msra.mxu0 0
  %1968 = vmatprep.subr.bf16.mxu0 0
  %1969 = vmatpush2.bf16.msra.mxu0 0
  %1970 = vmatprep.subr.bf16.mxu0 0
  %1971 = vmatpush2.bf16.msra.mxu0 0
  %1972 = vmatprep.mubr.bf16.mxu0 0
  %1973 = vmatmul.mubr.bf16.gmra.mxu0 %v1935
  %v1974 = vpop.f32.mrf.mxu0
  %v1975 = vadd.f32 0.0, %v1974
  %v1976 = vpop.f32.mrf.mxu0
  %v1977 = vpop.f32.mrf.mxu0
  %v1978 = vadd.f32 0.0, %v1977
  %v1979 = vpop.f32.mrf.mxu0
  %1980 = vmatprep.mubr.bf16.mxu0 0
  %1981 = vmatmul.mubr.bf16.gmra.mxu0 %v1938
  %v1982 = vpop.f32.mrf.mxu0
  %v1983 = vadd.f32 0.0, %v1982
  %v1984 = vpop.f32.mrf.mxu0
  %v1985 = vpop.f32.mrf.mxu0
  %v1986 = vadd.f32 0.0, %v1985
  %v1987 = vpop.f32.mrf.mxu0
  %1988 = vdwg.mxu0
  %v1989 = vadd.f32 %v1909, %v1975
  %v1990 = vadd.f32 %v1910, %v1978
  %v1991 = vadd.f32 %v1911, %v1983
  %v1992 = vadd.f32 %v1912, %v1986
  %s1993 = scalar_lea.vmem %s4, 96
  %v1994 = vld [vmem:[%s1993] sm:$0xf]
  %v1995 = vld [vmem:[%s1993 + $0x4] sm:$0xf]
  %v1996 = vld [vmem:[%s1993 + $0x8] sm:$0xf]
  %v1997 = vld [vmem:[%s1993 + $0xc] sm:$0xf]
  %v2002 = vunpack.c.l.b16 %v1994
  %v2003 = vunpack.c.l.b16 %v1995
  %v2004 = vunpack.c.l.b16 %v1996
  %v2005 = vunpack.c.l.b16 %v1997
  %v2006 = vpack.c.b16 %v2003, %v2002
  %v2007 = vpack.c.b16 %v2005, %v2004
  %2008 = vrot.lane.b32.xlu0 %v1542, 122
  %v2009 = vpop.permute.xlu0 %2008
  %2010 = vrot.lane.b32.xlu0 %v1543, 122
  %v2011 = vpop.permute.xlu0 %2010
  %v2015 = vsel %vm1550, %v2006, 0
  %v2018 = vsel %vm1550, %v2007, 0
  %2020 = vmatprep.subr.bf16.mxu0 0
  %2021 = vmatpush1.bf16.msra.mxu0 0
  %2022 = vmatprep.subr.bf16.mxu0 0
  %2023 = vmatpush1.bf16.msra.mxu0 0
  %2024 = vmatprep.subr.bf16.mxu0 0
  %2025 = vmatpush1.bf16.msra.mxu0 0
  %2026 = vmatprep.subr.bf16.mxu0 0
  %2027 = vmatpush1.bf16.msra.mxu0 0
  %2028 = vmatprep.subr.bf16.mxu0 0
  %2029 = vmatpush1.bf16.msra.mxu0 0
  %2030 = vmatprep.subr.bf16.mxu0 0
  %2031 = vmatpush1.bf16.msra.mxu0 0
  %2032 = vmatprep.subr.bf16.mxu0 0
  %2033 = vmatpush1.bf16.msra.mxu0 %v2011
  %2034 = vmatprep.subr.bf16.mxu0 0
  %2035 = vmatpush1.bf16.msra.mxu0 %v2009
  %2036 = vmatprep.subr.bf16.mxu0 0
  %2037 = vmatpush2.bf16.msra.mxu0 0
  %2038 = vmatprep.subr.bf16.mxu0 0
  %2039 = vmatpush2.bf16.msra.mxu0 0
  %2040 = vmatprep.subr.bf16.mxu0 0
  %2041 = vmatpush2.bf16.msra.mxu0 0
  %2042 = vmatprep.subr.bf16.mxu0 0
  %2043 = vmatpush2.bf16.msra.mxu0 0
  %2044 = vmatprep.subr.bf16.mxu0 0
  %2045 = vmatpush2.bf16.msra.mxu0 0
  %2046 = vmatprep.subr.bf16.mxu0 0
  %2047 = vmatpush2.bf16.msra.mxu0 0
  %2048 = vmatprep.subr.bf16.mxu0 0
  %2049 = vmatpush2.bf16.msra.mxu0 0
  %2050 = vmatprep.subr.bf16.mxu0 0
  %2051 = vmatpush2.bf16.msra.mxu0 0
  %2052 = vmatprep.mubr.bf16.mxu0 0
  %2053 = vmatmul.mubr.bf16.gmra.mxu0 %v2015
  %v2054 = vpop.f32.mrf.mxu0
  %v2055 = vadd.f32 0.0, %v2054
  %v2056 = vpop.f32.mrf.mxu0
  %v2057 = vpop.f32.mrf.mxu0
  %v2058 = vadd.f32 0.0, %v2057
  %v2059 = vpop.f32.mrf.mxu0
  %2060 = vmatprep.mubr.bf16.mxu0 0
  %2061 = vmatmul.mubr.bf16.gmra.mxu0 %v2018
  %v2062 = vpop.f32.mrf.mxu0
  %v2063 = vadd.f32 0.0, %v2062
  %v2064 = vpop.f32.mrf.mxu0
  %v2065 = vpop.f32.mrf.mxu0
  %v2066 = vadd.f32 0.0, %v2065
  %v2067 = vpop.f32.mrf.mxu0
  %2068 = vdwg.mxu0
  %v2069 = vadd.f32 %v1989, %v2055
  %v2070 = vadd.f32 %v1990, %v2058
  %v2071 = vadd.f32 %v1991, %v2063
  %v2072 = vadd.f32 %v1992, %v2066
  %s2073 = scalar_lea.vmem %s4, 112
  %v2074 = vld [vmem:[%s2073] sm:$0xf]
  %v2075 = vld [vmem:[%s2073 + $0x4] sm:$0xf]
  %v2076 = vld [vmem:[%s2073 + $0x8] sm:$0xf]
  %v2077 = vld [vmem:[%s2073 + $0xc] sm:$0xf]
  %v2082 = vunpack.c.l.b16 %v2074
  %v2083 = vunpack.c.l.b16 %v2075
  %v2084 = vunpack.c.l.b16 %v2076
  %v2085 = vunpack.c.l.b16 %v2077
  %v2086 = vpack.c.b16 %v2083, %v2082
  %v2087 = vpack.c.b16 %v2085, %v2084
  %2088 = vrot.lane.b32.xlu0 %v1542, 121
  %v2089 = vpop.permute.xlu0 %2088
  %2090 = vrot.lane.b32.xlu0 %v1543, 121
  %v2091 = vpop.permute.xlu0 %2090
  %v2095 = vsel %vm1550, %v2086, 0
  %v2098 = vsel %vm1550, %v2087, 0
  %2100 = vmatprep.subr.bf16.mxu0 0
  %2101 = vmatpush1.bf16.msra.mxu0 0
  %2102 = vmatprep.subr.bf16.mxu0 0
  %2103 = vmatpush1.bf16.msra.mxu0 0
  %2104 = vmatprep.subr.bf16.mxu0 0
  %2105 = vmatpush1.bf16.msra.mxu0 0
  %2106 = vmatprep.subr.bf16.mxu0 0
  %2107 = vmatpush1.bf16.msra.mxu0 0
  %2108 = vmatprep.subr.bf16.mxu0 0
  %2109 = vmatpush1.bf16.msra.mxu0 0
  %2110 = vmatprep.subr.bf16.mxu0 0
  %2111 = vmatpush1.bf16.msra.mxu0 0
  %2112 = vmatprep.subr.bf16.mxu0 0
  %2113 = vmatpush1.bf16.msra.mxu0 %v2091
  %2114 = vmatprep.subr.bf16.mxu0 0
  %2115 = vmatpush1.bf16.msra.mxu0 %v2089
  %2116 = vmatprep.subr.bf16.mxu0 0
  %2117 = vmatpush2.bf16.msra.mxu0 0
  %2118 = vmatprep.subr.bf16.mxu0 0
  %2119 = vmatpush2.bf16.msra.mxu0 0
  %2120 = vmatprep.subr.bf16.mxu0 0
  %2121 = vmatpush2.bf16.msra.mxu0 0
  %2122 = vmatprep.subr.bf16.mxu0 0
  %2123 = vmatpush2.bf16.msra.mxu0 0
  %2124 = vmatprep.subr.bf16.mxu0 0
  %2125 = vmatpush2.bf16.msra.mxu0 0
  %2126 = vmatprep.subr.bf16.mxu0 0
  %2127 = vmatpush2.bf16.msra.mxu0 0
  %2128 = vmatprep.subr.bf16.mxu0 0
  %2129 = vmatpush2.bf16.msra.mxu0 0
  %2130 = vmatprep.subr.bf16.mxu0 0
  %2131 = vmatpush2.bf16.msra.mxu0 0
  %2132 = vmatprep.mubr.bf16.mxu0 0
  %2133 = vmatmul.mubr.bf16.gmra.mxu0 %v2095
  %v2134 = vpop.f32.mrf.mxu0
  %v2135 = vadd.f32 0.0, %v2134
  %v2136 = vpop.f32.mrf.mxu0
  %v2137 = vpop.f32.mrf.mxu0
  %v2138 = vadd.f32 0.0, %v2137
  %v2139 = vpop.f32.mrf.mxu0
  %2140 = vmatprep.mubr.bf16.mxu0 0
  %2141 = vmatmul.mubr.bf16.gmra.mxu0 %v2098
  %v2142 = vpop.f32.mrf.mxu0
  %v2143 = vadd.f32 0.0, %v2142
  %v2144 = vpop.f32.mrf.mxu0
  %v2145 = vpop.f32.mrf.mxu0
  %v2146 = vadd.f32 0.0, %v2145
  %v2147 = vpop.f32.mrf.mxu0
  %2148 = vdwg.mxu0
  %v2149 = vadd.f32 %v2069, %v2135
  %v2150 = vadd.f32 %v2070, %v2138
  %v2151 = vadd.f32 %v2071, %v2143
  %v2152 = vadd.f32 %v2072, %v2146
  %vm2153 = vcmask 97280
  %2154 = vst.msk [vmem:[#allocation4] sm:$0xff] %vm2153, %v2149
  %2155 = vst.msk [vmem:[#allocation4 + $0x8] sm:$0xff] %vm2153, %v2150
  %2156 = vst.msk [vmem:[#allocation4 + $0x10] sm:$0xff] %vm2153, %v2151
  %2157 = vst.msk [vmem:[#allocation4 + $0x18] sm:$0xff] %vm2153, %v2152
  %s2158 = scalar_lea.vmem [#allocation3], 16
  %v2159 = vld [vmem:[%s2158] sm:$0xf]
  %v2160 = vld [vmem:[%s2158 + $0x4] sm:$0xf]
  %v2161 = vld [vmem:[%s2158 + $0x8] sm:$0xf]
  %v2162 = vld [vmem:[%s2158 + $0xc] sm:$0xf]
  %v2163 = vld [vmem:[%s4] sm:$0xf]
  %v2164 = vld [vmem:[%s4 + $0x4] sm:$0xf]
  %v2165 = vld [vmem:[%s4 + $0x8] sm:$0xf]
  %v2166 = vld [vmem:[%s4 + $0xc] sm:$0xf]
  %v2167 = vld [vmem:[%s1519] sm:$0xf]
  %v2168 = vld [vmem:[%s1519 + $0x4] sm:$0xf]
  %v2169 = vld [vmem:[%s1519 + $0x8] sm:$0xf]
  %v2170 = vld [vmem:[%s1519 + $0xc] sm:$0xf]
  %v2175 = vunpack.c.l.b16 %v2167
  %v2176 = vunpack.c.l.b16 %v2168
  %v2177 = vunpack.c.l.b16 %v2169
  %v2178 = vunpack.c.l.b16 %v2170
  %v2179 = vpack.c.b16 %v2176, %v2175
  %v2180 = vpack.c.b16 %v2178, %v2177
  %v2185 = vunpack.c.l.b16 %v2159
  %v2186 = vunpack.c.l.b16 %v2160
  %v2187 = vunpack.c.l.b16 %v2161
  %v2188 = vunpack.c.l.b16 %v2162
  %v2189 = vpack.c.b16 %v2186, %v2185
  %v2190 = vpack.c.b16 %v2188, %v2187
  %2191 = vrot.lane.b32.xlu0 %v2189, 127
  %v2192 = vpop.permute.xlu0 %2191
  %2193 = vrot.lane.b32.xlu0 %v2190, 127
  %v2194 = vpop.permute.xlu0 %2193
  %v2198 = vsel %vm1550, %v2179, 0
  %v2201 = vsel %vm1550, %v2180, 0
  %2203 = vmatprep.subr.bf16.mxu0 0
  %2204 = vmatpush1.bf16.msra.mxu0 0
  %2205 = vmatprep.subr.bf16.mxu0 0
  %2206 = vmatpush1.bf16.msra.mxu0 0
  %2207 = vmatprep.subr.bf16.mxu0 0
  %2208 = vmatpush1.bf16.msra.mxu0 0
  %2209 = vmatprep.subr.bf16.mxu0 0
  %2210 = vmatpush1.bf16.msra.mxu0 0
  %2211 = vmatprep.subr.bf16.mxu0 0
  %2212 = vmatpush1.bf16.msra.mxu0 0
  %2213 = vmatprep.subr.bf16.mxu0 0
  %2214 = vmatpush1.bf16.msra.mxu0 0
  %2215 = vmatprep.subr.bf16.mxu0 0
  %2216 = vmatpush1.bf16.msra.mxu0 %v2194
  %2217 = vmatprep.subr.bf16.mxu0 0
  %2218 = vmatpush1.bf16.msra.mxu0 %v2192
  %2219 = vmatprep.subr.bf16.mxu0 0
  %2220 = vmatpush2.bf16.msra.mxu0 0
  %2221 = vmatprep.subr.bf16.mxu0 0
  %2222 = vmatpush2.bf16.msra.mxu0 0
  %2223 = vmatprep.subr.bf16.mxu0 0
  %2224 = vmatpush2.bf16.msra.mxu0 0
  %2225 = vmatprep.subr.bf16.mxu0 0
  %2226 = vmatpush2.bf16.msra.mxu0 0
  %2227 = vmatprep.subr.bf16.mxu0 0
  %2228 = vmatpush2.bf16.msra.mxu0 0
  %2229 = vmatprep.subr.bf16.mxu0 0
  %2230 = vmatpush2.bf16.msra.mxu0 0
  %2231 = vmatprep.subr.bf16.mxu0 0
  %2232 = vmatpush2.bf16.msra.mxu0 0
  %2233 = vmatprep.subr.bf16.mxu0 0
  %2234 = vmatpush2.bf16.msra.mxu0 0
  %2235 = vmatprep.mubr.bf16.mxu0 0
  %2236 = vmatmul.mubr.bf16.gmra.mxu0 %v2198
  %v2237 = vpop.f32.mrf.mxu0
  %v2238 = vadd.f32 0.0, %v2237
  %v2239 = vpop.f32.mrf.mxu0
  %v2240 = vpop.f32.mrf.mxu0
  %v2241 = vadd.f32 0.0, %v2240
  %v2242 = vpop.f32.mrf.mxu0
  %2243 = vmatprep.mubr.bf16.mxu0 0
  %2244 = vmatmul.mubr.bf16.gmra.mxu0 %v2201
  %v2245 = vpop.f32.mrf.mxu0
  %v2246 = vadd.f32 0.0, %v2245
  %v2247 = vpop.f32.mrf.mxu0
  %v2248 = vpop.f32.mrf.mxu0
  %v2249 = vadd.f32 0.0, %v2248
  %v2250 = vpop.f32.mrf.mxu0
  %2251 = vdwg.mxu0
  %v2256 = vunpack.c.l.b16 %v2163
  %v2257 = vunpack.c.l.b16 %v2164
  %v2258 = vunpack.c.l.b16 %v2165
  %v2259 = vunpack.c.l.b16 %v2166
  %v2260 = vpack.c.b16 %v2257, %v2256
  %v2261 = vpack.c.b16 %v2259, %v2258
  %v2265 = vsel %vm1550, %v2260, 0
  %v2268 = vsel %vm1550, %v2261, 0
  %2270 = vmatprep.subr.bf16.mxu0 0
  %2271 = vmatpush1.bf16.msra.mxu0 0
  %2272 = vmatprep.subr.bf16.mxu0 0
  %2273 = vmatpush1.bf16.msra.mxu0 0
  %2274 = vmatprep.subr.bf16.mxu0 0
  %2275 = vmatpush1.bf16.msra.mxu0 0
  %2276 = vmatprep.subr.bf16.mxu0 0
  %2277 = vmatpush1.bf16.msra.mxu0 0
  %2278 = vmatprep.subr.bf16.mxu0 0
  %2279 = vmatpush1.bf16.msra.mxu0 0
  %2280 = vmatprep.subr.bf16.mxu0 0
  %2281 = vmatpush1.bf16.msra.mxu0 0
  %2282 = vmatprep.subr.bf16.mxu0 0
  %2283 = vmatpush1.bf16.msra.mxu0 %v2190
  %2284 = vmatprep.subr.bf16.mxu0 0
  %2285 = vmatpush1.bf16.msra.mxu0 %v2189
  %2286 = vmatprep.subr.bf16.mxu0 0
  %2287 = vmatpush2.bf16.msra.mxu0 0
  %2288 = vmatprep.subr.bf16.mxu0 0
  %2289 = vmatpush2.bf16.msra.mxu0 0
  %2290 = vmatprep.subr.bf16.mxu0 0
  %2291 = vmatpush2.bf16.msra.mxu0 0
  %2292 = vmatprep.subr.bf16.mxu0 0
  %2293 = vmatpush2.bf16.msra.mxu0 0
  %2294 = vmatprep.subr.bf16.mxu0 0
  %2295 = vmatpush2.bf16.msra.mxu0 0
  %2296 = vmatprep.subr.bf16.mxu0 0
  %2297 = vmatpush2.bf16.msra.mxu0 0
  %2298 = vmatprep.subr.bf16.mxu0 0
  %2299 = vmatpush2.bf16.msra.mxu0 0
  %2300 = vmatprep.subr.bf16.mxu0 0
  %2301 = vmatpush2.bf16.msra.mxu0 0
  %2302 = vmatprep.mubr.bf16.mxu0 0
  %2303 = vmatmul.mubr.bf16.gmra.mxu0 %v2265
  %v2304 = vpop.f32.mrf.mxu0
  %v2305 = vadd.f32 %v2238, %v2304
  %v2306 = vpop.f32.mrf.mxu0
  %v2307 = vpop.f32.mrf.mxu0
  %v2308 = vadd.f32 %v2241, %v2307
  %v2309 = vpop.f32.mrf.mxu0
  %2310 = vmatprep.mubr.bf16.mxu0 0
  %2311 = vmatmul.mubr.bf16.gmra.mxu0 %v2268
  %v2312 = vpop.f32.mrf.mxu0
  %v2313 = vadd.f32 %v2246, %v2312
  %v2314 = vpop.f32.mrf.mxu0
  %v2315 = vpop.f32.mrf.mxu0
  %v2316 = vadd.f32 %v2249, %v2315
  %v2317 = vpop.f32.mrf.mxu0
  %2318 = vdwg.mxu0
  %v2319 = vld [vmem:[%s1673] sm:$0xf]
  %v2320 = vld [vmem:[%s1673 + $0x4] sm:$0xf]
  %v2321 = vld [vmem:[%s1673 + $0x8] sm:$0xf]
  %v2322 = vld [vmem:[%s1673 + $0xc] sm:$0xf]
  %v2327 = vunpack.c.l.b16 %v2319
  %v2328 = vunpack.c.l.b16 %v2320
  %v2329 = vunpack.c.l.b16 %v2321
  %v2330 = vunpack.c.l.b16 %v2322
  %v2331 = vpack.c.b16 %v2328, %v2327
  %v2332 = vpack.c.b16 %v2330, %v2329
  %2333 = vrot.lane.b32.xlu0 %v2189, 126
  %v2334 = vpop.permute.xlu0 %2333
  %2335 = vrot.lane.b32.xlu0 %v2190, 126
  %v2336 = vpop.permute.xlu0 %2335
  %v2340 = vsel %vm1550, %v2331, 0
  %v2343 = vsel %vm1550, %v2332, 0
  %2345 = vmatprep.subr.bf16.mxu0 0
  %2346 = vmatpush1.bf16.msra.mxu0 0
  %2347 = vmatprep.subr.bf16.mxu0 0
  %2348 = vmatpush1.bf16.msra.mxu0 0
  %2349 = vmatprep.subr.bf16.mxu0 0
  %2350 = vmatpush1.bf16.msra.mxu0 0
  %2351 = vmatprep.subr.bf16.mxu0 0
  %2352 = vmatpush1.bf16.msra.mxu0 0
  %2353 = vmatprep.subr.bf16.mxu0 0
  %2354 = vmatpush1.bf16.msra.mxu0 0
  %2355 = vmatprep.subr.bf16.mxu0 0
  %2356 = vmatpush1.bf16.msra.mxu0 0
  %2357 = vmatprep.subr.bf16.mxu0 0
  %2358 = vmatpush1.bf16.msra.mxu0 %v2336
  %2359 = vmatprep.subr.bf16.mxu0 0
  %2360 = vmatpush1.bf16.msra.mxu0 %v2334
  %2361 = vmatprep.subr.bf16.mxu0 0
  %2362 = vmatpush2.bf16.msra.mxu0 0
  %2363 = vmatprep.subr.bf16.mxu0 0
  %2364 = vmatpush2.bf16.msra.mxu0 0
  %2365 = vmatprep.subr.bf16.mxu0 0
  %2366 = vmatpush2.bf16.msra.mxu0 0
  %2367 = vmatprep.subr.bf16.mxu0 0
  %2368 = vmatpush2.bf16.msra.mxu0 0
  %2369 = vmatprep.subr.bf16.mxu0 0
  %2370 = vmatpush2.bf16.msra.mxu0 0
  %2371 = vmatprep.subr.bf16.mxu0 0
  %2372 = vmatpush2.bf16.msra.mxu0 0
  %2373 = vmatprep.subr.bf16.mxu0 0
  %2374 = vmatpush2.bf16.msra.mxu0 0
  %2375 = vmatprep.subr.bf16.mxu0 0
  %2376 = vmatpush2.bf16.msra.mxu0 0
  %2377 = vmatprep.mubr.bf16.mxu0 0
  %2378 = vmatmul.mubr.bf16.gmra.mxu0 %v2340
  %v2379 = vpop.f32.mrf.mxu0
  %v2380 = vadd.f32 0.0, %v2379
  %v2381 = vpop.f32.mrf.mxu0
  %v2382 = vpop.f32.mrf.mxu0
  %v2383 = vadd.f32 0.0, %v2382
  %v2384 = vpop.f32.mrf.mxu0
  %2385 = vmatprep.mubr.bf16.mxu0 0
  %2386 = vmatmul.mubr.bf16.gmra.mxu0 %v2343
  %v2387 = vpop.f32.mrf.mxu0
  %v2388 = vadd.f32 0.0, %v2387
  %v2389 = vpop.f32.mrf.mxu0
  %v2390 = vpop.f32.mrf.mxu0
  %v2391 = vadd.f32 0.0, %v2390
  %v2392 = vpop.f32.mrf.mxu0
  %2393 = vdwg.mxu0
  %v2394 = vadd.f32 %v2305, %v2380
  %v2395 = vadd.f32 %v2308, %v2383
  %v2396 = vadd.f32 %v2313, %v2388
  %v2397 = vadd.f32 %v2316, %v2391
  %v2398 = vld [vmem:[%s1753] sm:$0xf]
  %v2399 = vld [vmem:[%s1753 + $0x4] sm:$0xf]
  %v2400 = vld [vmem:[%s1753 + $0x8] sm:$0xf]
  %v2401 = vld [vmem:[%s1753 + $0xc] sm:$0xf]
  %v2406 = vunpack.c.l.b16 %v2398
  %v2407 = vunpack.c.l.b16 %v2399
  %v2408 = vunpack.c.l.b16 %v2400
  %v2409 = vunpack.c.l.b16 %v2401
  %v2410 = vpack.c.b16 %v2407, %v2406
  %v2411 = vpack.c.b16 %v2409, %v2408
  %2412 = vrot.lane.b32.xlu0 %v2189, 125
  %v2413 = vpop.permute.xlu0 %2412
  %2414 = vrot.lane.b32.xlu0 %v2190, 125
  %v2415 = vpop.permute.xlu0 %2414
  %v2419 = vsel %vm1550, %v2410, 0
  %v2422 = vsel %vm1550, %v2411, 0
  %2424 = vmatprep.subr.bf16.mxu0 0
  %2425 = vmatpush1.bf16.msra.mxu0 0
  %2426 = vmatprep.subr.bf16.mxu0 0
  %2427 = vmatpush1.bf16.msra.mxu0 0
  %2428 = vmatprep.subr.bf16.mxu0 0
  %2429 = vmatpush1.bf16.msra.mxu0 0
  %2430 = vmatprep.subr.bf16.mxu0 0
  %2431 = vmatpush1.bf16.msra.mxu0 0
  %2432 = vmatprep.subr.bf16.mxu0 0
  %2433 = vmatpush1.bf16.msra.mxu0 0
  %2434 = vmatprep.subr.bf16.mxu0 0
  %2435 = vmatpush1.bf16.msra.mxu0 0
  %2436 = vmatprep.subr.bf16.mxu0 0
  %2437 = vmatpush1.bf16.msra.mxu0 %v2415
  %2438 = vmatprep.subr.bf16.mxu0 0
  %2439 = vmatpush1.bf16.msra.mxu0 %v2413
  %2440 = vmatprep.subr.bf16.mxu0 0
  %2441 = vmatpush2.bf16.msra.mxu0 0
  %2442 = vmatprep.subr.bf16.mxu0 0
  %2443 = vmatpush2.bf16.msra.mxu0 0
  %2444 = vmatprep.subr.bf16.mxu0 0
  %2445 = vmatpush2.bf16.msra.mxu0 0
  %2446 = vmatprep.subr.bf16.mxu0 0
  %2447 = vmatpush2.bf16.msra.mxu0 0
  %2448 = vmatprep.subr.bf16.mxu0 0
  %2449 = vmatpush2.bf16.msra.mxu0 0
  %2450 = vmatprep.subr.bf16.mxu0 0
  %2451 = vmatpush2.bf16.msra.mxu0 0
  %2452 = vmatprep.subr.bf16.mxu0 0
  %2453 = vmatpush2.bf16.msra.mxu0 0
  %2454 = vmatprep.subr.bf16.mxu0 0
  %2455 = vmatpush2.bf16.msra.mxu0 0
  %2456 = vmatprep.mubr.bf16.mxu0 0
  %2457 = vmatmul.mubr.bf16.gmra.mxu0 %v2419
  %v2458 = vpop.f32.mrf.mxu0
  %v2459 = vadd.f32 0.0, %v2458
  %v2460 = vpop.f32.mrf.mxu0
  %v2461 = vpop.f32.mrf.mxu0
  %v2462 = vadd.f32 0.0, %v2461
  %v2463 = vpop.f32.mrf.mxu0
  %2464 = vmatprep.mubr.bf16.mxu0 0
  %2465 = vmatmul.mubr.bf16.gmra.mxu0 %v2422
  %v2466 = vpop.f32.mrf.mxu0
  %v2467 = vadd.f32 0.0, %v2466
  %v2468 = vpop.f32.mrf.mxu0
  %v2469 = vpop.f32.mrf.mxu0
  %v2470 = vadd.f32 0.0, %v2469
  %v2471 = vpop.f32.mrf.mxu0
  %2472 = vdwg.mxu0
  %v2473 = vadd.f32 %v2394, %v2459
  %v2474 = vadd.f32 %v2395, %v2462
  %v2475 = vadd.f32 %v2396, %v2467
  %v2476 = vadd.f32 %v2397, %v2470
  %v2477 = vld [vmem:[%s1833] sm:$0xf]
  %v2478 = vld [vmem:[%s1833 + $0x4] sm:$0xf]
  %v2479 = vld [vmem:[%s1833 + $0x8] sm:$0xf]
  %v2480 = vld [vmem:[%s1833 + $0xc] sm:$0xf]
  %v2485 = vunpack.c.l.b16 %v2477
  %v2486 = vunpack.c.l.b16 %v2478
  %v2487 = vunpack.c.l.b16 %v2479
  %v2488 = vunpack.c.l.b16 %v2480
  %v2489 = vpack.c.b16 %v2486, %v2485
  %v2490 = vpack.c.b16 %v2488, %v2487
  %2491 = vrot.lane.b32.xlu0 %v2189, 124
  %v2492 = vpop.permute.xlu0 %2491
  %2493 = vrot.lane.b32.xlu0 %v2190, 124
  %v2494 = vpop.permute.xlu0 %2493
  %v2498 = vsel %vm1550, %v2489, 0
  %v2501 = vsel %vm1550, %v2490, 0
  %2503 = vmatprep.subr.bf16.mxu0 0
  %2504 = vmatpush1.bf16.msra.mxu0 0
  %2505 = vmatprep.subr.bf16.mxu0 0
  %2506 = vmatpush1.bf16.msra.mxu0 0
  %2507 = vmatprep.subr.bf16.mxu0 0
  %2508 = vmatpush1.bf16.msra.mxu0 0
  %2509 = vmatprep.subr.bf16.mxu0 0
  %2510 = vmatpush1.bf16.msra.mxu0 0
  %2511 = vmatprep.subr.bf16.mxu0 0
  %2512 = vmatpush1.bf16.msra.mxu0 0
  %2513 = vmatprep.subr.bf16.mxu0 0
  %2514 = vmatpush1.bf16.msra.mxu0 0
  %2515 = vmatprep.subr.bf16.mxu0 0
  %2516 = vmatpush1.bf16.msra.mxu0 %v2494
  %2517 = vmatprep.subr.bf16.mxu0 0
  %2518 = vmatpush1.bf16.msra.mxu0 %v2492
  %2519 = vmatprep.subr.bf16.mxu0 0
  %2520 = vmatpush2.bf16.msra.mxu0 0
  %2521 = vmatprep.subr.bf16.mxu0 0
  %2522 = vmatpush2.bf16.msra.mxu0 0
  %2523 = vmatprep.subr.bf16.mxu0 0
  %2524 = vmatpush2.bf16.msra.mxu0 0
  %2525 = vmatprep.subr.bf16.mxu0 0
  %2526 = vmatpush2.bf16.msra.mxu0 0
  %2527 = vmatprep.subr.bf16.mxu0 0
  %2528 = vmatpush2.bf16.msra.mxu0 0
  %2529 = vmatprep.subr.bf16.mxu0 0
  %2530 = vmatpush2.bf16.msra.mxu0 0
  %2531 = vmatprep.subr.bf16.mxu0 0
  %2532 = vmatpush2.bf16.msra.mxu0 0
  %2533 = vmatprep.subr.bf16.mxu0 0
  %2534 = vmatpush2.bf16.msra.mxu0 0
  %2535 = vmatprep.mubr.bf16.mxu0 0
  %2536 = vmatmul.mubr.bf16.gmra.mxu0 %v2498
  %v2537 = vpop.f32.mrf.mxu0
  %v2538 = vadd.f32 0.0, %v2537
  %v2539 = vpop.f32.mrf.mxu0
  %v2540 = vpop.f32.mrf.mxu0
  %v2541 = vadd.f32 0.0, %v2540
  %v2542 = vpop.f32.mrf.mxu0
  %2543 = vmatprep.mubr.bf16.mxu0 0
  %2544 = vmatmul.mubr.bf16.gmra.mxu0 %v2501
  %v2545 = vpop.f32.mrf.mxu0
  %v2546 = vadd.f32 0.0, %v2545
  %v2547 = vpop.f32.mrf.mxu0
  %v2548 = vpop.f32.mrf.mxu0
  %v2549 = vadd.f32 0.0, %v2548
  %v2550 = vpop.f32.mrf.mxu0
  %2551 = vdwg.mxu0
  %v2552 = vadd.f32 %v2473, %v2538
  %v2553 = vadd.f32 %v2474, %v2541
  %v2554 = vadd.f32 %v2475, %v2546
  %v2555 = vadd.f32 %v2476, %v2549
  %v2556 = vld [vmem:[%s1913] sm:$0xf]
  %v2557 = vld [vmem:[%s1913 + $0x4] sm:$0xf]
  %v2558 = vld [vmem:[%s1913 + $0x8] sm:$0xf]
  %v2559 = vld [vmem:[%s1913 + $0xc] sm:$0xf]
  %v2564 = vunpack.c.l.b16 %v2556
  %v2565 = vunpack.c.l.b16 %v2557
  %v2566 = vunpack.c.l.b16 %v2558
  %v2567 = vunpack.c.l.b16 %v2559
  %v2568 = vpack.c.b16 %v2565, %v2564
  %v2569 = vpack.c.b16 %v2567, %v2566
  %2570 = vrot.lane.b32.xlu0 %v2189, 123
  %v2571 = vpop.permute.xlu0 %2570
  %2572 = vrot.lane.b32.xlu0 %v2190, 123
  %v2573 = vpop.permute.xlu0 %2572
  %v2577 = vsel %vm1550, %v2568, 0
  %v2580 = vsel %vm1550, %v2569, 0
  %2582 = vmatprep.subr.bf16.mxu0 0
  %2583 = vmatpush1.bf16.msra.mxu0 0
  %2584 = vmatprep.subr.bf16.mxu0 0
  %2585 = vmatpush1.bf16.msra.mxu0 0
  %2586 = vmatprep.subr.bf16.mxu0 0
  %2587 = vmatpush1.bf16.msra.mxu0 0
  %2588 = vmatprep.subr.bf16.mxu0 0
  %2589 = vmatpush1.bf16.msra.mxu0 0
  %2590 = vmatprep.subr.bf16.mxu0 0
  %2591 = vmatpush1.bf16.msra.mxu0 0
  %2592 = vmatprep.subr.bf16.mxu0 0
  %2593 = vmatpush1.bf16.msra.mxu0 0
  %2594 = vmatprep.subr.bf16.mxu0 0
  %2595 = vmatpush1.bf16.msra.mxu0 %v2573
  %2596 = vmatprep.subr.bf16.mxu0 0
  %2597 = vmatpush1.bf16.msra.mxu0 %v2571
  %2598 = vmatprep.subr.bf16.mxu0 0
  %2599 = vmatpush2.bf16.msra.mxu0 0
  %2600 = vmatprep.subr.bf16.mxu0 0
  %2601 = vmatpush2.bf16.msra.mxu0 0
  %2602 = vmatprep.subr.bf16.mxu0 0
  %2603 = vmatpush2.bf16.msra.mxu0 0
  %2604 = vmatprep.subr.bf16.mxu0 0
  %2605 = vmatpush2.bf16.msra.mxu0 0
  %2606 = vmatprep.subr.bf16.mxu0 0
  %2607 = vmatpush2.bf16.msra.mxu0 0
  %2608 = vmatprep.subr.bf16.mxu0 0
  %2609 = vmatpush2.bf16.msra.mxu0 0
  %2610 = vmatprep.subr.bf16.mxu0 0
  %2611 = vmatpush2.bf16.msra.mxu0 0
  %2612 = vmatprep.subr.bf16.mxu0 0
  %2613 = vmatpush2.bf16.msra.mxu0 0
  %2614 = vmatprep.mubr.bf16.mxu0 0
  %2615 = vmatmul.mubr.bf16.gmra.mxu0 %v2577
  %v2616 = vpop.f32.mrf.mxu0
  %v2617 = vadd.f32 0.0, %v2616
  %v2618 = vpop.f32.mrf.mxu0
  %v2619 = vpop.f32.mrf.mxu0
  %v2620 = vadd.f32 0.0, %v2619
  %v2621 = vpop.f32.mrf.mxu0
  %2622 = vmatprep.mubr.bf16.mxu0 0
  %2623 = vmatmul.mubr.bf16.gmra.mxu0 %v2580
  %v2624 = vpop.f32.mrf.mxu0
  %v2625 = vadd.f32 0.0, %v2624
  %v2626 = vpop.f32.mrf.mxu0
  %v2627 = vpop.f32.mrf.mxu0
  %v2628 = vadd.f32 0.0, %v2627
  %v2629 = vpop.f32.mrf.mxu0
  %2630 = vdwg.mxu0
  %v2631 = vadd.f32 %v2552, %v2617
  %v2632 = vadd.f32 %v2553, %v2620
  %v2633 = vadd.f32 %v2554, %v2625
  %v2634 = vadd.f32 %v2555, %v2628
  %v2635 = vld [vmem:[%s1993] sm:$0xf]
  %v2636 = vld [vmem:[%s1993 + $0x4] sm:$0xf]
  %v2637 = vld [vmem:[%s1993 + $0x8] sm:$0xf]
  %v2638 = vld [vmem:[%s1993 + $0xc] sm:$0xf]
  %v2643 = vunpack.c.l.b16 %v2635
  %v2644 = vunpack.c.l.b16 %v2636
  %v2645 = vunpack.c.l.b16 %v2637
  %v2646 = vunpack.c.l.b16 %v2638
  %v2647 = vpack.c.b16 %v2644, %v2643
  %v2648 = vpack.c.b16 %v2646, %v2645
  %2649 = vrot.lane.b32.xlu0 %v2189, 122
  %v2650 = vpop.permute.xlu0 %2649
  %2651 = vrot.lane.b32.xlu0 %v2190, 122
  %v2652 = vpop.permute.xlu0 %2651
  %v2656 = vsel %vm1550, %v2647, 0
  %v2659 = vsel %vm1550, %v2648, 0
  %2661 = vmatprep.subr.bf16.mxu0 0
  %2662 = vmatpush1.bf16.msra.mxu0 0
  %2663 = vmatprep.subr.bf16.mxu0 0
  %2664 = vmatpush1.bf16.msra.mxu0 0
  %2665 = vmatprep.subr.bf16.mxu0 0
  %2666 = vmatpush1.bf16.msra.mxu0 0
  %2667 = vmatprep.subr.bf16.mxu0 0
  %2668 = vmatpush1.bf16.msra.mxu0 0
  %2669 = vmatprep.subr.bf16.mxu0 0
  %2670 = vmatpush1.bf16.msra.mxu0 0
  %2671 = vmatprep.subr.bf16.mxu0 0
  %2672 = vmatpush1.bf16.msra.mxu0 0
  %2673 = vmatprep.subr.bf16.mxu0 0
  %2674 = vmatpush1.bf16.msra.mxu0 %v2652
  %2675 = vmatprep.subr.bf16.mxu0 0
  %2676 = vmatpush1.bf16.msra.mxu0 %v2650
  %2677 = vmatprep.subr.bf16.mxu0 0
  %2678 = vmatpush2.bf16.msra.mxu0 0
  %2679 = vmatprep.subr.bf16.mxu0 0
  %2680 = vmatpush2.bf16.msra.mxu0 0
  %2681 = vmatprep.subr.bf16.mxu0 0
  %2682 = vmatpush2.bf16.msra.mxu0 0
  %2683 = vmatprep.subr.bf16.mxu0 0
  %2684 = vmatpush2.bf16.msra.mxu0 0
  %2685 = vmatprep.subr.bf16.mxu0 0
  %2686 = vmatpush2.bf16.msra.mxu0 0
  %2687 = vmatprep.subr.bf16.mxu0 0
  %2688 = vmatpush2.bf16.msra.mxu0 0
  %2689 = vmatprep.subr.bf16.mxu0 0
  %2690 = vmatpush2.bf16.msra.mxu0 0
  %2691 = vmatprep.subr.bf16.mxu0 0
  %2692 = vmatpush2.bf16.msra.mxu0 0
  %2693 = vmatprep.mubr.bf16.mxu0 0
  %2694 = vmatmul.mubr.bf16.gmra.mxu0 %v2656
  %v2695 = vpop.f32.mrf.mxu0
  %v2696 = vadd.f32 0.0, %v2695
  %v2697 = vpop.f32.mrf.mxu0
  %v2698 = vpop.f32.mrf.mxu0
  %v2699 = vadd.f32 0.0, %v2698
  %v2700 = vpop.f32.mrf.mxu0
  %2701 = vmatprep.mubr.bf16.mxu0 0
  %2702 = vmatmul.mubr.bf16.gmra.mxu0 %v2659
  %v2703 = vpop.f32.mrf.mxu0
  %v2704 = vadd.f32 0.0, %v2703
  %v2705 = vpop.f32.mrf.mxu0
  %v2706 = vpop.f32.mrf.mxu0
  %v2707 = vadd.f32 0.0, %v2706
  %v2708 = vpop.f32.mrf.mxu0
  %2709 = vdwg.mxu0
  %v2710 = vadd.f32 %v2631, %v2696
  %v2711 = vadd.f32 %v2632, %v2699
  %v2712 = vadd.f32 %v2633, %v2704
  %v2713 = vadd.f32 %v2634, %v2707
  %v2714 = vld [vmem:[%s2073] sm:$0xf]
  %v2715 = vld [vmem:[%s2073 + $0x4] sm:$0xf]
  %v2716 = vld [vmem:[%s2073 + $0x8] sm:$0xf]
  %v2717 = vld [vmem:[%s2073 + $0xc] sm:$0xf]
  %v2722 = vunpack.c.l.b16 %v2714
  %v2723 = vunpack.c.l.b16 %v2715
  %v2724 = vunpack.c.l.b16 %v2716
  %v2725 = vunpack.c.l.b16 %v2717
  %v2726 = vpack.c.b16 %v2723, %v2722
  %v2727 = vpack.c.b16 %v2725, %v2724
  %2728 = vrot.lane.b32.xlu0 %v2189, 121
  %v2729 = vpop.permute.xlu0 %2728
  %2730 = vrot.lane.b32.xlu0 %v2190, 121
  %v2731 = vpop.permute.xlu0 %2730
  %v2735 = vsel %vm1550, %v2726, 0
  %v2738 = vsel %vm1550, %v2727, 0
  %2740 = vmatprep.subr.bf16.mxu0 0
  %2741 = vmatpush1.bf16.msra.mxu0 0
  %2742 = vmatprep.subr.bf16.mxu0 0
  %2743 = vmatpush1.bf16.msra.mxu0 0
  %2744 = vmatprep.subr.bf16.mxu0 0
  %2745 = vmatpush1.bf16.msra.mxu0 0
  %2746 = vmatprep.subr.bf16.mxu0 0
  %2747 = vmatpush1.bf16.msra.mxu0 0
  %2748 = vmatprep.subr.bf16.mxu0 0
  %2749 = vmatpush1.bf16.msra.mxu0 0
  %2750 = vmatprep.subr.bf16.mxu0 0
  %2751 = vmatpush1.bf16.msra.mxu0 0
  %2752 = vmatprep.subr.bf16.mxu0 0
  %2753 = vmatpush1.bf16.msra.mxu0 %v2731
  %2754 = vmatprep.subr.bf16.mxu0 0
  %2755 = vmatpush1.bf16.msra.mxu0 %v2729
  %2756 = vmatprep.subr.bf16.mxu0 0
  %2757 = vmatpush2.bf16.msra.mxu0 0
  %2758 = vmatprep.subr.bf16.mxu0 0
  %2759 = vmatpush2.bf16.msra.mxu0 0
  %2760 = vmatprep.subr.bf16.mxu0 0
  %2761 = vmatpush2.bf16.msra.mxu0 0
  %2762 = vmatprep.subr.bf16.mxu0 0
  %2763 = vmatpush2.bf16.msra.mxu0 0
  %2764 = vmatprep.subr.bf16.mxu0 0
  %2765 = vmatpush2.bf16.msra.mxu0 0
  %2766 = vmatprep.subr.bf16.mxu0 0
  %2767 = vmatpush2.bf16.msra.mxu0 0
  %2768 = vmatprep.subr.bf16.mxu0 0
  %2769 = vmatpush2.bf16.msra.mxu0 0
  %2770 = vmatprep.subr.bf16.mxu0 0
  %2771 = vmatpush2.bf16.msra.mxu0 0
  %2772 = vmatprep.mubr.bf16.mxu0 0
  %2773 = vmatmul.mubr.bf16.gmra.mxu0 %v2735
  %v2774 = vpop.f32.mrf.mxu0
  %v2775 = vadd.f32 0.0, %v2774
  %v2776 = vpop.f32.mrf.mxu0
  %v2777 = vpop.f32.mrf.mxu0
  %v2778 = vadd.f32 0.0, %v2777
  %v2779 = vpop.f32.mrf.mxu0
  %2780 = vmatprep.mubr.bf16.mxu0 0
  %2781 = vmatmul.mubr.bf16.gmra.mxu0 %v2738
  %v2782 = vpop.f32.mrf.mxu0
  %v2783 = vadd.f32 0.0, %v2782
  %v2784 = vpop.f32.mrf.mxu0
  %v2785 = vpop.f32.mrf.mxu0
  %v2786 = vadd.f32 0.0, %v2785
  %v2787 = vpop.f32.mrf.mxu0
  %2788 = vdwg.mxu0
  %v2789 = vadd.f32 %v2710, %v2775
  %v2790 = vadd.f32 %v2711, %v2778
  %v2791 = vadd.f32 %v2712, %v2783
  %v2792 = vadd.f32 %v2713, %v2786
  %s2793 = scalar_lea.vmem [#allocation4], 32
  %2794 = vst.msk [vmem:[%s2793] sm:$0xff] %vm2153, %v2789
  %2795 = vst.msk [vmem:[%s2793 + $0x8] sm:$0xff] %vm2153, %v2790
  %2796 = vst.msk [vmem:[%s2793 + $0x10] sm:$0xff] %vm2153, %v2791
  %2797 = vst.msk [vmem:[%s2793 + $0x18] sm:$0xff] %vm2153, %v2792
  %v2798 = vld [vmem:[#allocation4] sm:$0xff]
  %v2799 = vld [vmem:[#allocation4 + $0x8] sm:$0xff]
  %v2800 = vld [vmem:[#allocation4 + $0x10] sm:$0xff]
  %v2801 = vld [vmem:[#allocation4 + $0x18] sm:$0xff]
  %v2802 = vld [vmem:[#allocation4 + $0x20] sm:$0xff]
  %v2803 = vld [vmem:[#allocation4 + $0x28] sm:$0xff]
  %v2804 = vld [vmem:[#allocation4 + $0x30] sm:$0xff]
  %v2805 = vld [vmem:[#allocation4 + $0x38] sm:$0xff]
  %v2806 = vsel %vm2153, %v2798, 0.0
  %2807 = vadd.xlane.f32.xlu0 %v2806
  %v2808 = vpop.xlane.xlu0 %2807
  %v2809 = vsel %vm2153, %v2799, 0.0
  %2810 = vadd.xlane.f32.xlu0 %v2809
  %v2811 = vpop.xlane.xlu0 %2810
  %v2812 = vsel %vm2153, %v2800, 0.0
  %2813 = vadd.xlane.f32.xlu0 %v2812
  %v2814 = vpop.xlane.xlu0 %2813
  %v2815 = vsel %vm2153, %v2801, 0.0
  %2816 = vadd.xlane.f32.xlu0 %v2815
  %v2817 = vpop.xlane.xlu0 %2816
  %v2818 = vsel %vm2153, %v2802, 0.0
  %2819 = vadd.xlane.f32.xlu0 %v2818
  %v2820 = vpop.xlane.xlu0 %2819
  %v2821 = vsel %vm2153, %v2803, 0.0
  %2822 = vadd.xlane.f32.xlu0 %v2821
  %v2823 = vpop.xlane.xlu0 %2822
  %v2824 = vsel %vm2153, %v2804, 0.0
  %2825 = vadd.xlane.f32.xlu0 %v2824
  %v2826 = vpop.xlane.xlu0 %2825
  %v2827 = vsel %vm2153, %v2805, 0.0
  %2828 = vadd.xlane.f32.xlu0 %v2827
  %v2829 = vpop.xlane.xlu0 %2828
  %v2830 = vadd.f32 %v2808, %v2820
  %v2831 = vadd.f32 %v2811, %v2823
  %v2832 = vadd.f32 %v2814, %v2826
  %v2833 = vadd.f32 %v2817, %v2829
  %v2834 = vmul.f32 %v2830, 0.041666668
  %v2835 = vmul.f32 %v2831, 0.041666668
  %v2836 = vmul.f32 %v2832, 0.041666668
  %v2837 = vmul.f32 %v2833, 0.041666668
  %v2838 = vsub.f32 %v2798, %v2834
  %v2839 = vsub.f32 %v2799, %v2835
  %v2840 = vsub.f32 %v2800, %v2836
  %v2841 = vsub.f32 %v2801, %v2837
  %v2842 = vsub.f32 %v2802, %v2834
  %v2843 = vsub.f32 %v2803, %v2835
  %v2844 = vsub.f32 %v2804, %v2836
  %v2845 = vsub.f32 %v2805, %v2837
  %v2846 = vmul.f32 %v2838, %v2838
  %v2847 = vmul.f32 %v2839, %v2839
  %v2848 = vmul.f32 %v2840, %v2840
  %v2849 = vmul.f32 %v2841, %v2841
  %v2850 = vmul.f32 %v2842, %v2842
  %v2851 = vmul.f32 %v2843, %v2843
  %v2852 = vmul.f32 %v2844, %v2844
  %v2853 = vmul.f32 %v2845, %v2845
  %v2854 = vsel %vm2153, %v2846, 0.0
  %2855 = vadd.xlane.f32.xlu0 %v2854
  %v2856 = vpop.xlane.xlu0 %2855
  %v2857 = vsel %vm2153, %v2847, 0.0
  %2858 = vadd.xlane.f32.xlu0 %v2857
  %v2859 = vpop.xlane.xlu0 %2858
  %v2860 = vsel %vm2153, %v2848, 0.0
  %2861 = vadd.xlane.f32.xlu0 %v2860
  %v2862 = vpop.xlane.xlu0 %2861
  %v2863 = vsel %vm2153, %v2849, 0.0
  %2864 = vadd.xlane.f32.xlu0 %v2863
  %v2865 = vpop.xlane.xlu0 %2864
  %v2866 = vsel %vm2153, %v2850, 0.0
  %2867 = vadd.xlane.f32.xlu0 %v2866
  %v2868 = vpop.xlane.xlu0 %2867
  %v2869 = vsel %vm2153, %v2851, 0.0
  %2870 = vadd.xlane.f32.xlu0 %v2869
  %v2871 = vpop.xlane.xlu0 %2870
  %v2872 = vsel %vm2153, %v2852, 0.0
  %2873 = vadd.xlane.f32.xlu0 %v2872
  %v2874 = vpop.xlane.xlu0 %2873
  %v2875 = vsel %vm2153, %v2853, 0.0
  %2876 = vadd.xlane.f32.xlu0 %v2875
  %v2877 = vpop.xlane.xlu0 %2876
  %v2878 = vadd.f32 %v2856, %v2868
  %v2879 = vadd.f32 %v2859, %v2871
  %v2880 = vadd.f32 %v2862, %v2874
  %v2881 = vadd.f32 %v2865, %v2877
  %v2882 = vmul.f32 %v2878, 0.041666668
  %v2883 = vmul.f32 %v2879, 0.041666668
  %v2884 = vmul.f32 %v2880, 0.041666668
  %v2885 = vmul.f32 %v2881, 0.041666668
  %v2886 = vld [vmem:[%s5] sm:$0xff]
  %v2887 = vld [vmem:[%s5 + $0x8] sm:$0xff]
  %v2888 = vld [vmem:[%s5 + $0x10] sm:$0xff]
  %v2889 = vld [vmem:[%s5 + $0x18] sm:$0xff]
  %v2890 = vadd.f32 %v2882, 1e-05
  %v2891 = vadd.f32 %v2883, 1e-05
  %v2892 = vadd.f32 %v2884, 1e-05
  %v2893 = vadd.f32 %v2885, 1e-05
  %v2894 = vrsqrt.pop %v2890
  %v2895 = vrsqrt.pop %v2891
  %v2896 = vrsqrt.pop %v2892
  %v2897 = vrsqrt.pop %v2893
  %v2898 = vmul.f32 %v2886, %v2894
  %v2899 = vmul.f32 %v2887, %v2895
  %v2900 = vmul.f32 %v2888, %v2896
  %v2901 = vmul.f32 %v2889, %v2897
  %v2902 = vld [vmem:[%s6] sm:$0xff]
  %v2903 = vld [vmem:[%s6 + $0x8] sm:$0xff]
  %v2904 = vld [vmem:[%s6 + $0x10] sm:$0xff]
  %v2905 = vld [vmem:[%s6 + $0x18] sm:$0xff]
  %v2906 = vmul.f32 %v2834, %v2898
  %v2907 = vmul.f32 %v2835, %v2899
  %v2908 = vmul.f32 %v2836, %v2900
  %v2909 = vmul.f32 %v2837, %v2901
  %v2910 = vsub.f32 %v2902, %v2906
  %v2911 = vsub.f32 %v2903, %v2907
  %v2912 = vsub.f32 %v2904, %v2908
  %v2913 = vsub.f32 %v2905, %v2909
  %2915 = vset.pattern.permute.xlu0 0
  %2916 = vperm.xlu0 %2915, %v2898
  %v2917 = vpop.permute.xlu0 %2916
  %2920 = vset.pattern.permute.xlu0 0
  %2921 = vperm.xlu0 %2920, %v2899
  %v2922 = vpop.permute.xlu0 %2921
  %2925 = vset.pattern.permute.xlu0 0
  %2926 = vperm.xlu0 %2925, %v2900
  %v2927 = vpop.permute.xlu0 %2926
  %2930 = vset.pattern.permute.xlu0 0
  %2931 = vperm.xlu0 %2930, %v2901
  %v2932 = vpop.permute.xlu0 %2931
  %v2934 = vmul.f32 %v2798, %v2917
  %v2935 = vmul.f32 %v2799, %v2922
  %v2936 = vmul.f32 %v2800, %v2927
  %v2937 = vmul.f32 %v2801, %v2932
  %v2938 = vmul.f32 %v2802, %v2917
  %v2939 = vmul.f32 %v2803, %v2922
  %v2940 = vmul.f32 %v2804, %v2927
  %v2941 = vmul.f32 %v2805, %v2932
  %2943 = vset.pattern.permute.xlu0 0
  %2944 = vperm.xlu0 %2943, %v2910
  %v2945 = vpop.permute.xlu0 %2944
  %2948 = vset.pattern.permute.xlu0 0
  %2949 = vperm.xlu0 %2948, %v2911
  %v2950 = vpop.permute.xlu0 %2949
  %2953 = vset.pattern.permute.xlu0 0
  %2954 = vperm.xlu0 %2953, %v2912
  %v2955 = vpop.permute.xlu0 %2954
  %2958 = vset.pattern.permute.xlu0 0
  %2959 = vperm.xlu0 %2958, %v2913
  %v2960 = vpop.permute.xlu0 %2959
  %v2962 = vadd.f32 %v2934, %v2945
  %v2963 = vadd.f32 %v2935, %v2950
  %v2964 = vadd.f32 %v2936, %v2955
  %v2965 = vadd.f32 %v2937, %v2960
  %v2966 = vadd.f32 %v2938, %v2945
  %v2967 = vadd.f32 %v2939, %v2950
  %v2968 = vadd.f32 %v2940, %v2955
  %v2969 = vadd.f32 %v2941, %v2960
  %v2970 = vmax.f32 %v2962, 0.0
  %v2971 = vmax.f32 %v2963, 0.0
  %v2972 = vmax.f32 %v2964, 0.0
  %v2973 = vmax.f32 %v2965, 0.0
  %v2974 = vmax.f32 %v2966, 0.0
  %v2975 = vmax.f32 %v2967, 0.0
  %v2976 = vmax.f32 %v2968, 0.0
  %v2977 = vmax.f32 %v2969, 0.0
  %2978 = vst.msk [vmem:[%s7] sm:$0xff] %vm2153, %v2970
  %2979 = vst.msk [vmem:[%s7 + $0x8] sm:$0xff] %vm2153, %v2971
  %2980 = vst.msk [vmem:[%s7 + $0x10] sm:$0xff] %vm2153, %v2972
  %2981 = vst.msk [vmem:[%s7 + $0x18] sm:$0xff] %vm2153, %v2973
  %2982 = vst.msk [vmem:[%s7 + $0x20] sm:$0xff] %vm2153, %v2974
  %2983 = vst.msk [vmem:[%s7 + $0x28] sm:$0xff] %vm2153, %v2975
  %2984 = vst.msk [vmem:[%s7 + $0x30] sm:$0xff] %vm2153, %v2976
  %2985 = vst.msk [vmem:[%s7 + $0x38] sm:$0xff] %vm2153, %v2977
  // Predicated region
  $region30: #{tpu_custom_call.1} parent=0 // pred_check
    _
  $region31: #{tpu_custom_call.1} parent=0 // pred_check_branch
    %2987 = sbr.rel (0) target = $region33
  $region32: #{tpu_custom_call.1} parent=0 // pred_region
    _
  $region33: #{tpu_custom_call.1} parent=0 // pred_fallthru
    _
  // Predicated region
  $region34: #{tpu_custom_call.1} parent=0 // pred_check
    _
  $region35: #{tpu_custom_call.1} parent=0 // pred_check_branch
    %2989 = sbr.rel (0) target = $region37
  $region36: #{tpu_custom_call.1} parent=0 // pred_region
    _
  $region37: #{tpu_custom_call.1} parent=0 // pred_fallthru
    _

</llo_original>
